<compile_context>
chip_gen: v6e
topology: v6e:2x2x1
jax: 0.10.0
libtpu: 0.0.40
codegen_flags: <defaults>
</compile_context>

<pallas_src>
import functools

import jax
import jax.numpy as jnp
from jax.experimental import pallas as pl
from jax.experimental.pallas import tpu as pltpu  # noqa: F401  (kept for scaled-up variants)

# ---- synthetic "VHHBERT" config (small, RoBERTa-shaped) ---------------------
VOCAB = 64
HIDDEN = 32
NUM_HEADS = 4
INTERMEDIATE = 64
NUM_LAYERS = 2
SEQ = 8
BATCH = 2
PAD_IDX = 1                 # RoBERTa padding idx (for position ids)
MAX_POS = SEQ + PAD_IDX + 4
LN_EPS = 1e-12              # HF RobertaConfig default layer_norm_eps


def _layernorm(x, gamma, beta):
    """Two-pass LayerNorm (pure-JAX reference)."""
    mu = jnp.mean(x, axis=-1, keepdims=True)
    var = jnp.mean((x - mu) ** 2, axis=-1, keepdims=True)
    return (x - mu) * jax.lax.rsqrt(var + LN_EPS) * gamma + beta


def _ln_fused(x, gamma, beta):
    """Single-pass LayerNorm (mean and E[x^2] together) for the kernel."""
    mu = jnp.mean(x, axis=-1, keepdims=True)
    ex2 = jnp.mean(x * x, axis=-1, keepdims=True)
    var = jnp.maximum(ex2 - mu * mu, 0.0)
    return (x - mu) * jax.lax.rsqrt(var + LN_EPS) * gamma + beta


# ---------------------------- fused Pallas kernel ----------------------------
def fused_vhhbert_kernel(x_ref, mask_ref, embg_ref, embb_ref, *rest,
                         num_layers, num_heads, batch, seq):
    """Whole forward pass in one kernel.

    x_ref:    (B*S, H)  embedding sums (pre-LayerNorm), float32
    mask_ref: (B, 1, S) attention mask, float32
    rest:     16 parameter refs per layer, then the output ref (B, H).
    """
    out_ref = rest[-1]
    layer_refs = rest[:-1]

    B, S = batch, seq
    x = x_ref[...]                                   # (B*S, H)
    H = x.shape[-1]
    d = H // num_heads

    mask = mask_ref[...]                             # (B, 1, S) float
    valid = mask > 0.5                               # (B, 1, S) bool

    # Embedding LayerNorm.
    h = _ln_fused(x, embg_ref[...], embb_ref[...])   # (B*S, H)

    for l in range(num_layers):
        (wq, bq, wk, bk, wv, bv, wo, bo,
         l1g, l1b, w1, b1, w2, b2, l2g, l2b) = layer_refs[16 * l:16 * (l + 1)]

        # Full-batch QKV projections.  wq / bq are pre-scaled by 1/sqrt(d)
        # in the wrapper, so no per-score scaling is needed below.
        q = jnp.dot(h, wq[...], preferred_element_type=jnp.float32) + bq[...]
        k = jnp.dot(h, wk[...], preferred_element_type=jnp.float32) + bk[...]
        v = jnp.dot(h, wv[...], preferred_element_type=jnp.float32) + bv[...]

        # Per-head attention, batched over B inside each einsum (flash-style).
        ctx_heads = []
        for hd in range(num_heads):
            sl = slice(hd * d, (hd + 1) * d)
            qh = q[:, sl].reshape(B, S, d)
            kh = k[:, sl].reshape(B, S, d)
            vh = v[:, sl].reshape(B, S, d)

            s = jnp.einsum('bqd,bkd->bqk', qh, kh,
                           preferred_element_type=jnp.float32)      # (B,S,S)
            s = jnp.where(valid, s, -1e9)        # (B,1,S) broadcast over queries
            s = s - jnp.max(s, axis=-1, keepdims=True)
            p = jnp.exp(s)
            p = p * pl.reciprocal(jnp.sum(p, axis=-1, keepdims=True),
                                  approx=True)
            ctx = jnp.einsum('bqk,bkd->bqd', p, vh,
                             preferred_element_type=jnp.float32)    # (B,S,d)
            ctx_heads.append(ctx.reshape(B * S, d))

        # Assemble context once, single Wo matmul.
        ctx = jnp.concatenate(ctx_heads, axis=-1)                   # (B*S, H)
        attn = jnp.dot(ctx, wo[...], preferred_element_type=jnp.float32) + bo[...]

        h1 = _ln_fused(h + attn, l1g[...], l1b[...])

        mid = jnp.dot(h1, w1[...], preferred_element_type=jnp.float32) + b1[...]
        # TODO(synk): HF RoBERTa uses exact (erf) GELU; tanh approximation here.
        mid = jax.nn.gelu(mid, approximate=True)
        ffn = jnp.dot(mid, w2[...], preferred_element_type=jnp.float32) + b2[...]

        h = _ln_fused(h1 + ffn, l2g[...], l2b[...])

    # Masked mean pooling: sum over sequence via a batched matmul, then divide
    # by the token count (EUP approximate reciprocal).
    h3 = h.reshape(B, S, H)
    pooled = jnp.einsum('bos,bsh->boh', mask, h3,
                        preferred_element_type=jnp.float32)         # (B,1,H)
    count = jnp.sum(mask, axis=-1)                                  # (B,1)
    out_ref[...] = pooled.reshape(B, H) * pl.reciprocal(count, approx=True)


# ---------------------------- parameters & model -----------------------------
def init_params(key):
    std = 0.02
    keys = iter(jax.random.split(key, 4 + 10 * NUM_LAYERS))

    def nrm(shape):
        return jax.random.normal(next(keys), shape, jnp.float32) * std

    params = {
        "word_emb": nrm((VOCAB, HIDDEN)),
        "pos_emb": nrm((MAX_POS, HIDDEN)),
        "type_emb": nrm((1, HIDDEN)),
        "emb_ln_g": jnp.ones((1, HIDDEN), jnp.float32),
        "emb_ln_b": jnp.zeros((1, HIDDEN), jnp.float32),
        "layers": [],
    }
    for _ in range(NUM_LAYERS):
        layer = {
            "wq": nrm((HIDDEN, HIDDEN)), "bq": jnp.zeros((1, HIDDEN), jnp.float32),
            "wk": nrm((HIDDEN, HIDDEN)), "bk": jnp.zeros((1, HIDDEN), jnp.float32),
            "wv": nrm((HIDDEN, HIDDEN)), "bv": jnp.zeros((1, HIDDEN), jnp.float32),
            "wo": nrm((HIDDEN, HIDDEN)), "bo": jnp.zeros((1, HIDDEN), jnp.float32),
            "ln1_g": jnp.ones((1, HIDDEN), jnp.float32),
            "ln1_b": jnp.zeros((1, HIDDEN), jnp.float32),
            "w1": nrm((HIDDEN, INTERMEDIATE)),
            "b1": jnp.zeros((1, INTERMEDIATE), jnp.float32),
            "w2": nrm((INTERMEDIATE, HIDDEN)),
            "b2": jnp.zeros((1, HIDDEN), jnp.float32),
            "ln2_g": jnp.ones((1, HIDDEN), jnp.float32),
            "ln2_b": jnp.zeros((1, HIDDEN), jnp.float32),
        }
        params["layers"].append(layer)
    return params


def vhhbert_forward(params, input_ids, attention_mask):
    """Pallas-backed forward. Returns masked-mean embeddings, shape (B, H)."""
    B, S = input_ids.shape
    mask_f = attention_mask.astype(jnp.float32)
    # RoBERTa position ids: padding positions get PAD_IDX.
    pos_ids = (jnp.cumsum(attention_mask, axis=1) * attention_mask) + PAD_IDX
    emb = (params["word_emb"][input_ids]
           + params["pos_emb"][pos_ids]
           + params["type_emb"][jnp.zeros_like(input_ids)])

    x2 = emb.reshape(B * S, HIDDEN)                  # batch folded into sublanes
    mask3 = mask_f[:, None, :]                       # (B, 1, S)

    d = HIDDEN // NUM_HEADS
    scale = jnp.float32(1.0 / (d ** 0.5))
    flat = []
    for layer in params["layers"]:
        flat += [layer["wq"] * scale, layer["bq"] * scale,   # fold 1/sqrt(d)
                 layer["wk"], layer["bk"],
                 layer["wv"], layer["bv"],
                 layer["wo"], layer["bo"],
                 layer["ln1_g"], layer["ln1_b"],
                 layer["w1"], layer["b1"],
                 layer["w2"], layer["b2"],
                 layer["ln2_g"], layer["ln2_b"]]

    kern = functools.partial(fused_vhhbert_kernel,
                             num_layers=NUM_LAYERS, num_heads=NUM_HEADS,
                             batch=B, seq=S)
    # One pallas_call, no grid: everything (~70 KB weights + ~2 KB activations)
    # lives in VMEM for the whole forward pass.
    return pl.pallas_call(
        kern,
        out_shape=jax.ShapeDtypeStruct((B, HIDDEN), jnp.float32),
    )(x2, mask3, params["emb_ln_g"], params["emb_ln_b"], *flat)


# ---------------------------- pure-JAX reference -----------------------------
def ref_forward(params, input_ids, attention_mask):
    mask_f = attention_mask.astype(jnp.float32)
    pos_ids = (jnp.cumsum(attention_mask, axis=1) * attention_mask) + PAD_IDX
    emb = (params["word_emb"][input_ids]
           + params["pos_emb"][pos_ids]
           + params["type_emb"][jnp.zeros_like(input_ids)])
    h = _layernorm(emb, params["emb_ln_g"], params["emb_ln_b"])
    bias = (1.0 - mask_f)[:, None, None, :] * (-1e9)
    d = HIDDEN // NUM_HEADS
    B, S, H = h.shape
    for layer in params["layers"]:
        q = h @ layer["wq"] + layer["bq"]
        k = h @ layer["wk"] + layer["bk"]
        v = h @ layer["wv"] + layer["bv"]
        qh = q.reshape(B, S, NUM_HEADS, d).transpose(0, 2, 1, 3)
        kh = k.reshape(B, S, NUM_HEADS, d).transpose(0, 2, 1, 3)
        vh = v.reshape(B, S, NUM_HEADS, d).transpose(0, 2, 1, 3)
        s = qh @ kh.transpose(0, 1, 3, 2) / (d ** 0.5) + bias
        p = jax.nn.softmax(s, axis=-1)
        ctx = (p @ vh).transpose(0, 2, 1, 3).reshape(B, S, H)
        attn = ctx @ layer["wo"] + layer["bo"]
        x1 = _layernorm(h + attn, layer["ln1_g"], layer["ln1_b"])
        mid = jax.nn.gelu(x1 @ layer["w1"] + layer["b1"], approximate=True)
        ffn = mid @ layer["w2"] + layer["b2"]
        h = _layernorm(x1 + ffn, layer["ln2_g"], layer["ln2_b"])
    me = mask_f[..., None]
    return (h * me).sum(axis=1) / me.sum(axis=1)


# ------------------------------------ main ------------------------------------
if __name__ == "__main__":
    key = jax.random.PRNGKey(0)
    pkey, ikey = jax.random.split(key)
    params = init_params(pkey)

    input_ids = jax.random.randint(ikey, (BATCH, SEQ), 2, VOCAB, dtype=jnp.int32)
    attention_mask = jnp.array([[1, 1, 1, 1, 1, 1, 0, 0],
                                [1, 1, 1, 1, 1, 1, 1, 1]], dtype=jnp.int32)

    fwd = jax.jit(vhhbert_forward)
    out = jax.block_until_ready(fwd(params, input_ids, attention_mask))
    assert out.shape == (BATCH, HIDDEN), out.shape

    ref = jax.block_until_ready(ref_forward(params, input_ids, attention_mask))
    # Tolerance slightly widened vs. exact math: the kernel uses the EUP
    # approximate reciprocal for softmax/pool denominators and a fused-stat
    # LayerNorm.
    assert jnp.allclose(out, ref, atol=1e-3, rtol=1e-3), (
        float(jnp.max(jnp.abs(out - ref))))

    print("KERNEL_OK")
</pallas_src>

<mosaic_0001>
module attributes {stable_mosaic.version = 11 : i64} {
  func.func @fused_vhhbert_kernel(%arg0: memref<16x32xf32, #tpu.memory_space<vmem>>, %arg1: memref<2x1x8xf32, #tpu.memory_space<vmem>>, %arg2: memref<1x32xf32, #tpu.memory_space<vmem>>, %arg3: memref<1x32xf32, #tpu.memory_space<vmem>>, %arg4: memref<32x32xf32, #tpu.memory_space<vmem>>, %arg5: memref<1x32xf32, #tpu.memory_space<vmem>>, %arg6: memref<32x32xf32, #tpu.memory_space<vmem>>, %arg7: memref<1x32xf32, #tpu.memory_space<vmem>>, %arg8: memref<32x32xf32, #tpu.memory_space<vmem>>, %arg9: memref<1x32xf32, #tpu.memory_space<vmem>>, %arg10: memref<32x32xf32, #tpu.memory_space<vmem>>, %arg11: memref<1x32xf32, #tpu.memory_space<vmem>>, %arg12: memref<1x32xf32, #tpu.memory_space<vmem>>, %arg13: memref<1x32xf32, #tpu.memory_space<vmem>>, %arg14: memref<32x64xf32, #tpu.memory_space<vmem>>, %arg15: memref<1x64xf32, #tpu.memory_space<vmem>>, %arg16: memref<64x32xf32, #tpu.memory_space<vmem>>, %arg17: memref<1x32xf32, #tpu.memory_space<vmem>>, %arg18: memref<1x32xf32, #tpu.memory_space<vmem>>, %arg19: memref<1x32xf32, #tpu.memory_space<vmem>>, %arg20: memref<32x32xf32, #tpu.memory_space<vmem>>, %arg21: memref<1x32xf32, #tpu.memory_space<vmem>>, %arg22: memref<32x32xf32, #tpu.memory_space<vmem>>, %arg23: memref<1x32xf32, #tpu.memory_space<vmem>>, %arg24: memref<32x32xf32, #tpu.memory_space<vmem>>, %arg25: memref<1x32xf32, #tpu.memory_space<vmem>>, %arg26: memref<32x32xf32, #tpu.memory_space<vmem>>, %arg27: memref<1x32xf32, #tpu.memory_space<vmem>>, %arg28: memref<1x32xf32, #tpu.memory_space<vmem>>, %arg29: memref<1x32xf32, #tpu.memory_space<vmem>>, %arg30: memref<32x64xf32, #tpu.memory_space<vmem>>, %arg31: memref<1x64xf32, #tpu.memory_space<vmem>>, %arg32: memref<64x32xf32, #tpu.memory_space<vmem>>, %arg33: memref<1x32xf32, #tpu.memory_space<vmem>>, %arg34: memref<1x32xf32, #tpu.memory_space<vmem>>, %arg35: memref<1x32xf32, #tpu.memory_space<vmem>>, %arg36: memref<2x32xf32, #tpu.memory_space<vmem>>) attributes {dimension_semantics = [], scalar_prefetch = 0 : i64, scratch_operands = 0 : i64, tpu.core_type = #tpu.core_type<tc>} {
    %c0 = arith.constant 0 : index
    %c0_0 = arith.constant 0 : index
    %0 = vector.load %arg0[%c0, %c0_0] : memref<16x32xf32, #tpu.memory_space<vmem>>, vector<16x32xf32>
    %c0_1 = arith.constant 0 : index
    %c0_2 = arith.constant 0 : index
    %c0_3 = arith.constant 0 : index
    %1 = vector.load %arg1[%c0_1, %c0_2, %c0_3] : memref<2x1x8xf32, #tpu.memory_space<vmem>>, vector<2x1x8xf32>
    %cst = arith.constant 5.000000e-01 : f32
    %2 = vector.broadcast %cst : f32 to vector<2x1x8xf32>
    %3 = arith.cmpf ogt, %1, %2 : vector<2x1x8xf32>
    %c0_4 = arith.constant 0 : index
    %c0_5 = arith.constant 0 : index
    %4 = vector.load %arg2[%c0_4, %c0_5] : memref<1x32xf32, #tpu.memory_space<vmem>>, vector<1x32xf32>
    %c0_6 = arith.constant 0 : index
    %c0_7 = arith.constant 0 : index
    %5 = vector.load %arg3[%c0_6, %c0_7] : memref<1x32xf32, #tpu.memory_space<vmem>>, vector<1x32xf32>
    %cst_8 = arith.constant dense<0.000000e+00> : vector<16xf32>
    %6 = vector.multi_reduction <add>, %0, %cst_8 [1] : vector<16x32xf32> to vector<16xf32>
    %7 = vector.shape_cast %6 : vector<16xf32> to vector<16x1xf32>
    %cst_9 = arith.constant 3.200000e+01 : f32
    %8 = vector.broadcast %cst_9 : f32 to vector<16x1xf32>
    %9 = arith.divf %7, %8 : vector<16x1xf32>
    %10 = arith.mulf %0, %0 : vector<16x32xf32>
    %cst_10 = arith.constant dense<0.000000e+00> : vector<16xf32>
    %11 = vector.multi_reduction <add>, %10, %cst_10 [1] : vector<16x32xf32> to vector<16xf32>
    %12 = vector.shape_cast %11 : vector<16xf32> to vector<16x1xf32>
    %cst_11 = arith.constant 3.200000e+01 : f32
    %13 = vector.broadcast %cst_11 : f32 to vector<16x1xf32>
    %14 = arith.divf %12, %13 : vector<16x1xf32>
    %15 = arith.mulf %9, %9 : vector<16x1xf32>
    %16 = arith.subf %14, %15 : vector<16x1xf32>
    %cst_12 = arith.constant 0.000000e+00 : f32
    %17 = vector.broadcast %cst_12 : f32 to vector<16x1xf32>
    %18 = arith.maximumf %16, %17 : vector<16x1xf32>
    %19 = vector.broadcast %9 : vector<16x1xf32> to vector<16x32xf32>
    %20 = arith.subf %0, %19 : vector<16x32xf32>
    %cst_13 = arith.constant 9.99999996E-13 : f32
    %21 = vector.broadcast %cst_13 : f32 to vector<16x1xf32>
    %22 = arith.addf %18, %21 : vector<16x1xf32>
    %23 = math.rsqrt %22 : vector<16x1xf32>
    %24 = vector.broadcast %23 : vector<16x1xf32> to vector<16x32xf32>
    %25 = arith.mulf %20, %24 : vector<16x32xf32>
    %26 = vector.broadcast %4 : vector<1x32xf32> to vector<16x32xf32>
    %27 = arith.mulf %25, %26 : vector<16x32xf32>
    %28 = vector.broadcast %5 : vector<1x32xf32> to vector<16x32xf32>
    %29 = arith.addf %27, %28 : vector<16x32xf32>
    %c0_14 = arith.constant 0 : index
    %c0_15 = arith.constant 0 : index
    %30 = vector.load %arg4[%c0_14, %c0_15] : memref<32x32xf32, #tpu.memory_space<vmem>>, vector<32x32xf32>
    %cst_16 = arith.constant dense<0.000000e+00> : vector<16x32xf32>
    %31 = tpu.matmul %29, %30, %cst_16 {dimension_numbers = #tpu.dot_dimension_numbers<[1], [0], [0], [1], [0, 0, 1, 1], [], []>} : vector<16x32xf32>, vector<32x32xf32>, vector<16x32xf32> -> vector<16x32xf32>
    %c0_17 = arith.constant 0 : index
    %c0_18 = arith.constant 0 : index
    %32 = vector.load %arg5[%c0_17, %c0_18] : memref<1x32xf32, #tpu.memory_space<vmem>>, vector<1x32xf32>
    %33 = vector.broadcast %32 : vector<1x32xf32> to vector<16x32xf32>
    %34 = arith.addf %31, %33 : vector<16x32xf32>
    %c0_19 = arith.constant 0 : index
    %c0_20 = arith.constant 0 : index
    %35 = vector.load %arg6[%c0_19, %c0_20] : memref<32x32xf32, #tpu.memory_space<vmem>>, vector<32x32xf32>
    %cst_21 = arith.constant dense<0.000000e+00> : vector<16x32xf32>
    %36 = tpu.matmul %29, %35, %cst_21 {dimension_numbers = #tpu.dot_dimension_numbers<[1], [0], [0], [1], [0, 0, 1, 1], [], []>} : vector<16x32xf32>, vector<32x32xf32>, vector<16x32xf32> -> vector<16x32xf32>
    %c0_22 = arith.constant 0 : index
    %c0_23 = arith.constant 0 : index
    %37 = vector.load %arg7[%c0_22, %c0_23] : memref<1x32xf32, #tpu.memory_space<vmem>>, vector<1x32xf32>
    %38 = vector.broadcast %37 : vector<1x32xf32> to vector<16x32xf32>
    %39 = arith.addf %36, %38 : vector<16x32xf32>
    %c0_24 = arith.constant 0 : index
    %c0_25 = arith.constant 0 : index
    %40 = vector.load %arg8[%c0_24, %c0_25] : memref<32x32xf32, #tpu.memory_space<vmem>>, vector<32x32xf32>
    %cst_26 = arith.constant dense<0.000000e+00> : vector<16x32xf32>
    %41 = tpu.matmul %29, %40, %cst_26 {dimension_numbers = #tpu.dot_dimension_numbers<[1], [0], [0], [1], [0, 0, 1, 1], [], []>} : vector<16x32xf32>, vector<32x32xf32>, vector<16x32xf32> -> vector<16x32xf32>
    %c0_27 = arith.constant 0 : index
    %c0_28 = arith.constant 0 : index
    %42 = vector.load %arg9[%c0_27, %c0_28] : memref<1x32xf32, #tpu.memory_space<vmem>>, vector<1x32xf32>
    %43 = vector.broadcast %42 : vector<1x32xf32> to vector<16x32xf32>
    %44 = arith.addf %41, %43 : vector<16x32xf32>
    %45 = vector.extract_strided_slice %34 {offsets = [0, 0], sizes = [16, 8], strides = [1, 1]} : vector<16x32xf32> to vector<16x8xf32>
    %46 = vector.shape_cast %45 : vector<16x8xf32> to vector<2x8x8xf32>
    %47 = vector.extract_strided_slice %39 {offsets = [0, 0], sizes = [16, 8], strides = [1, 1]} : vector<16x32xf32> to vector<16x8xf32>
    %48 = vector.shape_cast %47 : vector<16x8xf32> to vector<2x8x8xf32>
    %49 = vector.extract_strided_slice %44 {offsets = [0, 0], sizes = [16, 8], strides = [1, 1]} : vector<16x32xf32> to vector<16x8xf32>
    %50 = vector.shape_cast %49 : vector<16x8xf32> to vector<2x8x8xf32>
    "tpu.trace_start"() <{level = 10 : i32, message = "bqd,bkd->bqk"}> : () -> ()
    %cst_29 = arith.constant dense<0.000000e+00> : vector<2x8x8xf32>
    %51 = tpu.matmul %46, %48, %cst_29 {dimension_numbers = #tpu.dot_dimension_numbers<[2], [2], [1], [1], [0, 0, 0, 1, 1, 1], [0], [0]>} : vector<2x8x8xf32>, vector<2x8x8xf32>, vector<2x8x8xf32> -> vector<2x8x8xf32>
    %cst_30 = arith.constant -1.000000e+09 : f32
    "tpu.trace_stop"() : () -> ()
    %52 = vector.shape_cast %3 : vector<2x1x8xi1> to vector<2x1x8xi1>
    %53 = vector.broadcast %52 : vector<2x1x8xi1> to vector<2x8x8xi1>
    %54 = vector.broadcast %cst_30 : f32 to vector<2x8x8xf32>
    %55 = arith.select %53, %51, %54 : vector<2x8x8xi1>, vector<2x8x8xf32>
    %cst_31 = arith.constant dense<0xFF800000> : vector<2x8xf32>
    %56 = vector.multi_reduction <maximumf>, %55, %cst_31 [2] : vector<2x8x8xf32> to vector<2x8xf32>
    %57 = vector.shape_cast %56 : vector<2x8xf32> to vector<2x8x1xf32>
    %58 = vector.broadcast %57 : vector<2x8x1xf32> to vector<2x8x8xf32>
    %59 = arith.subf %55, %58 : vector<2x8x8xf32>
    %60 = math.exp %59 : vector<2x8x8xf32>
    %cst_32 = arith.constant dense<0.000000e+00> : vector<2x8xf32>
    %61 = vector.multi_reduction <add>, %60, %cst_32 [2] : vector<2x8x8xf32> to vector<2x8xf32>
    %62 = vector.shape_cast %61 : vector<2x8xf32> to vector<2x8x1xf32>
    %63 = tpu.reciprocal %62 {approx = true} : vector<2x8x1xf32> -> vector<2x8x1xf32>
    %64 = vector.broadcast %63 : vector<2x8x1xf32> to vector<2x8x8xf32>
    %65 = arith.mulf %60, %64 : vector<2x8x8xf32>
    "tpu.trace_start"() <{level = 10 : i32, message = "bqk,bkd->bqd"}> : () -> ()
    %cst_33 = arith.constant dense<0.000000e+00> : vector<2x8x8xf32>
    %66 = tpu.matmul %65, %50, %cst_33 {dimension_numbers = #tpu.dot_dimension_numbers<[2], [1], [1], [2], [0, 0, 0, 1, 1, 2], [0], [0]>} : vector<2x8x8xf32>, vector<2x8x8xf32>, vector<2x8x8xf32> -> vector<2x8x8xf32>
    "tpu.trace_stop"() : () -> ()
    %67 = vector.shape_cast %66 : vector<2x8x8xf32> to vector<16x8xf32>
    %68 = vector.extract_strided_slice %34 {offsets = [0, 8], sizes = [16, 8], strides = [1, 1]} : vector<16x32xf32> to vector<16x8xf32>
    %69 = vector.shape_cast %68 : vector<16x8xf32> to vector<2x8x8xf32>
    %70 = vector.extract_strided_slice %39 {offsets = [0, 8], sizes = [16, 8], strides = [1, 1]} : vector<16x32xf32> to vector<16x8xf32>
    %71 = vector.shape_cast %70 : vector<16x8xf32> to vector<2x8x8xf32>
    %72 = vector.extract_strided_slice %44 {offsets = [0, 8], sizes = [16, 8], strides = [1, 1]} : vector<16x32xf32> to vector<16x8xf32>
    %73 = vector.shape_cast %72 : vector<16x8xf32> to vector<2x8x8xf32>
    "tpu.trace_start"() <{level = 10 : i32, message = "bqd,bkd->bqk"}> : () -> ()
    %cst_34 = arith.constant dense<0.000000e+00> : vector<2x8x8xf32>
    %74 = tpu.matmul %69, %71, %cst_34 {dimension_numbers = #tpu.dot_dimension_numbers<[2], [2], [1], [1], [0, 0, 0, 1, 1, 1], [0], [0]>} : vector<2x8x8xf32>, vector<2x8x8xf32>, vector<2x8x8xf32> -> vector<2x8x8xf32>
    %cst_35 = arith.constant -1.000000e+09 : f32
    "tpu.trace_stop"() : () -> ()
    %75 = vector.shape_cast %3 : vector<2x1x8xi1> to vector<2x1x8xi1>
    %76 = vector.broadcast %75 : vector<2x1x8xi1> to vector<2x8x8xi1>
    %77 = vector.broadcast %cst_35 : f32 to vector<2x8x8xf32>
    %78 = arith.select %76, %74, %77 : vector<2x8x8xi1>, vector<2x8x8xf32>
    %cst_36 = arith.constant dense<0xFF800000> : vector<2x8xf32>
    %79 = vector.multi_reduction <maximumf>, %78, %cst_36 [2] : vector<2x8x8xf32> to vector<2x8xf32>
    %80 = vector.shape_cast %79 : vector<2x8xf32> to vector<2x8x1xf32>
    %81 = vector.broadcast %80 : vector<2x8x1xf32> to vector<2x8x8xf32>
    %82 = arith.subf %78, %81 : vector<2x8x8xf32>
    %83 = math.exp %82 : vector<2x8x8xf32>
    %cst_37 = arith.constant dense<0.000000e+00> : vector<2x8xf32>
    %84 = vector.multi_reduction <add>, %83, %cst_37 [2] : vector<2x8x8xf32> to vector<2x8xf32>
    %85 = vector.shape_cast %84 : vector<2x8xf32> to vector<2x8x1xf32>
    %86 = tpu.reciprocal %85 {approx = true} : vector<2x8x1xf32> -> vector<2x8x1xf32>
    %87 = vector.broadcast %86 : vector<2x8x1xf32> to vector<2x8x8xf32>
    %88 = arith.mulf %83, %87 : vector<2x8x8xf32>
    "tpu.trace_start"() <{level = 10 : i32, message = "bqk,bkd->bqd"}> : () -> ()
    %cst_38 = arith.constant dense<0.000000e+00> : vector<2x8x8xf32>
    %89 = tpu.matmul %88, %73, %cst_38 {dimension_numbers = #tpu.dot_dimension_numbers<[2], [1], [1], [2], [0, 0, 0, 1, 1, 2], [0], [0]>} : vector<2x8x8xf32>, vector<2x8x8xf32>, vector<2x8x8xf32> -> vector<2x8x8xf32>
    "tpu.trace_stop"() : () -> ()
    %90 = vector.shape_cast %89 : vector<2x8x8xf32> to vector<16x8xf32>
    %91 = vector.extract_strided_slice %34 {offsets = [0, 16], sizes = [16, 8], strides = [1, 1]} : vector<16x32xf32> to vector<16x8xf32>
    %92 = vector.shape_cast %91 : vector<16x8xf32> to vector<2x8x8xf32>
    %93 = vector.extract_strided_slice %39 {offsets = [0, 16], sizes = [16, 8], strides = [1, 1]} : vector<16x32xf32> to vector<16x8xf32>
    %94 = vector.shape_cast %93 : vector<16x8xf32> to vector<2x8x8xf32>
    %95 = vector.extract_strided_slice %44 {offsets = [0, 16], sizes = [16, 8], strides = [1, 1]} : vector<16x32xf32> to vector<16x8xf32>
    %96 = vector.shape_cast %95 : vector<16x8xf32> to vector<2x8x8xf32>
    "tpu.trace_start"() <{level = 10 : i32, message = "bqd,bkd->bqk"}> : () -> ()
    %cst_39 = arith.constant dense<0.000000e+00> : vector<2x8x8xf32>
    %97 = tpu.matmul %92, %94, %cst_39 {dimension_numbers = #tpu.dot_dimension_numbers<[2], [2], [1], [1], [0, 0, 0, 1, 1, 1], [0], [0]>} : vector<2x8x8xf32>, vector<2x8x8xf32>, vector<2x8x8xf32> -> vector<2x8x8xf32>
    %cst_40 = arith.constant -1.000000e+09 : f32
    "tpu.trace_stop"() : () -> ()
    %98 = vector.shape_cast %3 : vector<2x1x8xi1> to vector<2x1x8xi1>
    %99 = vector.broadcast %98 : vector<2x1x8xi1> to vector<2x8x8xi1>
    %100 = vector.broadcast %cst_40 : f32 to vector<2x8x8xf32>
    %101 = arith.select %99, %97, %100 : vector<2x8x8xi1>, vector<2x8x8xf32>
    %cst_41 = arith.constant dense<0xFF800000> : vector<2x8xf32>
    %102 = vector.multi_reduction <maximumf>, %101, %cst_41 [2] : vector<2x8x8xf32> to vector<2x8xf32>
    %103 = vector.shape_cast %102 : vector<2x8xf32> to vector<2x8x1xf32>
    %104 = vector.broadcast %103 : vector<2x8x1xf32> to vector<2x8x8xf32>
    %105 = arith.subf %101, %104 : vector<2x8x8xf32>
    %106 = math.exp %105 : vector<2x8x8xf32>
    %cst_42 = arith.constant dense<0.000000e+00> : vector<2x8xf32>
    %107 = vector.multi_reduction <add>, %106, %cst_42 [2] : vector<2x8x8xf32> to vector<2x8xf32>
    %108 = vector.shape_cast %107 : vector<2x8xf32> to vector<2x8x1xf32>
    %109 = tpu.reciprocal %108 {approx = true} : vector<2x8x1xf32> -> vector<2x8x1xf32>
    %110 = vector.broadcast %109 : vector<2x8x1xf32> to vector<2x8x8xf32>
    %111 = arith.mulf %106, %110 : vector<2x8x8xf32>
    "tpu.trace_start"() <{level = 10 : i32, message = "bqk,bkd->bqd"}> : () -> ()
    %cst_43 = arith.constant dense<0.000000e+00> : vector<2x8x8xf32>
    %112 = tpu.matmul %111, %96, %cst_43 {dimension_numbers = #tpu.dot_dimension_numbers<[2], [1], [1], [2], [0, 0, 0, 1, 1, 2], [0], [0]>} : vector<2x8x8xf32>, vector<2x8x8xf32>, vector<2x8x8xf32> -> vector<2x8x8xf32>
    "tpu.trace_stop"() : () -> ()
    %113 = vector.shape_cast %112 : vector<2x8x8xf32> to vector<16x8xf32>
    %114 = vector.extract_strided_slice %34 {offsets = [0, 24], sizes = [16, 8], strides = [1, 1]} : vector<16x32xf32> to vector<16x8xf32>
    %115 = vector.shape_cast %114 : vector<16x8xf32> to vector<2x8x8xf32>
    %116 = vector.extract_strided_slice %39 {offsets = [0, 24], sizes = [16, 8], strides = [1, 1]} : vector<16x32xf32> to vector<16x8xf32>
    %117 = vector.shape_cast %116 : vector<16x8xf32> to vector<2x8x8xf32>
    %118 = vector.extract_strided_slice %44 {offsets = [0, 24], sizes = [16, 8], strides = [1, 1]} : vector<16x32xf32> to vector<16x8xf32>
    %119 = vector.shape_cast %118 : vector<16x8xf32> to vector<2x8x8xf32>
    "tpu.trace_start"() <{level = 10 : i32, message = "bqd,bkd->bqk"}> : () -> ()
    %cst_44 = arith.constant dense<0.000000e+00> : vector<2x8x8xf32>
    %120 = tpu.matmul %115, %117, %cst_44 {dimension_numbers = #tpu.dot_dimension_numbers<[2], [2], [1], [1], [0, 0, 0, 1, 1, 1], [0], [0]>} : vector<2x8x8xf32>, vector<2x8x8xf32>, vector<2x8x8xf32> -> vector<2x8x8xf32>
    %cst_45 = arith.constant -1.000000e+09 : f32
    "tpu.trace_stop"() : () -> ()
    %121 = vector.shape_cast %3 : vector<2x1x8xi1> to vector<2x1x8xi1>
    %122 = vector.broadcast %121 : vector<2x1x8xi1> to vector<2x8x8xi1>
    %123 = vector.broadcast %cst_45 : f32 to vector<2x8x8xf32>
    %124 = arith.select %122, %120, %123 : vector<2x8x8xi1>, vector<2x8x8xf32>
    %cst_46 = arith.constant dense<0xFF800000> : vector<2x8xf32>
    %125 = vector.multi_reduction <maximumf>, %124, %cst_46 [2] : vector<2x8x8xf32> to vector<2x8xf32>
    %126 = vector.shape_cast %125 : vector<2x8xf32> to vector<2x8x1xf32>
    %127 = vector.broadcast %126 : vector<2x8x1xf32> to vector<2x8x8xf32>
    %128 = arith.subf %124, %127 : vector<2x8x8xf32>
    %129 = math.exp %128 : vector<2x8x8xf32>
    %cst_47 = arith.constant dense<0.000000e+00> : vector<2x8xf32>
    %130 = vector.multi_reduction <add>, %129, %cst_47 [2] : vector<2x8x8xf32> to vector<2x8xf32>
    %131 = vector.shape_cast %130 : vector<2x8xf32> to vector<2x8x1xf32>
    %132 = tpu.reciprocal %131 {approx = true} : vector<2x8x1xf32> -> vector<2x8x1xf32>
    %133 = vector.broadcast %132 : vector<2x8x1xf32> to vector<2x8x8xf32>
    %134 = arith.mulf %129, %133 : vector<2x8x8xf32>
    "tpu.trace_start"() <{level = 10 : i32, message = "bqk,bkd->bqd"}> : () -> ()
    %cst_48 = arith.constant dense<0.000000e+00> : vector<2x8x8xf32>
    %135 = tpu.matmul %134, %119, %cst_48 {dimension_numbers = #tpu.dot_dimension_numbers<[2], [1], [1], [2], [0, 0, 0, 1, 1, 2], [0], [0]>} : vector<2x8x8xf32>, vector<2x8x8xf32>, vector<2x8x8xf32> -> vector<2x8x8xf32>
    "tpu.trace_stop"() : () -> ()
    %136 = vector.shape_cast %135 : vector<2x8x8xf32> to vector<16x8xf32>
    %137 = tpu.concatenate %67, %90, %113, %136 in 1 : vector<16x8xf32>, vector<16x8xf32>, vector<16x8xf32>, vector<16x8xf32> -> vector<16x32xf32>
    %c0_49 = arith.constant 0 : index
    %c0_50 = arith.constant 0 : index
    %138 = vector.load %arg10[%c0_49, %c0_50] : memref<32x32xf32, #tpu.memory_space<vmem>>, vector<32x32xf32>
    %cst_51 = arith.constant dense<0.000000e+00> : vector<16x32xf32>
    %139 = tpu.matmul %137, %138, %cst_51 {dimension_numbers = #tpu.dot_dimension_numbers<[1], [0], [0], [1], [0, 0, 1, 1], [], []>} : vector<16x32xf32>, vector<32x32xf32>, vector<16x32xf32> -> vector<16x32xf32>
    %c0_52 = arith.constant 0 : index
    %c0_53 = arith.constant 0 : index
    %140 = vector.load %arg11[%c0_52, %c0_53] : memref<1x32xf32, #tpu.memory_space<vmem>>, vector<1x32xf32>
    %141 = vector.broadcast %140 : vector<1x32xf32> to vector<16x32xf32>
    %142 = arith.addf %139, %141 : vector<16x32xf32>
    %143 = arith.addf %29, %142 : vector<16x32xf32>
    %c0_54 = arith.constant 0 : index
    %c0_55 = arith.constant 0 : index
    %144 = vector.load %arg12[%c0_54, %c0_55] : memref<1x32xf32, #tpu.memory_space<vmem>>, vector<1x32xf32>
    %c0_56 = arith.constant 0 : index
    %c0_57 = arith.constant 0 : index
    %145 = vector.load %arg13[%c0_56, %c0_57] : memref<1x32xf32, #tpu.memory_space<vmem>>, vector<1x32xf32>
    %cst_58 = arith.constant dense<0.000000e+00> : vector<16xf32>
    %146 = vector.multi_reduction <add>, %143, %cst_58 [1] : vector<16x32xf32> to vector<16xf32>
    %147 = vector.shape_cast %146 : vector<16xf32> to vector<16x1xf32>
    %cst_59 = arith.constant 3.200000e+01 : f32
    %148 = vector.broadcast %cst_59 : f32 to vector<16x1xf32>
    %149 = arith.divf %147, %148 : vector<16x1xf32>
    %150 = arith.mulf %143, %143 : vector<16x32xf32>
    %cst_60 = arith.constant dense<0.000000e+00> : vector<16xf32>
    %151 = vector.multi_reduction <add>, %150, %cst_60 [1] : vector<16x32xf32> to vector<16xf32>
    %152 = vector.shape_cast %151 : vector<16xf32> to vector<16x1xf32>
    %cst_61 = arith.constant 3.200000e+01 : f32
    %153 = vector.broadcast %cst_61 : f32 to vector<16x1xf32>
    %154 = arith.divf %152, %153 : vector<16x1xf32>
    %155 = arith.mulf %149, %149 : vector<16x1xf32>
    %156 = arith.subf %154, %155 : vector<16x1xf32>
    %cst_62 = arith.constant 0.000000e+00 : f32
    %157 = vector.broadcast %cst_62 : f32 to vector<16x1xf32>
    %158 = arith.maximumf %156, %157 : vector<16x1xf32>
    %159 = vector.broadcast %149 : vector<16x1xf32> to vector<16x32xf32>
    %160 = arith.subf %143, %159 : vector<16x32xf32>
    %cst_63 = arith.constant 9.99999996E-13 : f32
    %161 = vector.broadcast %cst_63 : f32 to vector<16x1xf32>
    %162 = arith.addf %158, %161 : vector<16x1xf32>
    %163 = math.rsqrt %162 : vector<16x1xf32>
    %164 = vector.broadcast %163 : vector<16x1xf32> to vector<16x32xf32>
    %165 = arith.mulf %160, %164 : vector<16x32xf32>
    %166 = vector.broadcast %144 : vector<1x32xf32> to vector<16x32xf32>
    %167 = arith.mulf %165, %166 : vector<16x32xf32>
    %168 = vector.broadcast %145 : vector<1x32xf32> to vector<16x32xf32>
    %169 = arith.addf %167, %168 : vector<16x32xf32>
    %c0_64 = arith.constant 0 : index
    %c0_65 = arith.constant 0 : index
    %170 = vector.load %arg14[%c0_64, %c0_65] : memref<32x64xf32, #tpu.memory_space<vmem>>, vector<32x64xf32>
    %cst_66 = arith.constant dense<0.000000e+00> : vector<16x64xf32>
    %171 = tpu.matmul %169, %170, %cst_66 {dimension_numbers = #tpu.dot_dimension_numbers<[1], [0], [0], [1], [0, 0, 1, 1], [], []>} : vector<16x32xf32>, vector<32x64xf32>, vector<16x64xf32> -> vector<16x64xf32>
    %c0_67 = arith.constant 0 : index
    %c0_68 = arith.constant 0 : index
    %172 = vector.load %arg15[%c0_67, %c0_68] : memref<1x64xf32, #tpu.memory_space<vmem>>, vector<1x64xf32>
    %173 = vector.broadcast %172 : vector<1x64xf32> to vector<16x64xf32>
    %174 = arith.addf %171, %173 : vector<16x64xf32>
    %175 = arith.mulf %174, %174 : vector<16x64xf32>
    %176 = arith.mulf %174, %175 : vector<16x64xf32>
    %cst_69 = arith.constant 4.471500e-02 : f32
    %177 = vector.broadcast %cst_69 : f32 to vector<16x64xf32>
    %178 = arith.mulf %177, %176 : vector<16x64xf32>
    %179 = arith.addf %174, %178 : vector<16x64xf32>
    %cst_70 = arith.constant 0.797884583 : f32
    %180 = vector.broadcast %cst_70 : f32 to vector<16x64xf32>
    %181 = arith.mulf %180, %179 : vector<16x64xf32>
    %182 = math.tanh %181 : vector<16x64xf32>
    %cst_71 = arith.constant 1.000000e+00 : f32
    %183 = vector.broadcast %cst_71 : f32 to vector<16x64xf32>
    %184 = arith.addf %183, %182 : vector<16x64xf32>
    %cst_72 = arith.constant 5.000000e-01 : f32
    %185 = vector.broadcast %cst_72 : f32 to vector<16x64xf32>
    %186 = arith.mulf %185, %184 : vector<16x64xf32>
    %187 = arith.mulf %174, %186 : vector<16x64xf32>
    %c0_73 = arith.constant 0 : index
    %c0_74 = arith.constant 0 : index
    %188 = vector.load %arg16[%c0_73, %c0_74] : memref<64x32xf32, #tpu.memory_space<vmem>>, vector<64x32xf32>
    %cst_75 = arith.constant dense<0.000000e+00> : vector<16x32xf32>
    %189 = tpu.matmul %187, %188, %cst_75 {dimension_numbers = #tpu.dot_dimension_numbers<[1], [0], [0], [1], [0, 0, 1, 1], [], []>} : vector<16x64xf32>, vector<64x32xf32>, vector<16x32xf32> -> vector<16x32xf32>
    %c0_76 = arith.constant 0 : index
    %c0_77 = arith.constant 0 : index
    %190 = vector.load %arg17[%c0_76, %c0_77] : memref<1x32xf32, #tpu.memory_space<vmem>>, vector<1x32xf32>
    %191 = vector.broadcast %190 : vector<1x32xf32> to vector<16x32xf32>
    %192 = arith.addf %189, %191 : vector<16x32xf32>
    %193 = arith.addf %169, %192 : vector<16x32xf32>
    %c0_78 = arith.constant 0 : index
    %c0_79 = arith.constant 0 : index
    %194 = vector.load %arg18[%c0_78, %c0_79] : memref<1x32xf32, #tpu.memory_space<vmem>>, vector<1x32xf32>
    %c0_80 = arith.constant 0 : index
    %c0_81 = arith.constant 0 : index
    %195 = vector.load %arg19[%c0_80, %c0_81] : memref<1x32xf32, #tpu.memory_space<vmem>>, vector<1x32xf32>
    %cst_82 = arith.constant dense<0.000000e+00> : vector<16xf32>
    %196 = vector.multi_reduction <add>, %193, %cst_82 [1] : vector<16x32xf32> to vector<16xf32>
    %197 = vector.shape_cast %196 : vector<16xf32> to vector<16x1xf32>
    %cst_83 = arith.constant 3.200000e+01 : f32
    %198 = vector.broadcast %cst_83 : f32 to vector<16x1xf32>
    %199 = arith.divf %197, %198 : vector<16x1xf32>
    %200 = arith.mulf %193, %193 : vector<16x32xf32>
    %cst_84 = arith.constant dense<0.000000e+00> : vector<16xf32>
    %201 = vector.multi_reduction <add>, %200, %cst_84 [1] : vector<16x32xf32> to vector<16xf32>
    %202 = vector.shape_cast %201 : vector<16xf32> to vector<16x1xf32>
    %cst_85 = arith.constant 3.200000e+01 : f32
    %203 = vector.broadcast %cst_85 : f32 to vector<16x1xf32>
    %204 = arith.divf %202, %203 : vector<16x1xf32>
    %205 = arith.mulf %199, %199 : vector<16x1xf32>
    %206 = arith.subf %204, %205 : vector<16x1xf32>
    %cst_86 = arith.constant 0.000000e+00 : f32
    %207 = vector.broadcast %cst_86 : f32 to vector<16x1xf32>
    %208 = arith.maximumf %206, %207 : vector<16x1xf32>
    %209 = vector.broadcast %199 : vector<16x1xf32> to vector<16x32xf32>
    %210 = arith.subf %193, %209 : vector<16x32xf32>
    %cst_87 = arith.constant 9.99999996E-13 : f32
    %211 = vector.broadcast %cst_87 : f32 to vector<16x1xf32>
    %212 = arith.addf %208, %211 : vector<16x1xf32>
    %213 = math.rsqrt %212 : vector<16x1xf32>
    %214 = vector.broadcast %213 : vector<16x1xf32> to vector<16x32xf32>
    %215 = arith.mulf %210, %214 : vector<16x32xf32>
    %216 = vector.broadcast %194 : vector<1x32xf32> to vector<16x32xf32>
    %217 = arith.mulf %215, %216 : vector<16x32xf32>
    %218 = vector.broadcast %195 : vector<1x32xf32> to vector<16x32xf32>
    %219 = arith.addf %217, %218 : vector<16x32xf32>
    %c0_88 = arith.constant 0 : index
    %c0_89 = arith.constant 0 : index
    %220 = vector.load %arg20[%c0_88, %c0_89] : memref<32x32xf32, #tpu.memory_space<vmem>>, vector<32x32xf32>
    %cst_90 = arith.constant dense<0.000000e+00> : vector<16x32xf32>
    %221 = tpu.matmul %219, %220, %cst_90 {dimension_numbers = #tpu.dot_dimension_numbers<[1], [0], [0], [1], [0, 0, 1, 1], [], []>} : vector<16x32xf32>, vector<32x32xf32>, vector<16x32xf32> -> vector<16x32xf32>
    %c0_91 = arith.constant 0 : index
    %c0_92 = arith.constant 0 : index
    %222 = vector.load %arg21[%c0_91, %c0_92] : memref<1x32xf32, #tpu.memory_space<vmem>>, vector<1x32xf32>
    %223 = vector.broadcast %222 : vector<1x32xf32> to vector<16x32xf32>
    %224 = arith.addf %221, %223 : vector<16x32xf32>
    %c0_93 = arith.constant 0 : index
    %c0_94 = arith.constant 0 : index
    %225 = vector.load %arg22[%c0_93, %c0_94] : memref<32x32xf32, #tpu.memory_space<vmem>>, vector<32x32xf32>
    %cst_95 = arith.constant dense<0.000000e+00> : vector<16x32xf32>
    %226 = tpu.matmul %219, %225, %cst_95 {dimension_numbers = #tpu.dot_dimension_numbers<[1], [0], [0], [1], [0, 0, 1, 1], [], []>} : vector<16x32xf32>, vector<32x32xf32>, vector<16x32xf32> -> vector<16x32xf32>
    %c0_96 = arith.constant 0 : index
    %c0_97 = arith.constant 0 : index
    %227 = vector.load %arg23[%c0_96, %c0_97] : memref<1x32xf32, #tpu.memory_space<vmem>>, vector<1x32xf32>
    %228 = vector.broadcast %227 : vector<1x32xf32> to vector<16x32xf32>
    %229 = arith.addf %226, %228 : vector<16x32xf32>
    %c0_98 = arith.constant 0 : index
    %c0_99 = arith.constant 0 : index
    %230 = vector.load %arg24[%c0_98, %c0_99] : memref<32x32xf32, #tpu.memory_space<vmem>>, vector<32x32xf32>
    %cst_100 = arith.constant dense<0.000000e+00> : vector<16x32xf32>
    %231 = tpu.matmul %219, %230, %cst_100 {dimension_numbers = #tpu.dot_dimension_numbers<[1], [0], [0], [1], [0, 0, 1, 1], [], []>} : vector<16x32xf32>, vector<32x32xf32>, vector<16x32xf32> -> vector<16x32xf32>
    %c0_101 = arith.constant 0 : index
    %c0_102 = arith.constant 0 : index
    %232 = vector.load %arg25[%c0_101, %c0_102] : memref<1x32xf32, #tpu.memory_space<vmem>>, vector<1x32xf32>
    %233 = vector.broadcast %232 : vector<1x32xf32> to vector<16x32xf32>
    %234 = arith.addf %231, %233 : vector<16x32xf32>
    %235 = vector.extract_strided_slice %224 {offsets = [0, 0], sizes = [16, 8], strides = [1, 1]} : vector<16x32xf32> to vector<16x8xf32>
    %236 = vector.shape_cast %235 : vector<16x8xf32> to vector<2x8x8xf32>
    %237 = vector.extract_strided_slice %229 {offsets = [0, 0], sizes = [16, 8], strides = [1, 1]} : vector<16x32xf32> to vector<16x8xf32>
    %238 = vector.shape_cast %237 : vector<16x8xf32> to vector<2x8x8xf32>
    %239 = vector.extract_strided_slice %234 {offsets = [0, 0], sizes = [16, 8], strides = [1, 1]} : vector<16x32xf32> to vector<16x8xf32>
    %240 = vector.shape_cast %239 : vector<16x8xf32> to vector<2x8x8xf32>
    "tpu.trace_start"() <{level = 10 : i32, message = "bqd,bkd->bqk"}> : () -> ()
    %cst_103 = arith.constant dense<0.000000e+00> : vector<2x8x8xf32>
    %241 = tpu.matmul %236, %238, %cst_103 {dimension_numbers = #tpu.dot_dimension_numbers<[2], [2], [1], [1], [0, 0, 0, 1, 1, 1], [0], [0]>} : vector<2x8x8xf32>, vector<2x8x8xf32>, vector<2x8x8xf32> -> vector<2x8x8xf32>
    %cst_104 = arith.constant -1.000000e+09 : f32
    "tpu.trace_stop"() : () -> ()
    %242 = vector.shape_cast %3 : vector<2x1x8xi1> to vector<2x1x8xi1>
    %243 = vector.broadcast %242 : vector<2x1x8xi1> to vector<2x8x8xi1>
    %244 = vector.broadcast %cst_104 : f32 to vector<2x8x8xf32>
    %245 = arith.select %243, %241, %244 : vector<2x8x8xi1>, vector<2x8x8xf32>
    %cst_105 = arith.constant dense<0xFF800000> : vector<2x8xf32>
    %246 = vector.multi_reduction <maximumf>, %245, %cst_105 [2] : vector<2x8x8xf32> to vector<2x8xf32>
    %247 = vector.shape_cast %246 : vector<2x8xf32> to vector<2x8x1xf32>
    %248 = vector.broadcast %247 : vector<2x8x1xf32> to vector<2x8x8xf32>
    %249 = arith.subf %245, %248 : vector<2x8x8xf32>
    %250 = math.exp %249 : vector<2x8x8xf32>
    %cst_106 = arith.constant dense<0.000000e+00> : vector<2x8xf32>
    %251 = vector.multi_reduction <add>, %250, %cst_106 [2] : vector<2x8x8xf32> to vector<2x8xf32>
    %252 = vector.shape_cast %251 : vector<2x8xf32> to vector<2x8x1xf32>
    %253 = tpu.reciprocal %252 {approx = true} : vector<2x8x1xf32> -> vector<2x8x1xf32>
    %254 = vector.broadcast %253 : vector<2x8x1xf32> to vector<2x8x8xf32>
    %255 = arith.mulf %250, %254 : vector<2x8x8xf32>
    "tpu.trace_start"() <{level = 10 : i32, message = "bqk,bkd->bqd"}> : () -> ()
    %cst_107 = arith.constant dense<0.000000e+00> : vector<2x8x8xf32>
    %256 = tpu.matmul %255, %240, %cst_107 {dimension_numbers = #tpu.dot_dimension_numbers<[2], [1], [1], [2], [0, 0, 0, 1, 1, 2], [0], [0]>} : vector<2x8x8xf32>, vector<2x8x8xf32>, vector<2x8x8xf32> -> vector<2x8x8xf32>
    "tpu.trace_stop"() : () -> ()
    %257 = vector.shape_cast %256 : vector<2x8x8xf32> to vector<16x8xf32>
    %258 = vector.extract_strided_slice %224 {offsets = [0, 8], sizes = [16, 8], strides = [1, 1]} : vector<16x32xf32> to vector<16x8xf32>
    %259 = vector.shape_cast %258 : vector<16x8xf32> to vector<2x8x8xf32>
    %260 = vector.extract_strided_slice %229 {offsets = [0, 8], sizes = [16, 8], strides = [1, 1]} : vector<16x32xf32> to vector<16x8xf32>
    %261 = vector.shape_cast %260 : vector<16x8xf32> to vector<2x8x8xf32>
    %262 = vector.extract_strided_slice %234 {offsets = [0, 8], sizes = [16, 8], strides = [1, 1]} : vector<16x32xf32> to vector<16x8xf32>
    %263 = vector.shape_cast %262 : vector<16x8xf32> to vector<2x8x8xf32>
    "tpu.trace_start"() <{level = 10 : i32, message = "bqd,bkd->bqk"}> : () -> ()
    %cst_108 = arith.constant dense<0.000000e+00> : vector<2x8x8xf32>
    %264 = tpu.matmul %259, %261, %cst_108 {dimension_numbers = #tpu.dot_dimension_numbers<[2], [2], [1], [1], [0, 0, 0, 1, 1, 1], [0], [0]>} : vector<2x8x8xf32>, vector<2x8x8xf32>, vector<2x8x8xf32> -> vector<2x8x8xf32>
    %cst_109 = arith.constant -1.000000e+09 : f32
    "tpu.trace_stop"() : () -> ()
    %265 = vector.shape_cast %3 : vector<2x1x8xi1> to vector<2x1x8xi1>
    %266 = vector.broadcast %265 : vector<2x1x8xi1> to vector<2x8x8xi1>
    %267 = vector.broadcast %cst_109 : f32 to vector<2x8x8xf32>
    %268 = arith.select %266, %264, %267 : vector<2x8x8xi1>, vector<2x8x8xf32>
    %cst_110 = arith.constant dense<0xFF800000> : vector<2x8xf32>
    %269 = vector.multi_reduction <maximumf>, %268, %cst_110 [2] : vector<2x8x8xf32> to vector<2x8xf32>
    %270 = vector.shape_cast %269 : vector<2x8xf32> to vector<2x8x1xf32>
    %271 = vector.broadcast %270 : vector<2x8x1xf32> to vector<2x8x8xf32>
    %272 = arith.subf %268, %271 : vector<2x8x8xf32>
    %273 = math.exp %272 : vector<2x8x8xf32>
    %cst_111 = arith.constant dense<0.000000e+00> : vector<2x8xf32>
    %274 = vector.multi_reduction <add>, %273, %cst_111 [2] : vector<2x8x8xf32> to vector<2x8xf32>
    %275 = vector.shape_cast %274 : vector<2x8xf32> to vector<2x8x1xf32>
    %276 = tpu.reciprocal %275 {approx = true} : vector<2x8x1xf32> -> vector<2x8x1xf32>
    %277 = vector.broadcast %276 : vector<2x8x1xf32> to vector<2x8x8xf32>
    %278 = arith.mulf %273, %277 : vector<2x8x8xf32>
    "tpu.trace_start"() <{level = 10 : i32, message = "bqk,bkd->bqd"}> : () -> ()
    %cst_112 = arith.constant dense<0.000000e+00> : vector<2x8x8xf32>
    %279 = tpu.matmul %278, %263, %cst_112 {dimension_numbers = #tpu.dot_dimension_numbers<[2], [1], [1], [2], [0, 0, 0, 1, 1, 2], [0], [0]>} : vector<2x8x8xf32>, vector<2x8x8xf32>, vector<2x8x8xf32> -> vector<2x8x8xf32>
    "tpu.trace_stop"() : () -> ()
    %280 = vector.shape_cast %279 : vector<2x8x8xf32> to vector<16x8xf32>
    %281 = vector.extract_strided_slice %224 {offsets = [0, 16], sizes = [16, 8], strides = [1, 1]} : vector<16x32xf32> to vector<16x8xf32>
    %282 = vector.shape_cast %281 : vector<16x8xf32> to vector<2x8x8xf32>
    %283 = vector.extract_strided_slice %229 {offsets = [0, 16], sizes = [16, 8], strides = [1, 1]} : vector<16x32xf32> to vector<16x8xf32>
    %284 = vector.shape_cast %283 : vector<16x8xf32> to vector<2x8x8xf32>
    %285 = vector.extract_strided_slice %234 {offsets = [0, 16], sizes = [16, 8], strides = [1, 1]} : vector<16x32xf32> to vector<16x8xf32>
    %286 = vector.shape_cast %285 : vector<16x8xf32> to vector<2x8x8xf32>
    "tpu.trace_start"() <{level = 10 : i32, message = "bqd,bkd->bqk"}> : () -> ()
    %cst_113 = arith.constant dense<0.000000e+00> : vector<2x8x8xf32>
    %287 = tpu.matmul %282, %284, %cst_113 {dimension_numbers = #tpu.dot_dimension_numbers<[2], [2], [1], [1], [0, 0, 0, 1, 1, 1], [0], [0]>} : vector<2x8x8xf32>, vector<2x8x8xf32>, vector<2x8x8xf32> -> vector<2x8x8xf32>
    %cst_114 = arith.constant -1.000000e+09 : f32
    "tpu.trace_stop"() : () -> ()
    %288 = vector.shape_cast %3 : vector<2x1x8xi1> to vector<2x1x8xi1>
    %289 = vector.broadcast %288 : vector<2x1x8xi1> to vector<2x8x8xi1>
    %290 = vector.broadcast %cst_114 : f32 to vector<2x8x8xf32>
    %291 = arith.select %289, %287, %290 : vector<2x8x8xi1>, vector<2x8x8xf32>
    %cst_115 = arith.constant dense<0xFF800000> : vector<2x8xf32>
    %292 = vector.multi_reduction <maximumf>, %291, %cst_115 [2] : vector<2x8x8xf32> to vector<2x8xf32>
    %293 = vector.shape_cast %292 : vector<2x8xf32> to vector<2x8x1xf32>
    %294 = vector.broadcast %293 : vector<2x8x1xf32> to vector<2x8x8xf32>
    %295 = arith.subf %291, %294 : vector<2x8x8xf32>
    %296 = math.exp %295 : vector<2x8x8xf32>
    %cst_116 = arith.constant dense<0.000000e+00> : vector<2x8xf32>
    %297 = vector.multi_reduction <add>, %296, %cst_116 [2] : vector<2x8x8xf32> to vector<2x8xf32>
    %298 = vector.shape_cast %297 : vector<2x8xf32> to vector<2x8x1xf32>
    %299 = tpu.reciprocal %298 {approx = true} : vector<2x8x1xf32> -> vector<2x8x1xf32>
    %300 = vector.broadcast %299 : vector<2x8x1xf32> to vector<2x8x8xf32>
    %301 = arith.mulf %296, %300 : vector<2x8x8xf32>
    "tpu.trace_start"() <{level = 10 : i32, message = "bqk,bkd->bqd"}> : () -> ()
    %cst_117 = arith.constant dense<0.000000e+00> : vector<2x8x8xf32>
    %302 = tpu.matmul %301, %286, %cst_117 {dimension_numbers = #tpu.dot_dimension_numbers<[2], [1], [1], [2], [0, 0, 0, 1, 1, 2], [0], [0]>} : vector<2x8x8xf32>, vector<2x8x8xf32>, vector<2x8x8xf32> -> vector<2x8x8xf32>
    "tpu.trace_stop"() : () -> ()
    %303 = vector.shape_cast %302 : vector<2x8x8xf32> to vector<16x8xf32>
    %304 = vector.extract_strided_slice %224 {offsets = [0, 24], sizes = [16, 8], strides = [1, 1]} : vector<16x32xf32> to vector<16x8xf32>
    %305 = vector.shape_cast %304 : vector<16x8xf32> to vector<2x8x8xf32>
    %306 = vector.extract_strided_slice %229 {offsets = [0, 24], sizes = [16, 8], strides = [1, 1]} : vector<16x32xf32> to vector<16x8xf32>
    %307 = vector.shape_cast %306 : vector<16x8xf32> to vector<2x8x8xf32>
    %308 = vector.extract_strided_slice %234 {offsets = [0, 24], sizes = [16, 8], strides = [1, 1]} : vector<16x32xf32> to vector<16x8xf32>
    %309 = vector.shape_cast %308 : vector<16x8xf32> to vector<2x8x8xf32>
    "tpu.trace_start"() <{level = 10 : i32, message = "bqd,bkd->bqk"}> : () -> ()
    %cst_118 = arith.constant dense<0.000000e+00> : vector<2x8x8xf32>
    %310 = tpu.matmul %305, %307, %cst_118 {dimension_numbers = #tpu.dot_dimension_numbers<[2], [2], [1], [1], [0, 0, 0, 1, 1, 1], [0], [0]>} : vector<2x8x8xf32>, vector<2x8x8xf32>, vector<2x8x8xf32> -> vector<2x8x8xf32>
    %cst_119 = arith.constant -1.000000e+09 : f32
    "tpu.trace_stop"() : () -> ()
    %311 = vector.shape_cast %3 : vector<2x1x8xi1> to vector<2x1x8xi1>
    %312 = vector.broadcast %311 : vector<2x1x8xi1> to vector<2x8x8xi1>
    %313 = vector.broadcast %cst_119 : f32 to vector<2x8x8xf32>
    %314 = arith.select %312, %310, %313 : vector<2x8x8xi1>, vector<2x8x8xf32>
    %cst_120 = arith.constant dense<0xFF800000> : vector<2x8xf32>
    %315 = vector.multi_reduction <maximumf>, %314, %cst_120 [2] : vector<2x8x8xf32> to vector<2x8xf32>
    %316 = vector.shape_cast %315 : vector<2x8xf32> to vector<2x8x1xf32>
    %317 = vector.broadcast %316 : vector<2x8x1xf32> to vector<2x8x8xf32>
    %318 = arith.subf %314, %317 : vector<2x8x8xf32>
    %319 = math.exp %318 : vector<2x8x8xf32>
    %cst_121 = arith.constant dense<0.000000e+00> : vector<2x8xf32>
    %320 = vector.multi_reduction <add>, %319, %cst_121 [2] : vector<2x8x8xf32> to vector<2x8xf32>
    %321 = vector.shape_cast %320 : vector<2x8xf32> to vector<2x8x1xf32>
    %322 = tpu.reciprocal %321 {approx = true} : vector<2x8x1xf32> -> vector<2x8x1xf32>
    %323 = vector.broadcast %322 : vector<2x8x1xf32> to vector<2x8x8xf32>
    %324 = arith.mulf %319, %323 : vector<2x8x8xf32>
    "tpu.trace_start"() <{level = 10 : i32, message = "bqk,bkd->bqd"}> : () -> ()
    %cst_122 = arith.constant dense<0.000000e+00> : vector<2x8x8xf32>
    %325 = tpu.matmul %324, %309, %cst_122 {dimension_numbers = #tpu.dot_dimension_numbers<[2], [1], [1], [2], [0, 0, 0, 1, 1, 2], [0], [0]>} : vector<2x8x8xf32>, vector<2x8x8xf32>, vector<2x8x8xf32> -> vector<2x8x8xf32>
    "tpu.trace_stop"() : () -> ()
    %326 = vector.shape_cast %325 : vector<2x8x8xf32> to vector<16x8xf32>
    %327 = tpu.concatenate %257, %280, %303, %326 in 1 : vector<16x8xf32>, vector<16x8xf32>, vector<16x8xf32>, vector<16x8xf32> -> vector<16x32xf32>
    %c0_123 = arith.constant 0 : index
    %c0_124 = arith.constant 0 : index
    %328 = vector.load %arg26[%c0_123, %c0_124] : memref<32x32xf32, #tpu.memory_space<vmem>>, vector<32x32xf32>
    %cst_125 = arith.constant dense<0.000000e+00> : vector<16x32xf32>
    %329 = tpu.matmul %327, %328, %cst_125 {dimension_numbers = #tpu.dot_dimension_numbers<[1], [0], [0], [1], [0, 0, 1, 1], [], []>} : vector<16x32xf32>, vector<32x32xf32>, vector<16x32xf32> -> vector<16x32xf32>
    %c0_126 = arith.constant 0 : index
    %c0_127 = arith.constant 0 : index
    %330 = vector.load %arg27[%c0_126, %c0_127] : memref<1x32xf32, #tpu.memory_space<vmem>>, vector<1x32xf32>
    %331 = vector.broadcast %330 : vector<1x32xf32> to vector<16x32xf32>
    %332 = arith.addf %329, %331 : vector<16x32xf32>
    %333 = arith.addf %219, %332 : vector<16x32xf32>
    %c0_128 = arith.constant 0 : index
    %c0_129 = arith.constant 0 : index
    %334 = vector.load %arg28[%c0_128, %c0_129] : memref<1x32xf32, #tpu.memory_space<vmem>>, vector<1x32xf32>
    %c0_130 = arith.constant 0 : index
    %c0_131 = arith.constant 0 : index
    %335 = vector.load %arg29[%c0_130, %c0_131] : memref<1x32xf32, #tpu.memory_space<vmem>>, vector<1x32xf32>
    %cst_132 = arith.constant dense<0.000000e+00> : vector<16xf32>
    %336 = vector.multi_reduction <add>, %333, %cst_132 [1] : vector<16x32xf32> to vector<16xf32>
    %337 = vector.shape_cast %336 : vector<16xf32> to vector<16x1xf32>
    %cst_133 = arith.constant 3.200000e+01 : f32
    %338 = vector.broadcast %cst_133 : f32 to vector<16x1xf32>
    %339 = arith.divf %337, %338 : vector<16x1xf32>
    %340 = arith.mulf %333, %333 : vector<16x32xf32>
    %cst_134 = arith.constant dense<0.000000e+00> : vector<16xf32>
    %341 = vector.multi_reduction <add>, %340, %cst_134 [1] : vector<16x32xf32> to vector<16xf32>
    %342 = vector.shape_cast %341 : vector<16xf32> to vector<16x1xf32>
    %cst_135 = arith.constant 3.200000e+01 : f32
    %343 = vector.broadcast %cst_135 : f32 to vector<16x1xf32>
    %344 = arith.divf %342, %343 : vector<16x1xf32>
    %345 = arith.mulf %339, %339 : vector<16x1xf32>
    %346 = arith.subf %344, %345 : vector<16x1xf32>
    %cst_136 = arith.constant 0.000000e+00 : f32
    %347 = vector.broadcast %cst_136 : f32 to vector<16x1xf32>
    %348 = arith.maximumf %346, %347 : vector<16x1xf32>
    %349 = vector.broadcast %339 : vector<16x1xf32> to vector<16x32xf32>
    %350 = arith.subf %333, %349 : vector<16x32xf32>
    %cst_137 = arith.constant 9.99999996E-13 : f32
    %351 = vector.broadcast %cst_137 : f32 to vector<16x1xf32>
    %352 = arith.addf %348, %351 : vector<16x1xf32>
    %353 = math.rsqrt %352 : vector<16x1xf32>
    %354 = vector.broadcast %353 : vector<16x1xf32> to vector<16x32xf32>
    %355 = arith.mulf %350, %354 : vector<16x32xf32>
    %356 = vector.broadcast %334 : vector<1x32xf32> to vector<16x32xf32>
    %357 = arith.mulf %355, %356 : vector<16x32xf32>
    %358 = vector.broadcast %335 : vector<1x32xf32> to vector<16x32xf32>
    %359 = arith.addf %357, %358 : vector<16x32xf32>
    %c0_138 = arith.constant 0 : index
    %c0_139 = arith.constant 0 : index
    %360 = vector.load %arg30[%c0_138, %c0_139] : memref<32x64xf32, #tpu.memory_space<vmem>>, vector<32x64xf32>
    %cst_140 = arith.constant dense<0.000000e+00> : vector<16x64xf32>
    %361 = tpu.matmul %359, %360, %cst_140 {dimension_numbers = #tpu.dot_dimension_numbers<[1], [0], [0], [1], [0, 0, 1, 1], [], []>} : vector<16x32xf32>, vector<32x64xf32>, vector<16x64xf32> -> vector<16x64xf32>
    %c0_141 = arith.constant 0 : index
    %c0_142 = arith.constant 0 : index
    %362 = vector.load %arg31[%c0_141, %c0_142] : memref<1x64xf32, #tpu.memory_space<vmem>>, vector<1x64xf32>
    %363 = vector.broadcast %362 : vector<1x64xf32> to vector<16x64xf32>
    %364 = arith.addf %361, %363 : vector<16x64xf32>
    %365 = arith.mulf %364, %364 : vector<16x64xf32>
    %366 = arith.mulf %364, %365 : vector<16x64xf32>
    %cst_143 = arith.constant 4.471500e-02 : f32
    %367 = vector.broadcast %cst_143 : f32 to vector<16x64xf32>
    %368 = arith.mulf %367, %366 : vector<16x64xf32>
    %369 = arith.addf %364, %368 : vector<16x64xf32>
    %cst_144 = arith.constant 0.797884583 : f32
    %370 = vector.broadcast %cst_144 : f32 to vector<16x64xf32>
    %371 = arith.mulf %370, %369 : vector<16x64xf32>
    %372 = math.tanh %371 : vector<16x64xf32>
    %cst_145 = arith.constant 1.000000e+00 : f32
    %373 = vector.broadcast %cst_145 : f32 to vector<16x64xf32>
    %374 = arith.addf %373, %372 : vector<16x64xf32>
    %cst_146 = arith.constant 5.000000e-01 : f32
    %375 = vector.broadcast %cst_146 : f32 to vector<16x64xf32>
    %376 = arith.mulf %375, %374 : vector<16x64xf32>
    %377 = arith.mulf %364, %376 : vector<16x64xf32>
    %c0_147 = arith.constant 0 : index
    %c0_148 = arith.constant 0 : index
    %378 = vector.load %arg32[%c0_147, %c0_148] : memref<64x32xf32, #tpu.memory_space<vmem>>, vector<64x32xf32>
    %cst_149 = arith.constant dense<0.000000e+00> : vector<16x32xf32>
    %379 = tpu.matmul %377, %378, %cst_149 {dimension_numbers = #tpu.dot_dimension_numbers<[1], [0], [0], [1], [0, 0, 1, 1], [], []>} : vector<16x64xf32>, vector<64x32xf32>, vector<16x32xf32> -> vector<16x32xf32>
    %c0_150 = arith.constant 0 : index
    %c0_151 = arith.constant 0 : index
    %380 = vector.load %arg33[%c0_150, %c0_151] : memref<1x32xf32, #tpu.memory_space<vmem>>, vector<1x32xf32>
    %381 = vector.broadcast %380 : vector<1x32xf32> to vector<16x32xf32>
    %382 = arith.addf %379, %381 : vector<16x32xf32>
    %383 = arith.addf %359, %382 : vector<16x32xf32>
    %c0_152 = arith.constant 0 : index
    %c0_153 = arith.constant 0 : index
    %384 = vector.load %arg34[%c0_152, %c0_153] : memref<1x32xf32, #tpu.memory_space<vmem>>, vector<1x32xf32>
    %c0_154 = arith.constant 0 : index
    %c0_155 = arith.constant 0 : index
    %385 = vector.load %arg35[%c0_154, %c0_155] : memref<1x32xf32, #tpu.memory_space<vmem>>, vector<1x32xf32>
    %cst_156 = arith.constant dense<0.000000e+00> : vector<16xf32>
    %386 = vector.multi_reduction <add>, %383, %cst_156 [1] : vector<16x32xf32> to vector<16xf32>
    %387 = vector.shape_cast %386 : vector<16xf32> to vector<16x1xf32>
    %cst_157 = arith.constant 3.200000e+01 : f32
    %388 = vector.broadcast %cst_157 : f32 to vector<16x1xf32>
    %389 = arith.divf %387, %388 : vector<16x1xf32>
    %390 = arith.mulf %383, %383 : vector<16x32xf32>
    %cst_158 = arith.constant dense<0.000000e+00> : vector<16xf32>
    %391 = vector.multi_reduction <add>, %390, %cst_158 [1] : vector<16x32xf32> to vector<16xf32>
    %392 = vector.shape_cast %391 : vector<16xf32> to vector<16x1xf32>
    %cst_159 = arith.constant 3.200000e+01 : f32
    %393 = vector.broadcast %cst_159 : f32 to vector<16x1xf32>
    %394 = arith.divf %392, %393 : vector<16x1xf32>
    %395 = arith.mulf %389, %389 : vector<16x1xf32>
    %396 = arith.subf %394, %395 : vector<16x1xf32>
    %cst_160 = arith.constant 0.000000e+00 : f32
    %397 = vector.broadcast %cst_160 : f32 to vector<16x1xf32>
    %398 = arith.maximumf %396, %397 : vector<16x1xf32>
    %399 = vector.broadcast %389 : vector<16x1xf32> to vector<16x32xf32>
    %400 = arith.subf %383, %399 : vector<16x32xf32>
    %cst_161 = arith.constant 9.99999996E-13 : f32
    %401 = vector.broadcast %cst_161 : f32 to vector<16x1xf32>
    %402 = arith.addf %398, %401 : vector<16x1xf32>
    %403 = math.rsqrt %402 : vector<16x1xf32>
    %404 = vector.broadcast %403 : vector<16x1xf32> to vector<16x32xf32>
    %405 = arith.mulf %400, %404 : vector<16x32xf32>
    %406 = vector.broadcast %384 : vector<1x32xf32> to vector<16x32xf32>
    %407 = arith.mulf %405, %406 : vector<16x32xf32>
    %408 = vector.broadcast %385 : vector<1x32xf32> to vector<16x32xf32>
    %409 = arith.addf %407, %408 : vector<16x32xf32>
    %410 = vector.shape_cast %409 : vector<16x32xf32> to vector<2x8x32xf32>
    "tpu.trace_start"() <{level = 10 : i32, message = "bos,bsh->boh"}> : () -> ()
    %cst_162 = arith.constant dense<0.000000e+00> : vector<2x1x32xf32>
    %411 = tpu.matmul %1, %410, %cst_162 {dimension_numbers = #tpu.dot_dimension_numbers<[2], [1], [1], [2], [0, 0, 0, 1, 1, 2], [0], [0]>} : vector<2x1x8xf32>, vector<2x8x32xf32>, vector<2x1x32xf32> -> vector<2x1x32xf32>
    "tpu.trace_stop"() : () -> ()
    %cst_163 = arith.constant dense<0.000000e+00> : vector<2x1xf32>
    %412 = vector.multi_reduction <add>, %1, %cst_163 [2] : vector<2x1x8xf32> to vector<2x1xf32>
    %413 = vector.shape_cast %411 : vector<2x1x32xf32> to vector<2x32xf32>
    %414 = tpu.reciprocal %412 {approx = true} : vector<2x1xf32> -> vector<2x1xf32>
    %415 = vector.broadcast %414 : vector<2x1xf32> to vector<2x32xf32>
    %416 = arith.mulf %413, %415 : vector<2x32xf32>
    %c0_164 = arith.constant 0 : index
    %c0_165 = arith.constant 0 : index
    %417 = vector.load %arg36[%c0_164, %c0_165] : memref<2x32xf32, #tpu.memory_space<vmem>>, vector<2x32xf32>
    tpu.vector_store %arg36[%c0_164, %c0_165], %416 {strides = array<i32>} : memref<2x32xf32, #tpu.memory_space<vmem>>, vector<2x32xf32>,
    return
  }
}

</mosaic_0001>

<llo_original>
// kernel: vhhbert_forward.1
$region0: #{vhhbert_forward.1}
  #allocation0 [shape = 'u32[]', space=smem, size = 0x4, offset = 0x4, fixed_abs, tag = 'smem constant byte address 0x4 - core index']
  #allocation1 [shape = 'u32[144,128]{1,0:T(1,128)}', space=vmem, size = 0x12000, scoped, tag = 'internal scratch']
  %s0 = inlined_call_operand.smem [shape: u32[37], index: -1, kind: input, shape index: {}]
  %s1 = sld [smem:[%s0]]
  %s2 = scalar_lea.smem %s0, 1
  %s3 = sld [smem:[%s2]]
  %s4 = scalar_lea.smem %s0, 2
  %s5 = sld [smem:[%s4]]
  %s6 = scalar_lea.smem %s0, 3
  %s7 = sld [smem:[%s6]]
  %s8 = scalar_lea.smem %s0, 4
  %s9 = sld [smem:[%s8]]
  %s10 = scalar_lea.smem %s0, 5
  %s11 = sld [smem:[%s10]]
  %s12 = scalar_lea.smem %s0, 6
  %s13 = sld [smem:[%s12]]
  %s14 = scalar_lea.smem %s0, 7
  %s15 = sld [smem:[%s14]]
  %s16 = scalar_lea.smem %s0, 8
  %s17 = sld [smem:[%s16]]
  %s18 = scalar_lea.smem %s0, 9
  %s19 = sld [smem:[%s18]]
  %s20 = scalar_lea.smem %s0, 10
  %s21 = sld [smem:[%s20]]
  %s22 = scalar_lea.smem %s0, 11
  %s23 = sld [smem:[%s22]]
  %s24 = scalar_lea.smem %s0, 12
  %s25 = sld [smem:[%s24]]
  %s26 = scalar_lea.smem %s0, 13
  %s27 = sld [smem:[%s26]]
  %s28 = scalar_lea.smem %s0, 14
  %s29 = sld [smem:[%s28]]
  %s30 = scalar_lea.smem %s0, 15
  %s31 = sld [smem:[%s30]]
  %s32 = scalar_lea.smem %s0, 16
  %s33 = sld [smem:[%s32]]
  %s34 = scalar_lea.smem %s0, 17
  %s35 = sld [smem:[%s34]]
  %s36 = scalar_lea.smem %s0, 18
  %s37 = sld [smem:[%s36]]
  %s38 = scalar_lea.smem %s0, 19
  %s39 = sld [smem:[%s38]]
  %s40 = scalar_lea.smem %s0, 20
  %s41 = sld [smem:[%s40]]
  %s42 = scalar_lea.smem %s0, 21
  %s43 = sld [smem:[%s42]]
  %s44 = scalar_lea.smem %s0, 22
  %s45 = sld [smem:[%s44]]
  %s46 = scalar_lea.smem %s0, 23
  %s47 = sld [smem:[%s46]]
  %s48 = scalar_lea.smem %s0, 24
  %s49 = sld [smem:[%s48]]
  %s50 = scalar_lea.smem %s0, 25
  %s51 = sld [smem:[%s50]]
  %s52 = scalar_lea.smem %s0, 26
  %s53 = sld [smem:[%s52]]
  %s54 = scalar_lea.smem %s0, 27
  %s55 = sld [smem:[%s54]]
  %s56 = scalar_lea.smem %s0, 28
  %s57 = sld [smem:[%s56]]
  %s58 = scalar_lea.smem %s0, 29
  %s59 = sld [smem:[%s58]]
  %s60 = scalar_lea.smem %s0, 30
  %s61 = sld [smem:[%s60]]
  %s62 = scalar_lea.smem %s0, 31
  %s63 = sld [smem:[%s62]]
  %s64 = scalar_lea.smem %s0, 32
  %s65 = sld [smem:[%s64]]
  %s66 = scalar_lea.smem %s0, 33
  %s67 = sld [smem:[%s66]]
  %s68 = scalar_lea.smem %s0, 34
  %s69 = sld [smem:[%s68]]
  %s70 = scalar_lea.smem %s0, 35
  %s71 = sld [smem:[%s70]]
  %s72 = scalar_lea.smem %s0, 36
  %s73 = sld [smem:[%s72]]
  %s74 = sld [smem:[#allocation0]]
  $region154: #{vhhbert_forward.1} parent=0
    _
  %s76 = ssub.s32 1, %s74
  %s77 = scalar_select 0, %s76, %s74
  $region1: #{vhhbert_forward.1} parent=0
    #allocation2 [shape = 'u8[1024]{0}', space=vmem, size = 0x400, scoped, tag = 'output window, operand 0, single buffered']
    #allocation3 [shape = 's32[1]{0}', space=sflag, size = 0x4, scoped, tag = 'scoped memory for vhhbert_forward.1']
    %78 = vsyncpa [#allocation3], 0
    // Predicated region
    $region2: #{vhhbert_forward.1} parent=1 // pred_check
      _
    $region3: #{vhhbert_forward.1} parent=1 // pred_check_branch
      %80 = sbr.rel (0) target = $region5
    $region4: #{vhhbert_forward.1} parent=1 // pred_region
      _
    $region5: #{vhhbert_forward.1} parent=1 // pred_fallthru
      _
    // Predicated region
    $region6: #{vhhbert_forward.1} parent=1 // pred_check
      _
    $region7: #{vhhbert_forward.1} parent=1 // pred_check_branch
      %82 = sbr.rel (0) target = $region9
    $region8: #{vhhbert_forward.1} parent=1 // pred_region
      _
    $region9: #{vhhbert_forward.1} parent=1 // pred_fallthru
      _
    // Predicated region
    $region10: #{vhhbert_forward.1} parent=1 // pred_check
      _
    $region11: #{vhhbert_forward.1} parent=1 // pred_check_branch
      %84 = sbr.rel (0) target = $region13
    $region12: #{vhhbert_forward.1} parent=1 // pred_region
      _
    $region13: #{vhhbert_forward.1} parent=1 // pred_fallthru
      _
    // Predicated region
    $region14: #{vhhbert_forward.1} parent=1 // pred_check
      _
    $region15: #{vhhbert_forward.1} parent=1 // pred_check_branch
      %86 = sbr.rel (0) target = $region17
    $region16: #{vhhbert_forward.1} parent=1 // pred_region
      _
    $region17: #{vhhbert_forward.1} parent=1 // pred_fallthru
      _
    // Predicated region
    $region18: #{vhhbert_forward.1} parent=1 // pred_check
      _
    $region19: #{vhhbert_forward.1} parent=1 // pred_check_branch
      %88 = sbr.rel (0) target = $region21
    $region20: #{vhhbert_forward.1} parent=1 // pred_region
      _
    $region21: #{vhhbert_forward.1} parent=1 // pred_fallthru
      _
    // Predicated region
    $region22: #{vhhbert_forward.1} parent=1 // pred_check
      _
    $region23: #{vhhbert_forward.1} parent=1 // pred_check_branch
      %90 = sbr.rel (0) target = $region25
    $region24: #{vhhbert_forward.1} parent=1 // pred_region
      _
    $region25: #{vhhbert_forward.1} parent=1 // pred_fallthru
      _
    // Predicated region
    $region26: #{vhhbert_forward.1} parent=1 // pred_check
      _
    $region27: #{vhhbert_forward.1} parent=1 // pred_check_branch
      %92 = sbr.rel (0) target = $region29
    $region28: #{vhhbert_forward.1} parent=1 // pred_region
      _
    $region29: #{vhhbert_forward.1} parent=1 // pred_fallthru
      _
    // Predicated region
    $region30: #{vhhbert_forward.1} parent=1 // pred_check
      _
    $region31: #{vhhbert_forward.1} parent=1 // pred_check_branch
      %94 = sbr.rel (0) target = $region33
    $region32: #{vhhbert_forward.1} parent=1 // pred_region
      _
    $region33: #{vhhbert_forward.1} parent=1 // pred_fallthru
      _
    // Predicated region
    $region34: #{vhhbert_forward.1} parent=1 // pred_check
      _
    $region35: #{vhhbert_forward.1} parent=1 // pred_check_branch
      %96 = sbr.rel (0) target = $region37
    $region36: #{vhhbert_forward.1} parent=1 // pred_region
      _
    $region37: #{vhhbert_forward.1} parent=1 // pred_fallthru
      _
    // Predicated region
    $region38: #{vhhbert_forward.1} parent=1 // pred_check
      _
    $region39: #{vhhbert_forward.1} parent=1 // pred_check_branch
      %98 = sbr.rel (0) target = $region41
    $region40: #{vhhbert_forward.1} parent=1 // pred_region
      _
    $region41: #{vhhbert_forward.1} parent=1 // pred_fallthru
      _
    // Predicated region
    $region42: #{vhhbert_forward.1} parent=1 // pred_check
      _
    $region43: #{vhhbert_forward.1} parent=1 // pred_check_branch
      %100 = sbr.rel (0) target = $region45
    $region44: #{vhhbert_forward.1} parent=1 // pred_region
      _
    $region45: #{vhhbert_forward.1} parent=1 // pred_fallthru
      _
    // Predicated region
    $region46: #{vhhbert_forward.1} parent=1 // pred_check
      _
    $region47: #{vhhbert_forward.1} parent=1 // pred_check_branch
      %102 = sbr.rel (0) target = $region49
    $region48: #{vhhbert_forward.1} parent=1 // pred_region
      _
    $region49: #{vhhbert_forward.1} parent=1 // pred_fallthru
      _
    // Predicated region
    $region50: #{vhhbert_forward.1} parent=1 // pred_check
      _
    $region51: #{vhhbert_forward.1} parent=1 // pred_check_branch
      %104 = sbr.rel (0) target = $region53
    $region52: #{vhhbert_forward.1} parent=1 // pred_region
      _
    $region53: #{vhhbert_forward.1} parent=1 // pred_fallthru
      _
    // Predicated region
    $region54: #{vhhbert_forward.1} parent=1 // pred_check
      _
    $region55: #{vhhbert_forward.1} parent=1 // pred_check_branch
      %106 = sbr.rel (0) target = $region57
    $region56: #{vhhbert_forward.1} parent=1 // pred_region
      _
    $region57: #{vhhbert_forward.1} parent=1 // pred_fallthru
      _
    // Predicated region
    $region58: #{vhhbert_forward.1} parent=1 // pred_check
      _
    $region59: #{vhhbert_forward.1} parent=1 // pred_check_branch
      %108 = sbr.rel (0) target = $region61
    $region60: #{vhhbert_forward.1} parent=1 // pred_region
      _
    $region61: #{vhhbert_forward.1} parent=1 // pred_fallthru
      _
    // Predicated region
    $region62: #{vhhbert_forward.1} parent=1 // pred_check
      _
    $region63: #{vhhbert_forward.1} parent=1 // pred_check_branch
      %110 = sbr.rel (0) target = $region65
    $region64: #{vhhbert_forward.1} parent=1 // pred_region
      _
    $region65: #{vhhbert_forward.1} parent=1 // pred_fallthru
      _
    // Predicated region
    $region66: #{vhhbert_forward.1} parent=1 // pred_check
      _
    $region67: #{vhhbert_forward.1} parent=1 // pred_check_branch
      %112 = sbr.rel (0) target = $region69
    $region68: #{vhhbert_forward.1} parent=1 // pred_region
      _
    $region69: #{vhhbert_forward.1} parent=1 // pred_fallthru
      _
    // Predicated region
    $region70: #{vhhbert_forward.1} parent=1 // pred_check
      _
    $region71: #{vhhbert_forward.1} parent=1 // pred_check_branch
      %114 = sbr.rel (0) target = $region73
    $region72: #{vhhbert_forward.1} parent=1 // pred_region
      _
    $region73: #{vhhbert_forward.1} parent=1 // pred_fallthru
      _
    // Predicated region
    $region74: #{vhhbert_forward.1} parent=1 // pred_check
      _
    $region75: #{vhhbert_forward.1} parent=1 // pred_check_branch
      %116 = sbr.rel (0) target = $region77
    $region76: #{vhhbert_forward.1} parent=1 // pred_region
      _
    $region77: #{vhhbert_forward.1} parent=1 // pred_fallthru
      _
    // Predicated region
    $region78: #{vhhbert_forward.1} parent=1 // pred_check
      _
    $region79: #{vhhbert_forward.1} parent=1 // pred_check_branch
      %118 = sbr.rel (0) target = $region81
    $region80: #{vhhbert_forward.1} parent=1 // pred_region
      _
    $region81: #{vhhbert_forward.1} parent=1 // pred_fallthru
      _
    // Predicated region
    $region82: #{vhhbert_forward.1} parent=1 // pred_check
      _
    $region83: #{vhhbert_forward.1} parent=1 // pred_check_branch
      %120 = sbr.rel (0) target = $region85
    $region84: #{vhhbert_forward.1} parent=1 // pred_region
      _
    $region85: #{vhhbert_forward.1} parent=1 // pred_fallthru
      _
    // Predicated region
    $region86: #{vhhbert_forward.1} parent=1 // pred_check
      _
    $region87: #{vhhbert_forward.1} parent=1 // pred_check_branch
      %122 = sbr.rel (0) target = $region89
    $region88: #{vhhbert_forward.1} parent=1 // pred_region
      _
    $region89: #{vhhbert_forward.1} parent=1 // pred_fallthru
      _
    // Predicated region
    $region90: #{vhhbert_forward.1} parent=1 // pred_check
      _
    $region91: #{vhhbert_forward.1} parent=1 // pred_check_branch
      %124 = sbr.rel (0) target = $region93
    $region92: #{vhhbert_forward.1} parent=1 // pred_region
      _
    $region93: #{vhhbert_forward.1} parent=1 // pred_fallthru
      _
    // Predicated region
    $region94: #{vhhbert_forward.1} parent=1 // pred_check
      _
    $region95: #{vhhbert_forward.1} parent=1 // pred_check_branch
      %126 = sbr.rel (0) target = $region97
    $region96: #{vhhbert_forward.1} parent=1 // pred_region
      _
    $region97: #{vhhbert_forward.1} parent=1 // pred_fallthru
      _
    // Predicated region
    $region98: #{vhhbert_forward.1} parent=1 // pred_check
      _
    $region99: #{vhhbert_forward.1} parent=1 // pred_check_branch
      %128 = sbr.rel (0) target = $region101
    $region100: #{vhhbert_forward.1} parent=1 // pred_region
      _
    $region101: #{vhhbert_forward.1} parent=1 // pred_fallthru
      _
    // Predicated region
    $region102: #{vhhbert_forward.1} parent=1 // pred_check
      _
    $region103: #{vhhbert_forward.1} parent=1 // pred_check_branch
      %130 = sbr.rel (0) target = $region105
    $region104: #{vhhbert_forward.1} parent=1 // pred_region
      _
    $region105: #{vhhbert_forward.1} parent=1 // pred_fallthru
      _
    // Predicated region
    $region106: #{vhhbert_forward.1} parent=1 // pred_check
      _
    $region107: #{vhhbert_forward.1} parent=1 // pred_check_branch
      %132 = sbr.rel (0) target = $region109
    $region108: #{vhhbert_forward.1} parent=1 // pred_region
      _
    $region109: #{vhhbert_forward.1} parent=1 // pred_fallthru
      _
    // Predicated region
    $region110: #{vhhbert_forward.1} parent=1 // pred_check
      _
    $region111: #{vhhbert_forward.1} parent=1 // pred_check_branch
      %134 = sbr.rel (0) target = $region113
    $region112: #{vhhbert_forward.1} parent=1 // pred_region
      _
    $region113: #{vhhbert_forward.1} parent=1 // pred_fallthru
      _
    // Predicated region
    $region114: #{vhhbert_forward.1} parent=1 // pred_check
      _
    $region115: #{vhhbert_forward.1} parent=1 // pred_check_branch
      %136 = sbr.rel (0) target = $region117
    $region116: #{vhhbert_forward.1} parent=1 // pred_region
      _
    $region117: #{vhhbert_forward.1} parent=1 // pred_fallthru
      _
    // Predicated region
    $region118: #{vhhbert_forward.1} parent=1 // pred_check
      _
    $region119: #{vhhbert_forward.1} parent=1 // pred_check_branch
      %138 = sbr.rel (0) target = $region121
    $region120: #{vhhbert_forward.1} parent=1 // pred_region
      _
    $region121: #{vhhbert_forward.1} parent=1 // pred_fallthru
      _
    // Predicated region
    $region122: #{vhhbert_forward.1} parent=1 // pred_check
      _
    $region123: #{vhhbert_forward.1} parent=1 // pred_check_branch
      %140 = sbr.rel (0) target = $region125
    $region124: #{vhhbert_forward.1} parent=1 // pred_region
      _
    $region125: #{vhhbert_forward.1} parent=1 // pred_fallthru
      _
    // Predicated region
    $region126: #{vhhbert_forward.1} parent=1 // pred_check
      _
    $region127: #{vhhbert_forward.1} parent=1 // pred_check_branch
      %142 = sbr.rel (0) target = $region129
    $region128: #{vhhbert_forward.1} parent=1 // pred_region
      _
    $region129: #{vhhbert_forward.1} parent=1 // pred_fallthru
      _
    // Predicated region
    $region130: #{vhhbert_forward.1} parent=1 // pred_check
      _
    $region131: #{vhhbert_forward.1} parent=1 // pred_check_branch
      %144 = sbr.rel (0) target = $region133
    $region132: #{vhhbert_forward.1} parent=1 // pred_region
      _
    $region133: #{vhhbert_forward.1} parent=1 // pred_fallthru
      _
    // Predicated region
    $region134: #{vhhbert_forward.1} parent=1 // pred_check
      _
    $region135: #{vhhbert_forward.1} parent=1 // pred_check_branch
      %146 = sbr.rel (0) target = $region137
    $region136: #{vhhbert_forward.1} parent=1 // pred_region
      _
    $region137: #{vhhbert_forward.1} parent=1 // pred_fallthru
      _
    // Predicated region
    $region138: #{vhhbert_forward.1} parent=1 // pred_check
      _
    $region139: #{vhhbert_forward.1} parent=1 // pred_check_branch
      %148 = sbr.rel (0) target = $region141
    $region140: #{vhhbert_forward.1} parent=1 // pred_region
      _
    $region141: #{vhhbert_forward.1} parent=1 // pred_fallthru
      _
    // Predicated region
    $region142: #{vhhbert_forward.1} parent=1 // pred_check
      _
    $region143: #{vhhbert_forward.1} parent=1 // pred_check_branch
      %150 = sbr.rel (0) target = $region145
    $region144: #{vhhbert_forward.1} parent=1 // pred_region
      _
    $region145: #{vhhbert_forward.1} parent=1 // pred_fallthru
      _
    %v151 = vld [vmem:[%s1] sm:$0xff]
    %v152 = vld [vmem:[%s1 + $0x8] sm:$0xff]
    %v153 = vld [vmem:[%s3] sm:$0x1]
    %v154 = vld [vmem:[%s3 + $0x1] sm:$0x1]
    %vm155 = vcmp.gt.f32.partialorder %v153, 0.5
    %vm156 = vcmp.gt.f32.partialorder %v154, 0.5
    %v157 = vld [vmem:[%s5] sm:$0x1]
    %v158 = vld [vmem:[%s7] sm:$0x1]
    %vm159 = vcmask 261120
    %v160 = vsel %vm159, %v151, 0.0
    %161 = vadd.xlane.f32.xlu0 %v160
    %v162 = vpop.xlane.xlu0 %161
    %v163 = vsel %vm159, %v152, 0.0
    %164 = vadd.xlane.f32.xlu0 %v163
    %v165 = vpop.xlane.xlu0 %164
    %v166 = vrcp.pop 32.0
    %v167 = vmul.f32 %v162, %v166
    %v168 = vmul.f32 %v165, %v166
    %v169 = vmul.f32 %v151, %v151
    %v170 = vmul.f32 %v152, %v152
    %v171 = vsel %vm159, %v169, 0.0
    %172 = vadd.xlane.f32.xlu0 %v171
    %v173 = vpop.xlane.xlu0 %172
    %v174 = vsel %vm159, %v170, 0.0
    %175 = vadd.xlane.f32.xlu0 %v174
    %v176 = vpop.xlane.xlu0 %175
    %v177 = vmul.f32 %v173, %v166
    %v178 = vmul.f32 %v176, %v166
    %v179 = vmul.f32 %v167, %v167
    %v180 = vmul.f32 %v168, %v168
    %v181 = vsub.f32 %v177, %v179
    %v182 = vsub.f32 %v178, %v180
    %v183 = vmax.f32 %v181, 0.0
    %v184 = vmax.f32 %v182, 0.0
    %v185 = vsub.f32 %v151, %v167
    %v186 = vsub.f32 %v152, %v168
    %v187 = vadd.f32 %v183, 1e-12
    %v188 = vadd.f32 %v184, 1e-12
    %v189 = vrsqrt.pop %v187
    %v190 = vrsqrt.pop %v188
    %v191 = vmul.f32 %v185, %v189
    %v192 = vmul.f32 %v186, %v190
    %v194 = vlaneseq
    %v195 = vshrl.u32 %v194, 7
    %v196 = vsub.s32 0, %v195
    %v197 = vrot.slane %v157, %v196
    %v199 = vmul.f32 %v191, %v197
    %v200 = vmul.f32 %v192, %v197
    %v202 = vlaneseq
    %v203 = vshrl.u32 %v202, 7
    %v204 = vsub.s32 0, %v203
    %v205 = vrot.slane %v158, %v204
    %v207 = vadd.f32 %v199, %v205
    %v208 = vadd.f32 %v200, %v205
    %v209 = vld [vmem:[%s9] sm:$0xff]
    %v210 = vld [vmem:[%s9 + $0x8] sm:$0xff]
    %v211 = vld [vmem:[%s9 + $0x10] sm:$0xff]
    %v212 = vld [vmem:[%s9 + $0x18] sm:$0xff]
    %v213 = vld [vmem:[%s11] sm:$0x1]
    %v215 = vlaneseq
    %v216 = vshrl.u32 %v215, 7
    %v217 = vsub.s32 0, %v216
    %v218 = vrot.slane %v213, %v217
    %v221 = vsel %vm159, %v207, 0
    %v224 = vsel %vm159, %v208, 0
    %226 = vmatprep.subr.mxu0 0.0
    %227 = vmatpush1.msra.mxu0 0.0
    %228 = vmatprep.subr.mxu0 0.0
    %229 = vmatpush1.msra.mxu0 0.0
    %230 = vmatprep.subr.mxu0 0.0
    %231 = vmatpush1.msra.mxu0 0.0
    %232 = vmatprep.subr.mxu0 0.0
    %233 = vmatpush1.msra.mxu0 0.0
    %234 = vmatprep.subr.mxu0 0.0
    %235 = vmatpush1.msra.mxu0 0.0
    %236 = vmatprep.subr.mxu0 0.0
    %237 = vmatpush1.msra.mxu0 0.0
    %238 = vmatprep.subr.mxu0 0.0
    %239 = vmatpush1.msra.mxu0 0.0
    %240 = vmatprep.subr.mxu0 0.0
    %241 = vmatpush1.msra.mxu0 0.0
    %242 = vmatprep.subr.mxu0 0.0
    %243 = vmatpush1.msra.mxu0 0.0
    %244 = vmatprep.subr.mxu0 0.0
    %245 = vmatpush1.msra.mxu0 0.0
    %246 = vmatprep.subr.mxu0 0.0
    %247 = vmatpush1.msra.mxu0 0.0
    %248 = vmatprep.subr.mxu0 0.0
    %249 = vmatpush1.msra.mxu0 0.0
    %250 = vmatprep.subr.mxu0 0.0
    %251 = vmatpush1.msra.mxu0 %v212
    %252 = vmatprep.subr.mxu0 0.0
    %253 = vmatpush1.msra.mxu0 %v211
    %254 = vmatprep.subr.mxu0 0.0
    %255 = vmatpush1.msra.mxu0 %v210
    %256 = vmatprep.subr.mxu0 0.0
    %257 = vmatpush1.msra.mxu0 %v209
    %258 = vmatprep.subr.mxu0 0.0
    %259 = vmatpush2.msra.mxu0 0.0
    %260 = vmatprep.subr.mxu0 0.0
    %261 = vmatpush2.msra.mxu0 0.0
    %262 = vmatprep.subr.mxu0 0.0
    %263 = vmatpush2.msra.mxu0 0.0
    %264 = vmatprep.subr.mxu0 0.0
    %265 = vmatpush2.msra.mxu0 0.0
    %266 = vmatprep.subr.mxu0 0.0
    %267 = vmatpush2.msra.mxu0 0.0
    %268 = vmatprep.subr.mxu0 0.0
    %269 = vmatpush2.msra.mxu0 0.0
    %270 = vmatprep.subr.mxu0 0.0
    %271 = vmatpush2.msra.mxu0 0.0
    %272 = vmatprep.subr.mxu0 0.0
    %273 = vmatpush2.msra.mxu0 0.0
    %274 = vmatprep.subr.mxu0 0.0
    %275 = vmatpush2.msra.mxu0 0.0
    %276 = vmatprep.subr.mxu0 0.0
    %277 = vmatpush2.msra.mxu0 0.0
    %278 = vmatprep.subr.mxu0 0.0
    %279 = vmatpush2.msra.mxu0 0.0
    %280 = vmatprep.subr.mxu0 0.0
    %281 = vmatpush2.msra.mxu0 0.0
    %282 = vmatprep.subr.mxu0 0.0
    %283 = vmatpush2.msra.mxu0 0.0
    %284 = vmatprep.subr.mxu0 0.0
    %285 = vmatpush2.msra.mxu0 0.0
    %286 = vmatprep.subr.mxu0 0.0
    %287 = vmatpush2.msra.mxu0 0.0
    %288 = vmatprep.subr.mxu0 0.0
    %289 = vmatpush2.msra.mxu0 0.0
    %290 = vmatprep.mubr.f32.mxu0 0.0
    %291 = vmatmul.mubr.f32.gmra.mxu0 %v221
    %v292 = vpop.f32.mrf.mxu0
    %v293 = vadd.f32 %v218, %v292
    %v294 = vpop.f32.mrf.mxu0
    %295 = vmatprep.mubr.f32.mxu0 0.0
    %296 = vmatmul.mubr.f32.gmra.mxu0 %v224
    %v297 = vpop.f32.mrf.mxu0
    %v298 = vadd.f32 %v218, %v297
    %v299 = vpop.f32.mrf.mxu0
    %300 = vdwg.mxu0
    %v301 = vld [vmem:[%s13] sm:$0xff]
    %v302 = vld [vmem:[%s13 + $0x8] sm:$0xff]
    %v303 = vld [vmem:[%s13 + $0x10] sm:$0xff]
    %v304 = vld [vmem:[%s13 + $0x18] sm:$0xff]
    %v305 = vld [vmem:[%s15] sm:$0x1]
    %v307 = vlaneseq
    %v308 = vshrl.u32 %v307, 7
    %v309 = vsub.s32 0, %v308
    %v310 = vrot.slane %v305, %v309
    %312 = vmatprep.subr.mxu0 0.0
    %313 = vmatpush1.msra.mxu0 0.0
    %314 = vmatprep.subr.mxu0 0.0
    %315 = vmatpush1.msra.mxu0 0.0
    %316 = vmatprep.subr.mxu0 0.0
    %317 = vmatpush1.msra.mxu0 0.0
    %318 = vmatprep.subr.mxu0 0.0
    %319 = vmatpush1.msra.mxu0 0.0
    %320 = vmatprep.subr.mxu0 0.0
    %321 = vmatpush1.msra.mxu0 0.0
    %322 = vmatprep.subr.mxu0 0.0
    %323 = vmatpush1.msra.mxu0 0.0
    %324 = vmatprep.subr.mxu0 0.0
    %325 = vmatpush1.msra.mxu0 0.0
    %326 = vmatprep.subr.mxu0 0.0
    %327 = vmatpush1.msra.mxu0 0.0
    %328 = vmatprep.subr.mxu0 0.0
    %329 = vmatpush1.msra.mxu0 0.0
    %330 = vmatprep.subr.mxu0 0.0
    %331 = vmatpush1.msra.mxu0 0.0
    %332 = vmatprep.subr.mxu0 0.0
    %333 = vmatpush1.msra.mxu0 0.0
    %334 = vmatprep.subr.mxu0 0.0
    %335 = vmatpush1.msra.mxu0 0.0
    %336 = vmatprep.subr.mxu0 0.0
    %337 = vmatpush1.msra.mxu0 %v304
    %338 = vmatprep.subr.mxu0 0.0
    %339 = vmatpush1.msra.mxu0 %v303
    %340 = vmatprep.subr.mxu0 0.0
    %341 = vmatpush1.msra.mxu0 %v302
    %342 = vmatprep.subr.mxu0 0.0
    %343 = vmatpush1.msra.mxu0 %v301
    %344 = vmatprep.subr.mxu0 0.0
    %345 = vmatpush2.msra.mxu0 0.0
    %346 = vmatprep.subr.mxu0 0.0
    %347 = vmatpush2.msra.mxu0 0.0
    %348 = vmatprep.subr.mxu0 0.0
    %349 = vmatpush2.msra.mxu0 0.0
    %350 = vmatprep.subr.mxu0 0.0
    %351 = vmatpush2.msra.mxu0 0.0
    %352 = vmatprep.subr.mxu0 0.0
    %353 = vmatpush2.msra.mxu0 0.0
    %354 = vmatprep.subr.mxu0 0.0
    %355 = vmatpush2.msra.mxu0 0.0
    %356 = vmatprep.subr.mxu0 0.0
    %357 = vmatpush2.msra.mxu0 0.0
    %358 = vmatprep.subr.mxu0 0.0
    %359 = vmatpush2.msra.mxu0 0.0
    %360 = vmatprep.subr.mxu0 0.0
    %361 = vmatpush2.msra.mxu0 0.0
    %362 = vmatprep.subr.mxu0 0.0
    %363 = vmatpush2.msra.mxu0 0.0
    %364 = vmatprep.subr.mxu0 0.0
    %365 = vmatpush2.msra.mxu0 0.0
    %366 = vmatprep.subr.mxu0 0.0
    %367 = vmatpush2.msra.mxu0 0.0
    %368 = vmatprep.subr.mxu0 0.0
    %369 = vmatpush2.msra.mxu0 0.0
    %370 = vmatprep.subr.mxu0 0.0
    %371 = vmatpush2.msra.mxu0 0.0
    %372 = vmatprep.subr.mxu0 0.0
    %373 = vmatpush2.msra.mxu0 0.0
    %374 = vmatprep.subr.mxu0 0.0
    %375 = vmatpush2.msra.mxu0 0.0
    %376 = vmatprep.mubr.f32.mxu0 0.0
    %377 = vmatmul.mubr.f32.gmra.mxu0 %v221
    %v378 = vpop.f32.mrf.mxu0
    %v379 = vadd.f32 %v310, %v378
    %v380 = vpop.f32.mrf.mxu0
    %381 = vmatprep.mubr.f32.mxu0 0.0
    %382 = vmatmul.mubr.f32.gmra.mxu0 %v224
    %v383 = vpop.f32.mrf.mxu0
    %v384 = vadd.f32 %v310, %v383
    %v385 = vpop.f32.mrf.mxu0
    %386 = vdwg.mxu0
    %v387 = vld [vmem:[%s17] sm:$0xff]
    %v388 = vld [vmem:[%s17 + $0x8] sm:$0xff]
    %v389 = vld [vmem:[%s17 + $0x10] sm:$0xff]
    %v390 = vld [vmem:[%s17 + $0x18] sm:$0xff]
    %v391 = vld [vmem:[%s19] sm:$0x1]
    %v393 = vlaneseq
    %v394 = vshrl.u32 %v393, 7
    %v395 = vsub.s32 0, %v394
    %v396 = vrot.slane %v391, %v395
    %398 = vmatprep.subr.mxu0 0.0
    %399 = vmatpush1.msra.mxu0 0.0
    %400 = vmatprep.subr.mxu0 0.0
    %401 = vmatpush1.msra.mxu0 0.0
    %402 = vmatprep.subr.mxu0 0.0
    %403 = vmatpush1.msra.mxu0 0.0
    %404 = vmatprep.subr.mxu0 0.0
    %405 = vmatpush1.msra.mxu0 0.0
    %406 = vmatprep.subr.mxu0 0.0
    %407 = vmatpush1.msra.mxu0 0.0
    %408 = vmatprep.subr.mxu0 0.0
    %409 = vmatpush1.msra.mxu0 0.0
    %410 = vmatprep.subr.mxu0 0.0
    %411 = vmatpush1.msra.mxu0 0.0
    %412 = vmatprep.subr.mxu0 0.0
    %413 = vmatpush1.msra.mxu0 0.0
    %414 = vmatprep.subr.mxu0 0.0
    %415 = vmatpush1.msra.mxu0 0.0
    %416 = vmatprep.subr.mxu0 0.0
    %417 = vmatpush1.msra.mxu0 0.0
    %418 = vmatprep.subr.mxu0 0.0
    %419 = vmatpush1.msra.mxu0 0.0
    %420 = vmatprep.subr.mxu0 0.0
    %421 = vmatpush1.msra.mxu0 0.0
    %422 = vmatprep.subr.mxu0 0.0
    %423 = vmatpush1.msra.mxu0 %v390
    %424 = vmatprep.subr.mxu0 0.0
    %425 = vmatpush1.msra.mxu0 %v389
    %426 = vmatprep.subr.mxu0 0.0
    %427 = vmatpush1.msra.mxu0 %v388
    %428 = vmatprep.subr.mxu0 0.0
    %429 = vmatpush1.msra.mxu0 %v387
    %430 = vmatprep.subr.mxu0 0.0
    %431 = vmatpush2.msra.mxu0 0.0
    %432 = vmatprep.subr.mxu0 0.0
    %433 = vmatpush2.msra.mxu0 0.0
    %434 = vmatprep.subr.mxu0 0.0
    %435 = vmatpush2.msra.mxu0 0.0
    %436 = vmatprep.subr.mxu0 0.0
    %437 = vmatpush2.msra.mxu0 0.0
    %438 = vmatprep.subr.mxu0 0.0
    %439 = vmatpush2.msra.mxu0 0.0
    %440 = vmatprep.subr.mxu0 0.0
    %441 = vmatpush2.msra.mxu0 0.0
    %442 = vmatprep.subr.mxu0 0.0
    %443 = vmatpush2.msra.mxu0 0.0
    %444 = vmatprep.subr.mxu0 0.0
    %445 = vmatpush2.msra.mxu0 0.0
    %446 = vmatprep.subr.mxu0 0.0
    %447 = vmatpush2.msra.mxu0 0.0
    %448 = vmatprep.subr.mxu0 0.0
    %449 = vmatpush2.msra.mxu0 0.0
    %450 = vmatprep.subr.mxu0 0.0
    %451 = vmatpush2.msra.mxu0 0.0
    %452 = vmatprep.subr.mxu0 0.0
    %453 = vmatpush2.msra.mxu0 0.0
    %454 = vmatprep.subr.mxu0 0.0
    %455 = vmatpush2.msra.mxu0 0.0
    %456 = vmatprep.subr.mxu0 0.0
    %457 = vmatpush2.msra.mxu0 0.0
    %458 = vmatprep.subr.mxu0 0.0
    %459 = vmatpush2.msra.mxu0 0.0
    %460 = vmatprep.subr.mxu0 0.0
    %461 = vmatpush2.msra.mxu0 0.0
    %462 = vmatprep.mubr.f32.mxu0 0.0
    %463 = vmatmul.mubr.f32.gmra.mxu0 %v221
    %v464 = vpop.f32.mrf.mxu0
    %v465 = vadd.f32 %v396, %v464
    %v466 = vpop.f32.mrf.mxu0
    %467 = vmatprep.mubr.f32.mxu0 0.0
    %468 = vmatmul.mubr.f32.gmra.mxu0 %v224
    %v469 = vpop.f32.mrf.mxu0
    %v470 = vadd.f32 %v396, %v469
    %v471 = vpop.f32.mrf.mxu0
    %472 = vdwg.mxu0
    %vm473 = vcmask 64512
    %v475 = vsel %vm473, %v293, 0
    %v478 = vsel %vm473, %v379, 0
    %480 = vmatprep.subr.mxu0 0.0
    %481 = vmatpush1.xpose.msra.mxu0 0.0
    %482 = vmatprep.subr.mxu0 0.0
    %483 = vmatpush1.xpose.msra.mxu0 0.0
    %484 = vmatprep.subr.mxu0 0.0
    %485 = vmatpush1.xpose.msra.mxu0 0.0
    %486 = vmatprep.subr.mxu0 0.0
    %487 = vmatpush1.xpose.msra.mxu0 0.0
    %488 = vmatprep.subr.mxu0 0.0
    %489 = vmatpush1.xpose.msra.mxu0 0.0
    %490 = vmatprep.subr.mxu0 0.0
    %491 = vmatpush1.xpose.msra.mxu0 0.0
    %492 = vmatprep.subr.mxu0 0.0
    %493 = vmatpush1.xpose.msra.mxu0 0.0
    %494 = vmatprep.subr.mxu0 0.0
    %495 = vmatpush1.xpose.msra.mxu0 0.0
    %496 = vmatprep.subr.mxu0 0.0
    %497 = vmatpush1.xpose.msra.mxu0 0.0
    %498 = vmatprep.subr.mxu0 0.0
    %499 = vmatpush1.xpose.msra.mxu0 0.0
    %500 = vmatprep.subr.mxu0 0.0
    %501 = vmatpush1.xpose.msra.mxu0 0.0
    %502 = vmatprep.subr.mxu0 0.0
    %503 = vmatpush1.xpose.msra.mxu0 0.0
    %504 = vmatprep.subr.mxu0 0.0
    %505 = vmatpush1.xpose.msra.mxu0 0.0
    %506 = vmatprep.subr.mxu0 0.0
    %507 = vmatpush1.xpose.msra.mxu0 0.0
    %508 = vmatprep.subr.mxu0 0.0
    %509 = vmatpush1.xpose.msra.mxu0 0.0
    %510 = vmatprep.subr.mxu0 0.0
    %511 = vmatpush1.xpose.msra.mxu0 %v478
    %512 = vmatprep.subr.mxu0 0.0
    %513 = vmatpush2.xpose.msra.mxu0 0.0
    %514 = vmatprep.subr.mxu0 0.0
    %515 = vmatpush2.xpose.msra.mxu0 0.0
    %516 = vmatprep.subr.mxu0 0.0
    %517 = vmatpush2.xpose.msra.mxu0 0.0
    %518 = vmatprep.subr.mxu0 0.0
    %519 = vmatpush2.xpose.msra.mxu0 0.0
    %520 = vmatprep.subr.mxu0 0.0
    %521 = vmatpush2.xpose.msra.mxu0 0.0
    %522 = vmatprep.subr.mxu0 0.0
    %523 = vmatpush2.xpose.msra.mxu0 0.0
    %524 = vmatprep.subr.mxu0 0.0
    %525 = vmatpush2.xpose.msra.mxu0 0.0
    %526 = vmatprep.subr.mxu0 0.0
    %527 = vmatpush2.xpose.msra.mxu0 0.0
    %528 = vmatprep.subr.mxu0 0.0
    %529 = vmatpush2.xpose.msra.mxu0 0.0
    %530 = vmatprep.subr.mxu0 0.0
    %531 = vmatpush2.xpose.msra.mxu0 0.0
    %532 = vmatprep.subr.mxu0 0.0
    %533 = vmatpush2.xpose.msra.mxu0 0.0
    %534 = vmatprep.subr.mxu0 0.0
    %535 = vmatpush2.xpose.msra.mxu0 0.0
    %536 = vmatprep.subr.mxu0 0.0
    %537 = vmatpush2.xpose.msra.mxu0 0.0
    %538 = vmatprep.subr.mxu0 0.0
    %539 = vmatpush2.xpose.msra.mxu0 0.0
    %540 = vmatprep.subr.mxu0 0.0
    %541 = vmatpush2.xpose.msra.mxu0 0.0
    %542 = vmatprep.subr.mxu0 0.0
    %543 = vmatpush2.xpose.msra.mxu0 0.0
    %544 = vmatprep.mubr.f32.mxu0 0.0
    %545 = vmatmul.mubr.f32.gmra.mxu0 %v475
    %v546 = vpop.f32.mrf.mxu0
    %v547 = vadd.f32 0.0, %v546
    %v548 = vpop.f32.mrf.mxu0
    %549 = vdwg.mxu0
    %v551 = vsel %vm473, %v298, 0
    %v554 = vsel %vm473, %v384, 0
    %556 = vmatprep.subr.mxu0 0.0
    %557 = vmatpush1.xpose.msra.mxu0 0.0
    %558 = vmatprep.subr.mxu0 0.0
    %559 = vmatpush1.xpose.msra.mxu0 0.0
    %560 = vmatprep.subr.mxu0 0.0
    %561 = vmatpush1.xpose.msra.mxu0 0.0
    %562 = vmatprep.subr.mxu0 0.0
    %563 = vmatpush1.xpose.msra.mxu0 0.0
    %564 = vmatprep.subr.mxu0 0.0
    %565 = vmatpush1.xpose.msra.mxu0 0.0
    %566 = vmatprep.subr.mxu0 0.0
    %567 = vmatpush1.xpose.msra.mxu0 0.0
    %568 = vmatprep.subr.mxu0 0.0
    %569 = vmatpush1.xpose.msra.mxu0 0.0
    %570 = vmatprep.subr.mxu0 0.0
    %571 = vmatpush1.xpose.msra.mxu0 0.0
    %572 = vmatprep.subr.mxu0 0.0
    %573 = vmatpush1.xpose.msra.mxu0 0.0
    %574 = vmatprep.subr.mxu0 0.0
    %575 = vmatpush1.xpose.msra.mxu0 0.0
    %576 = vmatprep.subr.mxu0 0.0
    %577 = vmatpush1.xpose.msra.mxu0 0.0
    %578 = vmatprep.subr.mxu0 0.0
    %579 = vmatpush1.xpose.msra.mxu0 0.0
    %580 = vmatprep.subr.mxu0 0.0
    %581 = vmatpush1.xpose.msra.mxu0 0.0
    %582 = vmatprep.subr.mxu0 0.0
    %583 = vmatpush1.xpose.msra.mxu0 0.0
    %584 = vmatprep.subr.mxu0 0.0
    %585 = vmatpush1.xpose.msra.mxu0 0.0
    %586 = vmatprep.subr.mxu0 0.0
    %587 = vmatpush1.xpose.msra.mxu0 %v554
    %588 = vmatprep.subr.mxu0 0.0
    %589 = vmatpush2.xpose.msra.mxu0 0.0
    %590 = vmatprep.subr.mxu0 0.0
    %591 = vmatpush2.xpose.msra.mxu0 0.0
    %592 = vmatprep.subr.mxu0 0.0
    %593 = vmatpush2.xpose.msra.mxu0 0.0
    %594 = vmatprep.subr.mxu0 0.0
    %595 = vmatpush2.xpose.msra.mxu0 0.0
    %596 = vmatprep.subr.mxu0 0.0
    %597 = vmatpush2.xpose.msra.mxu0 0.0
    %598 = vmatprep.subr.mxu0 0.0
    %599 = vmatpush2.xpose.msra.mxu0 0.0
    %600 = vmatprep.subr.mxu0 0.0
    %601 = vmatpush2.xpose.msra.mxu0 0.0
    %602 = vmatprep.subr.mxu0 0.0
    %603 = vmatpush2.xpose.msra.mxu0 0.0
    %604 = vmatprep.subr.mxu0 0.0
    %605 = vmatpush2.xpose.msra.mxu0 0.0
    %606 = vmatprep.subr.mxu0 0.0
    %607 = vmatpush2.xpose.msra.mxu0 0.0
    %608 = vmatprep.subr.mxu0 0.0
    %609 = vmatpush2.xpose.msra.mxu0 0.0
    %610 = vmatprep.subr.mxu0 0.0
    %611 = vmatpush2.xpose.msra.mxu0 0.0
    %612 = vmatprep.subr.mxu0 0.0
    %613 = vmatpush2.xpose.msra.mxu0 0.0
    %614 = vmatprep.subr.mxu0 0.0
    %615 = vmatpush2.xpose.msra.mxu0 0.0
    %616 = vmatprep.subr.mxu0 0.0
    %617 = vmatpush2.xpose.msra.mxu0 0.0
    %618 = vmatprep.subr.mxu0 0.0
    %619 = vmatpush2.xpose.msra.mxu0 0.0
    %620 = vmatprep.mubr.f32.mxu0 0.0
    %621 = vmatmul.mubr.f32.gmra.mxu0 %v551
    %v622 = vpop.f32.mrf.mxu0
    %v623 = vadd.f32 0.0, %v622
    %v624 = vpop.f32.mrf.mxu0
    %625 = vdwg.mxu0
    %v626 = vsel %vm155, 1, 0
    %v627 = vsel %vm156, 1, 0
    %v628 = vlaneseq
    %v629 = vshrl.u32 %v628, 7
    %v630 = vsub.s32 0, %v629
    %v631 = vrot.slane %v626, %v630
    %v632 = vlaneseq
    %v633 = vshrl.u32 %v632, 7
    %v634 = vsub.s32 0, %v633
    %v635 = vrot.slane %v627, %v634
    %vm636 = vcmp.eq.s32.totalorder %v631, 1
    %vm637 = vcmp.eq.s32.totalorder %v635, 1
    %v638 = vsel %vm636, %v547, -1e+09
    %v639 = vsel %vm637, %v623, -1e+09
    %v640 = vsel %vm473, %v638, -inf
    %641 = vmax.xlane.f32.xlu0 %v640
    %v642 = vpop.xlane.xlu0 %641
    %v643 = vsel %vm473, %v639, -inf
    %644 = vmax.xlane.f32.xlu0 %v643
    %v645 = vpop.xlane.xlu0 %644
    %v646 = vsub.f32 %v638, %v642
    %v647 = vsub.f32 %v639, %v645
    %v648 = vmul.f32 %v646, 1.442695
    %v649 = vpow.pop %v648
    %v650 = vmul.f32 %v647, 1.442695
    %v651 = vpow.pop %v650
    %v652 = vsel %vm473, %v649, 0.0
    %653 = vadd.xlane.f32.xlu0 %v652
    %v654 = vpop.xlane.xlu0 %653
    %v655 = vsel %vm473, %v651, 0.0
    %656 = vadd.xlane.f32.xlu0 %v655
    %v657 = vpop.xlane.xlu0 %656
    %v658 = vrcp.pop %v654
    %v659 = vrcp.pop %v657
    %v660 = vmul.f32 %v649, %v658
    %v661 = vmul.f32 %v651, %v659
    %v663 = vsel %vm473, %v660, 0
    %665 = vmatprep.subr.mxu0 0.0
    %666 = vmatpush1.msra.mxu0 0.0
    %667 = vmatprep.subr.mxu0 0.0
    %668 = vmatpush1.msra.mxu0 0.0
    %669 = vmatprep.subr.mxu0 0.0
    %670 = vmatpush1.msra.mxu0 0.0
    %671 = vmatprep.subr.mxu0 0.0
    %672 = vmatpush1.msra.mxu0 0.0
    %673 = vmatprep.subr.mxu0 0.0
    %674 = vmatpush1.msra.mxu0 0.0
    %675 = vmatprep.subr.mxu0 0.0
    %676 = vmatpush1.msra.mxu0 0.0
    %677 = vmatprep.subr.mxu0 0.0
    %678 = vmatpush1.msra.mxu0 0.0
    %679 = vmatprep.subr.mxu0 0.0
    %680 = vmatpush1.msra.mxu0 0.0
    %681 = vmatprep.subr.mxu0 0.0
    %682 = vmatpush1.msra.mxu0 0.0
    %683 = vmatprep.subr.mxu0 0.0
    %684 = vmatpush1.msra.mxu0 0.0
    %685 = vmatprep.subr.mxu0 0.0
    %686 = vmatpush1.msra.mxu0 0.0
    %687 = vmatprep.subr.mxu0 0.0
    %688 = vmatpush1.msra.mxu0 0.0
    %689 = vmatprep.subr.mxu0 0.0
    %690 = vmatpush1.msra.mxu0 0.0
    %691 = vmatprep.subr.mxu0 0.0
    %692 = vmatpush1.msra.mxu0 0.0
    %693 = vmatprep.subr.mxu0 0.0
    %694 = vmatpush1.msra.mxu0 0.0
    %695 = vmatprep.subr.mxu0 0.0
    %696 = vmatpush1.msra.mxu0 %v465
    %697 = vmatprep.subr.mxu0 0.0
    %698 = vmatpush2.msra.mxu0 0.0
    %699 = vmatprep.subr.mxu0 0.0
    %700 = vmatpush2.msra.mxu0 0.0
    %701 = vmatprep.subr.mxu0 0.0
    %702 = vmatpush2.msra.mxu0 0.0
    %703 = vmatprep.subr.mxu0 0.0
    %704 = vmatpush2.msra.mxu0 0.0
    %705 = vmatprep.subr.mxu0 0.0
    %706 = vmatpush2.msra.mxu0 0.0
    %707 = vmatprep.subr.mxu0 0.0
    %708 = vmatpush2.msra.mxu0 0.0
    %709 = vmatprep.subr.mxu0 0.0
    %710 = vmatpush2.msra.mxu0 0.0
    %711 = vmatprep.subr.mxu0 0.0
    %712 = vmatpush2.msra.mxu0 0.0
    %713 = vmatprep.subr.mxu0 0.0
    %714 = vmatpush2.msra.mxu0 0.0
    %715 = vmatprep.subr.mxu0 0.0
    %716 = vmatpush2.msra.mxu0 0.0
    %717 = vmatprep.subr.mxu0 0.0
    %718 = vmatpush2.msra.mxu0 0.0
    %719 = vmatprep.subr.mxu0 0.0
    %720 = vmatpush2.msra.mxu0 0.0
    %721 = vmatprep.subr.mxu0 0.0
    %722 = vmatpush2.msra.mxu0 0.0
    %723 = vmatprep.subr.mxu0 0.0
    %724 = vmatpush2.msra.mxu0 0.0
    %725 = vmatprep.subr.mxu0 0.0
    %726 = vmatpush2.msra.mxu0 0.0
    %727 = vmatprep.subr.mxu0 0.0
    %728 = vmatpush2.msra.mxu0 0.0
    %729 = vmatprep.mubr.f32.mxu0 0.0
    %730 = vmatmul.mubr.f32.gmra.mxu0 %v663
    %v731 = vpop.f32.mrf.mxu0
    %v732 = vadd.f32 0.0, %v731
    %v733 = vpop.f32.mrf.mxu0
    %734 = vdwg.mxu0
    %v736 = vsel %vm473, %v661, 0
    %738 = vmatprep.subr.mxu0 0.0
    %739 = vmatpush1.msra.mxu0 0.0
    %740 = vmatprep.subr.mxu0 0.0
    %741 = vmatpush1.msra.mxu0 0.0
    %742 = vmatprep.subr.mxu0 0.0
    %743 = vmatpush1.msra.mxu0 0.0
    %744 = vmatprep.subr.mxu0 0.0
    %745 = vmatpush1.msra.mxu0 0.0
    %746 = vmatprep.subr.mxu0 0.0
    %747 = vmatpush1.msra.mxu0 0.0
    %748 = vmatprep.subr.mxu0 0.0
    %749 = vmatpush1.msra.mxu0 0.0
    %750 = vmatprep.subr.mxu0 0.0
    %751 = vmatpush1.msra.mxu0 0.0
    %752 = vmatprep.subr.mxu0 0.0
    %753 = vmatpush1.msra.mxu0 0.0
    %754 = vmatprep.subr.mxu0 0.0
    %755 = vmatpush1.msra.mxu0 0.0
    %756 = vmatprep.subr.mxu0 0.0
    %757 = vmatpush1.msra.mxu0 0.0
    %758 = vmatprep.subr.mxu0 0.0
    %759 = vmatpush1.msra.mxu0 0.0
    %760 = vmatprep.subr.mxu0 0.0
    %761 = vmatpush1.msra.mxu0 0.0
    %762 = vmatprep.subr.mxu0 0.0
    %763 = vmatpush1.msra.mxu0 0.0
    %764 = vmatprep.subr.mxu0 0.0
    %765 = vmatpush1.msra.mxu0 0.0
    %766 = vmatprep.subr.mxu0 0.0
    %767 = vmatpush1.msra.mxu0 0.0
    %768 = vmatprep.subr.mxu0 0.0
    %769 = vmatpush1.msra.mxu0 %v470
    %770 = vmatprep.subr.mxu0 0.0
    %771 = vmatpush2.msra.mxu0 0.0
    %772 = vmatprep.subr.mxu0 0.0
    %773 = vmatpush2.msra.mxu0 0.0
    %774 = vmatprep.subr.mxu0 0.0
    %775 = vmatpush2.msra.mxu0 0.0
    %776 = vmatprep.subr.mxu0 0.0
    %777 = vmatpush2.msra.mxu0 0.0
    %778 = vmatprep.subr.mxu0 0.0
    %779 = vmatpush2.msra.mxu0 0.0
    %780 = vmatprep.subr.mxu0 0.0
    %781 = vmatpush2.msra.mxu0 0.0
    %782 = vmatprep.subr.mxu0 0.0
    %783 = vmatpush2.msra.mxu0 0.0
    %784 = vmatprep.subr.mxu0 0.0
    %785 = vmatpush2.msra.mxu0 0.0
    %786 = vmatprep.subr.mxu0 0.0
    %787 = vmatpush2.msra.mxu0 0.0
    %788 = vmatprep.subr.mxu0 0.0
    %789 = vmatpush2.msra.mxu0 0.0
    %790 = vmatprep.subr.mxu0 0.0
    %791 = vmatpush2.msra.mxu0 0.0
    %792 = vmatprep.subr.mxu0 0.0
    %793 = vmatpush2.msra.mxu0 0.0
    %794 = vmatprep.subr.mxu0 0.0
    %795 = vmatpush2.msra.mxu0 0.0
    %796 = vmatprep.subr.mxu0 0.0
    %797 = vmatpush2.msra.mxu0 0.0
    %798 = vmatprep.subr.mxu0 0.0
    %799 = vmatpush2.msra.mxu0 0.0
    %800 = vmatprep.subr.mxu0 0.0
    %801 = vmatpush2.msra.mxu0 0.0
    %802 = vmatprep.mubr.f32.mxu0 0.0
    %803 = vmatmul.mubr.f32.gmra.mxu0 %v736
    %v804 = vpop.f32.mrf.mxu0
    %v805 = vadd.f32 0.0, %v804
    %v806 = vpop.f32.mrf.mxu0
    %807 = vdwg.mxu0
    %808 = vrot.lane.b32.xlu0 %v293, 120
    %v809 = vpop.permute.xlu0 %808
    %810 = vrot.lane.b32.xlu0 %v379, 120
    %v811 = vpop.permute.xlu0 %810
    %v812 = vsel %vm473, %v809, 0
    %v814 = vsel %vm473, %v811, 0
    %816 = vmatprep.subr.mxu0 0.0
    %817 = vmatpush1.xpose.msra.mxu0 0.0
    %818 = vmatprep.subr.mxu0 0.0
    %819 = vmatpush1.xpose.msra.mxu0 0.0
    %820 = vmatprep.subr.mxu0 0.0
    %821 = vmatpush1.xpose.msra.mxu0 0.0
    %822 = vmatprep.subr.mxu0 0.0
    %823 = vmatpush1.xpose.msra.mxu0 0.0
    %824 = vmatprep.subr.mxu0 0.0
    %825 = vmatpush1.xpose.msra.mxu0 0.0
    %826 = vmatprep.subr.mxu0 0.0
    %827 = vmatpush1.xpose.msra.mxu0 0.0
    %828 = vmatprep.subr.mxu0 0.0
    %829 = vmatpush1.xpose.msra.mxu0 0.0
    %830 = vmatprep.subr.mxu0 0.0
    %831 = vmatpush1.xpose.msra.mxu0 0.0
    %832 = vmatprep.subr.mxu0 0.0
    %833 = vmatpush1.xpose.msra.mxu0 0.0
    %834 = vmatprep.subr.mxu0 0.0
    %835 = vmatpush1.xpose.msra.mxu0 0.0
    %836 = vmatprep.subr.mxu0 0.0
    %837 = vmatpush1.xpose.msra.mxu0 0.0
    %838 = vmatprep.subr.mxu0 0.0
    %839 = vmatpush1.xpose.msra.mxu0 0.0
    %840 = vmatprep.subr.mxu0 0.0
    %841 = vmatpush1.xpose.msra.mxu0 0.0
    %842 = vmatprep.subr.mxu0 0.0
    %843 = vmatpush1.xpose.msra.mxu0 0.0
    %844 = vmatprep.subr.mxu0 0.0
    %845 = vmatpush1.xpose.msra.mxu0 0.0
    %846 = vmatprep.subr.mxu0 0.0
    %847 = vmatpush1.xpose.msra.mxu0 %v814
    %848 = vmatprep.subr.mxu0 0.0
    %849 = vmatpush2.xpose.msra.mxu0 0.0
    %850 = vmatprep.subr.mxu0 0.0
    %851 = vmatpush2.xpose.msra.mxu0 0.0
    %852 = vmatprep.subr.mxu0 0.0
    %853 = vmatpush2.xpose.msra.mxu0 0.0
    %854 = vmatprep.subr.mxu0 0.0
    %855 = vmatpush2.xpose.msra.mxu0 0.0
    %856 = vmatprep.subr.mxu0 0.0
    %857 = vmatpush2.xpose.msra.mxu0 0.0
    %858 = vmatprep.subr.mxu0 0.0
    %859 = vmatpush2.xpose.msra.mxu0 0.0
    %860 = vmatprep.subr.mxu0 0.0
    %861 = vmatpush2.xpose.msra.mxu0 0.0
    %862 = vmatprep.subr.mxu0 0.0
    %863 = vmatpush2.xpose.msra.mxu0 0.0
    %864 = vmatprep.subr.mxu0 0.0
    %865 = vmatpush2.xpose.msra.mxu0 0.0
    %866 = vmatprep.subr.mxu0 0.0
    %867 = vmatpush2.xpose.msra.mxu0 0.0
    %868 = vmatprep.subr.mxu0 0.0
    %869 = vmatpush2.xpose.msra.mxu0 0.0
    %870 = vmatprep.subr.mxu0 0.0
    %871 = vmatpush2.xpose.msra.mxu0 0.0
    %872 = vmatprep.subr.mxu0 0.0
    %873 = vmatpush2.xpose.msra.mxu0 0.0
    %874 = vmatprep.subr.mxu0 0.0
    %875 = vmatpush2.xpose.msra.mxu0 0.0
    %876 = vmatprep.subr.mxu0 0.0
    %877 = vmatpush2.xpose.msra.mxu0 0.0
    %878 = vmatprep.subr.mxu0 0.0
    %879 = vmatpush2.xpose.msra.mxu0 0.0
    %880 = vmatprep.mubr.f32.mxu0 0.0
    %881 = vmatmul.mubr.f32.gmra.mxu0 %v812
    %v882 = vpop.f32.mrf.mxu0
    %v883 = vadd.f32 0.0, %v882
    %v884 = vpop.f32.mrf.mxu0
    %885 = vdwg.mxu0
    %886 = vrot.lane.b32.xlu0 %v298, 120
    %v887 = vpop.permute.xlu0 %886
    %888 = vrot.lane.b32.xlu0 %v384, 120
    %v889 = vpop.permute.xlu0 %888
    %v890 = vsel %vm473, %v887, 0
    %v892 = vsel %vm473, %v889, 0
    %894 = vmatprep.subr.mxu0 0.0
    %895 = vmatpush1.xpose.msra.mxu0 0.0
    %896 = vmatprep.subr.mxu0 0.0
    %897 = vmatpush1.xpose.msra.mxu0 0.0
    %898 = vmatprep.subr.mxu0 0.0
    %899 = vmatpush1.xpose.msra.mxu0 0.0
    %900 = vmatprep.subr.mxu0 0.0
    %901 = vmatpush1.xpose.msra.mxu0 0.0
    %902 = vmatprep.subr.mxu0 0.0
    %903 = vmatpush1.xpose.msra.mxu0 0.0
    %904 = vmatprep.subr.mxu0 0.0
    %905 = vmatpush1.xpose.msra.mxu0 0.0
    %906 = vmatprep.subr.mxu0 0.0
    %907 = vmatpush1.xpose.msra.mxu0 0.0
    %908 = vmatprep.subr.mxu0 0.0
    %909 = vmatpush1.xpose.msra.mxu0 0.0
    %910 = vmatprep.subr.mxu0 0.0
    %911 = vmatpush1.xpose.msra.mxu0 0.0
    %912 = vmatprep.subr.mxu0 0.0
    %913 = vmatpush1.xpose.msra.mxu0 0.0
    %914 = vmatprep.subr.mxu0 0.0
    %915 = vmatpush1.xpose.msra.mxu0 0.0
    %916 = vmatprep.subr.mxu0 0.0
    %917 = vmatpush1.xpose.msra.mxu0 0.0
    %918 = vmatprep.subr.mxu0 0.0
    %919 = vmatpush1.xpose.msra.mxu0 0.0
    %920 = vmatprep.subr.mxu0 0.0
    %921 = vmatpush1.xpose.msra.mxu0 0.0
    %922 = vmatprep.subr.mxu0 0.0
    %923 = vmatpush1.xpose.msra.mxu0 0.0
    %924 = vmatprep.subr.mxu0 0.0
    %925 = vmatpush1.xpose.msra.mxu0 %v892
    %926 = vmatprep.subr.mxu0 0.0
    %927 = vmatpush2.xpose.msra.mxu0 0.0
    %928 = vmatprep.subr.mxu0 0.0
    %929 = vmatpush2.xpose.msra.mxu0 0.0
    %930 = vmatprep.subr.mxu0 0.0
    %931 = vmatpush2.xpose.msra.mxu0 0.0
    %932 = vmatprep.subr.mxu0 0.0
    %933 = vmatpush2.xpose.msra.mxu0 0.0
    %934 = vmatprep.subr.mxu0 0.0
    %935 = vmatpush2.xpose.msra.mxu0 0.0
    %936 = vmatprep.subr.mxu0 0.0
    %937 = vmatpush2.xpose.msra.mxu0 0.0
    %938 = vmatprep.subr.mxu0 0.0
    %939 = vmatpush2.xpose.msra.mxu0 0.0
    %940 = vmatprep.subr.mxu0 0.0
    %941 = vmatpush2.xpose.msra.mxu0 0.0
    %942 = vmatprep.subr.mxu0 0.0
    %943 = vmatpush2.xpose.msra.mxu0 0.0
    %944 = vmatprep.subr.mxu0 0.0
    %945 = vmatpush2.xpose.msra.mxu0 0.0
    %946 = vmatprep.subr.mxu0 0.0
    %947 = vmatpush2.xpose.msra.mxu0 0.0
    %948 = vmatprep.subr.mxu0 0.0
    %949 = vmatpush2.xpose.msra.mxu0 0.0
    %950 = vmatprep.subr.mxu0 0.0
    %951 = vmatpush2.xpose.msra.mxu0 0.0
    %952 = vmatprep.subr.mxu0 0.0
    %953 = vmatpush2.xpose.msra.mxu0 0.0
    %954 = vmatprep.subr.mxu0 0.0
    %955 = vmatpush2.xpose.msra.mxu0 0.0
    %956 = vmatprep.subr.mxu0 0.0
    %957 = vmatpush2.xpose.msra.mxu0 0.0
    %958 = vmatprep.mubr.f32.mxu0 0.0
    %959 = vmatmul.mubr.f32.gmra.mxu0 %v890
    %v960 = vpop.f32.mrf.mxu0
    %v961 = vadd.f32 0.0, %v960
    %v962 = vpop.f32.mrf.mxu0
    %963 = vdwg.mxu0
    %v964 = vsel %vm636, %v883, -1e+09
    %v965 = vsel %vm637, %v961, -1e+09
    %v966 = vsel %vm473, %v964, -inf
    %967 = vmax.xlane.f32.xlu0 %v966
    %v968 = vpop.xlane.xlu0 %967
    %v969 = vsel %vm473, %v965, -inf
    %970 = vmax.xlane.f32.xlu0 %v969
    %v971 = vpop.xlane.xlu0 %970
    %v972 = vsub.f32 %v964, %v968
    %v973 = vsub.f32 %v965, %v971
    %v974 = vmul.f32 %v972, 1.442695
    %v975 = vpow.pop %v974
    %v976 = vmul.f32 %v973, 1.442695
    %v977 = vpow.pop %v976
    %v978 = vsel %vm473, %v975, 0.0
    %979 = vadd.xlane.f32.xlu0 %v978
    %v980 = vpop.xlane.xlu0 %979
    %v981 = vsel %vm473, %v977, 0.0
    %982 = vadd.xlane.f32.xlu0 %v981
    %v983 = vpop.xlane.xlu0 %982
    %v984 = vrcp.pop %v980
    %v985 = vrcp.pop %v983
    %v986 = vmul.f32 %v975, %v984
    %v987 = vmul.f32 %v977, %v985
    %989 = vrot.lane.b32.xlu0 %v465, 120
    %v990 = vpop.permute.xlu0 %989
    %v993 = vsel %vm473, %v986, 0
    %995 = vmatprep.subr.mxu0 0.0
    %996 = vmatpush1.msra.mxu0 0.0
    %997 = vmatprep.subr.mxu0 0.0
    %998 = vmatpush1.msra.mxu0 0.0
    %999 = vmatprep.subr.mxu0 0.0
    %1000 = vmatpush1.msra.mxu0 0.0
    %1001 = vmatprep.subr.mxu0 0.0
    %1002 = vmatpush1.msra.mxu0 0.0
    %1003 = vmatprep.subr.mxu0 0.0
    %1004 = vmatpush1.msra.mxu0 0.0
    %1005 = vmatprep.subr.mxu0 0.0
    %1006 = vmatpush1.msra.mxu0 0.0
    %1007 = vmatprep.subr.mxu0 0.0
    %1008 = vmatpush1.msra.mxu0 0.0
    %1009 = vmatprep.subr.mxu0 0.0
    %1010 = vmatpush1.msra.mxu0 0.0
    %1011 = vmatprep.subr.mxu0 0.0
    %1012 = vmatpush1.msra.mxu0 0.0
    %1013 = vmatprep.subr.mxu0 0.0
    %1014 = vmatpush1.msra.mxu0 0.0
    %1015 = vmatprep.subr.mxu0 0.0
    %1016 = vmatpush1.msra.mxu0 0.0
    %1017 = vmatprep.subr.mxu0 0.0
    %1018 = vmatpush1.msra.mxu0 0.0
    %1019 = vmatprep.subr.mxu0 0.0
    %1020 = vmatpush1.msra.mxu0 0.0
    %1021 = vmatprep.subr.mxu0 0.0
    %1022 = vmatpush1.msra.mxu0 0.0
    %1023 = vmatprep.subr.mxu0 0.0
    %1024 = vmatpush1.msra.mxu0 0.0
    %1025 = vmatprep.subr.mxu0 0.0
    %1026 = vmatpush1.msra.mxu0 %v990
    %1027 = vmatprep.subr.mxu0 0.0
    %1028 = vmatpush2.msra.mxu0 0.0
    %1029 = vmatprep.subr.mxu0 0.0
    %1030 = vmatpush2.msra.mxu0 0.0
    %1031 = vmatprep.subr.mxu0 0.0
    %1032 = vmatpush2.msra.mxu0 0.0
    %1033 = vmatprep.subr.mxu0 0.0
    %1034 = vmatpush2.msra.mxu0 0.0
    %1035 = vmatprep.subr.mxu0 0.0
    %1036 = vmatpush2.msra.mxu0 0.0
    %1037 = vmatprep.subr.mxu0 0.0
    %1038 = vmatpush2.msra.mxu0 0.0
    %1039 = vmatprep.subr.mxu0 0.0
    %1040 = vmatpush2.msra.mxu0 0.0
    %1041 = vmatprep.subr.mxu0 0.0
    %1042 = vmatpush2.msra.mxu0 0.0
    %1043 = vmatprep.subr.mxu0 0.0
    %1044 = vmatpush2.msra.mxu0 0.0
    %1045 = vmatprep.subr.mxu0 0.0
    %1046 = vmatpush2.msra.mxu0 0.0
    %1047 = vmatprep.subr.mxu0 0.0
    %1048 = vmatpush2.msra.mxu0 0.0
    %1049 = vmatprep.subr.mxu0 0.0
    %1050 = vmatpush2.msra.mxu0 0.0
    %1051 = vmatprep.subr.mxu0 0.0
    %1052 = vmatpush2.msra.mxu0 0.0
    %1053 = vmatprep.subr.mxu0 0.0
    %1054 = vmatpush2.msra.mxu0 0.0
    %1055 = vmatprep.subr.mxu0 0.0
    %1056 = vmatpush2.msra.mxu0 0.0
    %1057 = vmatprep.subr.mxu0 0.0
    %1058 = vmatpush2.msra.mxu0 0.0
    %1059 = vmatprep.mubr.f32.mxu0 0.0
    %1060 = vmatmul.mubr.f32.gmra.mxu0 %v993
    %v1061 = vpop.f32.mrf.mxu0
    %v1062 = vadd.f32 0.0, %v1061
    %v1063 = vpop.f32.mrf.mxu0
    %1064 = vdwg.mxu0
    %1066 = vrot.lane.b32.xlu0 %v470, 120
    %v1067 = vpop.permute.xlu0 %1066
    %v1070 = vsel %vm473, %v987, 0
    %1072 = vmatprep.subr.mxu0 0.0
    %1073 = vmatpush1.msra.mxu0 0.0
    %1074 = vmatprep.subr.mxu0 0.0
    %1075 = vmatpush1.msra.mxu0 0.0
    %1076 = vmatprep.subr.mxu0 0.0
    %1077 = vmatpush1.msra.mxu0 0.0
    %1078 = vmatprep.subr.mxu0 0.0
    %1079 = vmatpush1.msra.mxu0 0.0
    %1080 = vmatprep.subr.mxu0 0.0
    %1081 = vmatpush1.msra.mxu0 0.0
    %1082 = vmatprep.subr.mxu0 0.0
    %1083 = vmatpush1.msra.mxu0 0.0
    %1084 = vmatprep.subr.mxu0 0.0
    %1085 = vmatpush1.msra.mxu0 0.0
    %1086 = vmatprep.subr.mxu0 0.0
    %1087 = vmatpush1.msra.mxu0 0.0
    %1088 = vmatprep.subr.mxu0 0.0
    %1089 = vmatpush1.msra.mxu0 0.0
    %1090 = vmatprep.subr.mxu0 0.0
    %1091 = vmatpush1.msra.mxu0 0.0
    %1092 = vmatprep.subr.mxu0 0.0
    %1093 = vmatpush1.msra.mxu0 0.0
    %1094 = vmatprep.subr.mxu0 0.0
    %1095 = vmatpush1.msra.mxu0 0.0
    %1096 = vmatprep.subr.mxu0 0.0
    %1097 = vmatpush1.msra.mxu0 0.0
    %1098 = vmatprep.subr.mxu0 0.0
    %1099 = vmatpush1.msra.mxu0 0.0
    %1100 = vmatprep.subr.mxu0 0.0
    %1101 = vmatpush1.msra.mxu0 0.0
    %1102 = vmatprep.subr.mxu0 0.0
    %1103 = vmatpush1.msra.mxu0 %v1067
    %1104 = vmatprep.subr.mxu0 0.0
    %1105 = vmatpush2.msra.mxu0 0.0
    %1106 = vmatprep.subr.mxu0 0.0
    %1107 = vmatpush2.msra.mxu0 0.0
    %1108 = vmatprep.subr.mxu0 0.0
    %1109 = vmatpush2.msra.mxu0 0.0
    %1110 = vmatprep.subr.mxu0 0.0
    %1111 = vmatpush2.msra.mxu0 0.0
    %1112 = vmatprep.subr.mxu0 0.0
    %1113 = vmatpush2.msra.mxu0 0.0
    %1114 = vmatprep.subr.mxu0 0.0
    %1115 = vmatpush2.msra.mxu0 0.0
    %1116 = vmatprep.subr.mxu0 0.0
    %1117 = vmatpush2.msra.mxu0 0.0
    %1118 = vmatprep.subr.mxu0 0.0
    %1119 = vmatpush2.msra.mxu0 0.0
    %1120 = vmatprep.subr.mxu0 0.0
    %1121 = vmatpush2.msra.mxu0 0.0
    %1122 = vmatprep.subr.mxu0 0.0
    %1123 = vmatpush2.msra.mxu0 0.0
    %1124 = vmatprep.subr.mxu0 0.0
    %1125 = vmatpush2.msra.mxu0 0.0
    %1126 = vmatprep.subr.mxu0 0.0
    %1127 = vmatpush2.msra.mxu0 0.0
    %1128 = vmatprep.subr.mxu0 0.0
    %1129 = vmatpush2.msra.mxu0 0.0
    %1130 = vmatprep.subr.mxu0 0.0
    %1131 = vmatpush2.msra.mxu0 0.0
    %1132 = vmatprep.subr.mxu0 0.0
    %1133 = vmatpush2.msra.mxu0 0.0
    %1134 = vmatprep.subr.mxu0 0.0
    %1135 = vmatpush2.msra.mxu0 0.0
    %1136 = vmatprep.mubr.f32.mxu0 0.0
    %1137 = vmatmul.mubr.f32.gmra.mxu0 %v1070
    %v1138 = vpop.f32.mrf.mxu0
    %v1139 = vadd.f32 0.0, %v1138
    %v1140 = vpop.f32.mrf.mxu0
    %1141 = vdwg.mxu0
    %1142 = vrot.lane.b32.xlu0 %v293, 112
    %v1143 = vpop.permute.xlu0 %1142
    %1144 = vrot.lane.b32.xlu0 %v379, 112
    %v1145 = vpop.permute.xlu0 %1144
    %v1146 = vsel %vm473, %v1143, 0
    %v1148 = vsel %vm473, %v1145, 0
    %1150 = vmatprep.subr.mxu0 0.0
    %1151 = vmatpush1.xpose.msra.mxu0 0.0
    %1152 = vmatprep.subr.mxu0 0.0
    %1153 = vmatpush1.xpose.msra.mxu0 0.0
    %1154 = vmatprep.subr.mxu0 0.0
    %1155 = vmatpush1.xpose.msra.mxu0 0.0
    %1156 = vmatprep.subr.mxu0 0.0
    %1157 = vmatpush1.xpose.msra.mxu0 0.0
    %1158 = vmatprep.subr.mxu0 0.0
    %1159 = vmatpush1.xpose.msra.mxu0 0.0
    %1160 = vmatprep.subr.mxu0 0.0
    %1161 = vmatpush1.xpose.msra.mxu0 0.0
    %1162 = vmatprep.subr.mxu0 0.0
    %1163 = vmatpush1.xpose.msra.mxu0 0.0
    %1164 = vmatprep.subr.mxu0 0.0
    %1165 = vmatpush1.xpose.msra.mxu0 0.0
    %1166 = vmatprep.subr.mxu0 0.0
    %1167 = vmatpush1.xpose.msra.mxu0 0.0
    %1168 = vmatprep.subr.mxu0 0.0
    %1169 = vmatpush1.xpose.msra.mxu0 0.0
    %1170 = vmatprep.subr.mxu0 0.0
    %1171 = vmatpush1.xpose.msra.mxu0 0.0
    %1172 = vmatprep.subr.mxu0 0.0
    %1173 = vmatpush1.xpose.msra.mxu0 0.0
    %1174 = vmatprep.subr.mxu0 0.0
    %1175 = vmatpush1.xpose.msra.mxu0 0.0
    %1176 = vmatprep.subr.mxu0 0.0
    %1177 = vmatpush1.xpose.msra.mxu0 0.0
    %1178 = vmatprep.subr.mxu0 0.0
    %1179 = vmatpush1.xpose.msra.mxu0 0.0
    %1180 = vmatprep.subr.mxu0 0.0
    %1181 = vmatpush1.xpose.msra.mxu0 %v1148
    %1182 = vmatprep.subr.mxu0 0.0
    %1183 = vmatpush2.xpose.msra.mxu0 0.0
    %1184 = vmatprep.subr.mxu0 0.0
    %1185 = vmatpush2.xpose.msra.mxu0 0.0
    %1186 = vmatprep.subr.mxu0 0.0
    %1187 = vmatpush2.xpose.msra.mxu0 0.0
    %1188 = vmatprep.subr.mxu0 0.0
    %1189 = vmatpush2.xpose.msra.mxu0 0.0
    %1190 = vmatprep.subr.mxu0 0.0
    %1191 = vmatpush2.xpose.msra.mxu0 0.0
    %1192 = vmatprep.subr.mxu0 0.0
    %1193 = vmatpush2.xpose.msra.mxu0 0.0
    %1194 = vmatprep.subr.mxu0 0.0
    %1195 = vmatpush2.xpose.msra.mxu0 0.0
    %1196 = vmatprep.subr.mxu0 0.0
    %1197 = vmatpush2.xpose.msra.mxu0 0.0
    %1198 = vmatprep.subr.mxu0 0.0
    %1199 = vmatpush2.xpose.msra.mxu0 0.0
    %1200 = vmatprep.subr.mxu0 0.0
    %1201 = vmatpush2.xpose.msra.mxu0 0.0
    %1202 = vmatprep.subr.mxu0 0.0
    %1203 = vmatpush2.xpose.msra.mxu0 0.0
    %1204 = vmatprep.subr.mxu0 0.0
    %1205 = vmatpush2.xpose.msra.mxu0 0.0
    %1206 = vmatprep.subr.mxu0 0.0
    %1207 = vmatpush2.xpose.msra.mxu0 0.0
    %1208 = vmatprep.subr.mxu0 0.0
    %1209 = vmatpush2.xpose.msra.mxu0 0.0
    %1210 = vmatprep.subr.mxu0 0.0
    %1211 = vmatpush2.xpose.msra.mxu0 0.0
    %1212 = vmatprep.subr.mxu0 0.0
    %1213 = vmatpush2.xpose.msra.mxu0 0.0
    %1214 = vmatprep.mubr.f32.mxu0 0.0
    %1215 = vmatmul.mubr.f32.gmra.mxu0 %v1146
    %v1216 = vpop.f32.mrf.mxu0
    %v1217 = vadd.f32 0.0, %v1216
    %v1218 = vpop.f32.mrf.mxu0
    %1219 = vdwg.mxu0
    %1220 = vrot.lane.b32.xlu0 %v298, 112
    %v1221 = vpop.permute.xlu0 %1220
    %1222 = vrot.lane.b32.xlu0 %v384, 112
    %v1223 = vpop.permute.xlu0 %1222
    %v1224 = vsel %vm473, %v1221, 0
    %v1226 = vsel %vm473, %v1223, 0
    %1228 = vmatprep.subr.mxu0 0.0
    %1229 = vmatpush1.xpose.msra.mxu0 0.0
    %1230 = vmatprep.subr.mxu0 0.0
    %1231 = vmatpush1.xpose.msra.mxu0 0.0
    %1232 = vmatprep.subr.mxu0 0.0
    %1233 = vmatpush1.xpose.msra.mxu0 0.0
    %1234 = vmatprep.subr.mxu0 0.0
    %1235 = vmatpush1.xpose.msra.mxu0 0.0
    %1236 = vmatprep.subr.mxu0 0.0
    %1237 = vmatpush1.xpose.msra.mxu0 0.0
    %1238 = vmatprep.subr.mxu0 0.0
    %1239 = vmatpush1.xpose.msra.mxu0 0.0
    %1240 = vmatprep.subr.mxu0 0.0
    %1241 = vmatpush1.xpose.msra.mxu0 0.0
    %1242 = vmatprep.subr.mxu0 0.0
    %1243 = vmatpush1.xpose.msra.mxu0 0.0
    %1244 = vmatprep.subr.mxu0 0.0
    %1245 = vmatpush1.xpose.msra.mxu0 0.0
    %1246 = vmatprep.subr.mxu0 0.0
    %1247 = vmatpush1.xpose.msra.mxu0 0.0
    %1248 = vmatprep.subr.mxu0 0.0
    %1249 = vmatpush1.xpose.msra.mxu0 0.0
    %1250 = vmatprep.subr.mxu0 0.0
    %1251 = vmatpush1.xpose.msra.mxu0 0.0
    %1252 = vmatprep.subr.mxu0 0.0
    %1253 = vmatpush1.xpose.msra.mxu0 0.0
    %1254 = vmatprep.subr.mxu0 0.0
    %1255 = vmatpush1.xpose.msra.mxu0 0.0
    %1256 = vmatprep.subr.mxu0 0.0
    %1257 = vmatpush1.xpose.msra.mxu0 0.0
    %1258 = vmatprep.subr.mxu0 0.0
    %1259 = vmatpush1.xpose.msra.mxu0 %v1226
    %1260 = vmatprep.subr.mxu0 0.0
    %1261 = vmatpush2.xpose.msra.mxu0 0.0
    %1262 = vmatprep.subr.mxu0 0.0
    %1263 = vmatpush2.xpose.msra.mxu0 0.0
    %1264 = vmatprep.subr.mxu0 0.0
    %1265 = vmatpush2.xpose.msra.mxu0 0.0
    %1266 = vmatprep.subr.mxu0 0.0
    %1267 = vmatpush2.xpose.msra.mxu0 0.0
    %1268 = vmatprep.subr.mxu0 0.0
    %1269 = vmatpush2.xpose.msra.mxu0 0.0
    %1270 = vmatprep.subr.mxu0 0.0
    %1271 = vmatpush2.xpose.msra.mxu0 0.0
    %1272 = vmatprep.subr.mxu0 0.0
    %1273 = vmatpush2.xpose.msra.mxu0 0.0
    %1274 = vmatprep.subr.mxu0 0.0
    %1275 = vmatpush2.xpose.msra.mxu0 0.0
    %1276 = vmatprep.subr.mxu0 0.0
    %1277 = vmatpush2.xpose.msra.mxu0 0.0
    %1278 = vmatprep.subr.mxu0 0.0
    %1279 = vmatpush2.xpose.msra.mxu0 0.0
    %1280 = vmatprep.subr.mxu0 0.0
    %1281 = vmatpush2.xpose.msra.mxu0 0.0
    %1282 = vmatprep.subr.mxu0 0.0
    %1283 = vmatpush2.xpose.msra.mxu0 0.0
    %1284 = vmatprep.subr.mxu0 0.0
    %1285 = vmatpush2.xpose.msra.mxu0 0.0
    %1286 = vmatprep.subr.mxu0 0.0
    %1287 = vmatpush2.xpose.msra.mxu0 0.0
    %1288 = vmatprep.subr.mxu0 0.0
    %1289 = vmatpush2.xpose.msra.mxu0 0.0
    %1290 = vmatprep.subr.mxu0 0.0
    %1291 = vmatpush2.xpose.msra.mxu0 0.0
    %1292 = vmatprep.mubr.f32.mxu0 0.0
    %1293 = vmatmul.mubr.f32.gmra.mxu0 %v1224
    %v1294 = vpop.f32.mrf.mxu0
    %v1295 = vadd.f32 0.0, %v1294
    %v1296 = vpop.f32.mrf.mxu0
    %1297 = vdwg.mxu0
    %v1298 = vsel %vm636, %v1217, -1e+09
    %v1299 = vsel %vm637, %v1295, -1e+09
    %v1300 = vsel %vm473, %v1298, -inf
    %1301 = vmax.xlane.f32.xlu0 %v1300
    %v1302 = vpop.xlane.xlu0 %1301
    %v1303 = vsel %vm473, %v1299, -inf
    %1304 = vmax.xlane.f32.xlu0 %v1303
    %v1305 = vpop.xlane.xlu0 %1304
    %v1306 = vsub.f32 %v1298, %v1302
    %v1307 = vsub.f32 %v1299, %v1305
    %v1308 = vmul.f32 %v1306, 1.442695
    %v1309 = vpow.pop %v1308
    %v1310 = vmul.f32 %v1307, 1.442695
    %v1311 = vpow.pop %v1310
    %v1312 = vsel %vm473, %v1309, 0.0
    %1313 = vadd.xlane.f32.xlu0 %v1312
    %v1314 = vpop.xlane.xlu0 %1313
    %v1315 = vsel %vm473, %v1311, 0.0
    %1316 = vadd.xlane.f32.xlu0 %v1315
    %v1317 = vpop.xlane.xlu0 %1316
    %v1318 = vrcp.pop %v1314
    %v1319 = vrcp.pop %v1317
    %v1320 = vmul.f32 %v1309, %v1318
    %v1321 = vmul.f32 %v1311, %v1319
    %1322 = vrot.lane.b32.xlu0 %v465, 112
    %v1323 = vpop.permute.xlu0 %1322
    %v1326 = vsel %vm473, %v1320, 0
    %1328 = vmatprep.subr.mxu0 0.0
    %1329 = vmatpush1.msra.mxu0 0.0
    %1330 = vmatprep.subr.mxu0 0.0
    %1331 = vmatpush1.msra.mxu0 0.0
    %1332 = vmatprep.subr.mxu0 0.0
    %1333 = vmatpush1.msra.mxu0 0.0
    %1334 = vmatprep.subr.mxu0 0.0
    %1335 = vmatpush1.msra.mxu0 0.0
    %1336 = vmatprep.subr.mxu0 0.0
    %1337 = vmatpush1.msra.mxu0 0.0
    %1338 = vmatprep.subr.mxu0 0.0
    %1339 = vmatpush1.msra.mxu0 0.0
    %1340 = vmatprep.subr.mxu0 0.0
    %1341 = vmatpush1.msra.mxu0 0.0
    %1342 = vmatprep.subr.mxu0 0.0
    %1343 = vmatpush1.msra.mxu0 0.0
    %1344 = vmatprep.subr.mxu0 0.0
    %1345 = vmatpush1.msra.mxu0 0.0
    %1346 = vmatprep.subr.mxu0 0.0
    %1347 = vmatpush1.msra.mxu0 0.0
    %1348 = vmatprep.subr.mxu0 0.0
    %1349 = vmatpush1.msra.mxu0 0.0
    %1350 = vmatprep.subr.mxu0 0.0
    %1351 = vmatpush1.msra.mxu0 0.0
    %1352 = vmatprep.subr.mxu0 0.0
    %1353 = vmatpush1.msra.mxu0 0.0
    %1354 = vmatprep.subr.mxu0 0.0
    %1355 = vmatpush1.msra.mxu0 0.0
    %1356 = vmatprep.subr.mxu0 0.0
    %1357 = vmatpush1.msra.mxu0 0.0
    %1358 = vmatprep.subr.mxu0 0.0
    %1359 = vmatpush1.msra.mxu0 %v1323
    %1360 = vmatprep.subr.mxu0 0.0
    %1361 = vmatpush2.msra.mxu0 0.0
    %1362 = vmatprep.subr.mxu0 0.0
    %1363 = vmatpush2.msra.mxu0 0.0
    %1364 = vmatprep.subr.mxu0 0.0
    %1365 = vmatpush2.msra.mxu0 0.0
    %1366 = vmatprep.subr.mxu0 0.0
    %1367 = vmatpush2.msra.mxu0 0.0
    %1368 = vmatprep.subr.mxu0 0.0
    %1369 = vmatpush2.msra.mxu0 0.0
    %1370 = vmatprep.subr.mxu0 0.0
    %1371 = vmatpush2.msra.mxu0 0.0
    %1372 = vmatprep.subr.mxu0 0.0
    %1373 = vmatpush2.msra.mxu0 0.0
    %1374 = vmatprep.subr.mxu0 0.0
    %1375 = vmatpush2.msra.mxu0 0.0
    %1376 = vmatprep.subr.mxu0 0.0
    %1377 = vmatpush2.msra.mxu0 0.0
    %1378 = vmatprep.subr.mxu0 0.0
    %1379 = vmatpush2.msra.mxu0 0.0
    %1380 = vmatprep.subr.mxu0 0.0
    %1381 = vmatpush2.msra.mxu0 0.0
    %1382 = vmatprep.subr.mxu0 0.0
    %1383 = vmatpush2.msra.mxu0 0.0
    %1384 = vmatprep.subr.mxu0 0.0
    %1385 = vmatpush2.msra.mxu0 0.0
    %1386 = vmatprep.subr.mxu0 0.0
    %1387 = vmatpush2.msra.mxu0 0.0
    %1388 = vmatprep.subr.mxu0 0.0
    %1389 = vmatpush2.msra.mxu0 0.0
    %1390 = vmatprep.subr.mxu0 0.0
    %1391 = vmatpush2.msra.mxu0 0.0
    %1392 = vmatprep.mubr.f32.mxu0 0.0
    %1393 = vmatmul.mubr.f32.gmra.mxu0 %v1326
    %v1394 = vpop.f32.mrf.mxu0
    %v1395 = vadd.f32 0.0, %v1394
    %v1396 = vpop.f32.mrf.mxu0
    %1397 = vdwg.mxu0
    %1398 = vrot.lane.b32.xlu0 %v470, 112
    %v1399 = vpop.permute.xlu0 %1398
    %v1402 = vsel %vm473, %v1321, 0
    %1404 = vmatprep.subr.mxu0 0.0
    %1405 = vmatpush1.msra.mxu0 0.0
    %1406 = vmatprep.subr.mxu0 0.0
    %1407 = vmatpush1.msra.mxu0 0.0
    %1408 = vmatprep.subr.mxu0 0.0
    %1409 = vmatpush1.msra.mxu0 0.0
    %1410 = vmatprep.subr.mxu0 0.0
    %1411 = vmatpush1.msra.mxu0 0.0
    %1412 = vmatprep.subr.mxu0 0.0
    %1413 = vmatpush1.msra.mxu0 0.0
    %1414 = vmatprep.subr.mxu0 0.0
    %1415 = vmatpush1.msra.mxu0 0.0
    %1416 = vmatprep.subr.mxu0 0.0
    %1417 = vmatpush1.msra.mxu0 0.0
    %1418 = vmatprep.subr.mxu0 0.0
    %1419 = vmatpush1.msra.mxu0 0.0
    %1420 = vmatprep.subr.mxu0 0.0
    %1421 = vmatpush1.msra.mxu0 0.0
    %1422 = vmatprep.subr.mxu0 0.0
    %1423 = vmatpush1.msra.mxu0 0.0
    %1424 = vmatprep.subr.mxu0 0.0
    %1425 = vmatpush1.msra.mxu0 0.0
    %1426 = vmatprep.subr.mxu0 0.0
    %1427 = vmatpush1.msra.mxu0 0.0
    %1428 = vmatprep.subr.mxu0 0.0
    %1429 = vmatpush1.msra.mxu0 0.0
    %1430 = vmatprep.subr.mxu0 0.0
    %1431 = vmatpush1.msra.mxu0 0.0
    %1432 = vmatprep.subr.mxu0 0.0
    %1433 = vmatpush1.msra.mxu0 0.0
    %1434 = vmatprep.subr.mxu0 0.0
    %1435 = vmatpush1.msra.mxu0 %v1399
    %1436 = vmatprep.subr.mxu0 0.0
    %1437 = vmatpush2.msra.mxu0 0.0
    %1438 = vmatprep.subr.mxu0 0.0
    %1439 = vmatpush2.msra.mxu0 0.0
    %1440 = vmatprep.subr.mxu0 0.0
    %1441 = vmatpush2.msra.mxu0 0.0
    %1442 = vmatprep.subr.mxu0 0.0
    %1443 = vmatpush2.msra.mxu0 0.0
    %1444 = vmatprep.subr.mxu0 0.0
    %1445 = vmatpush2.msra.mxu0 0.0
    %1446 = vmatprep.subr.mxu0 0.0
    %1447 = vmatpush2.msra.mxu0 0.0
    %1448 = vmatprep.subr.mxu0 0.0
    %1449 = vmatpush2.msra.mxu0 0.0
    %1450 = vmatprep.subr.mxu0 0.0
    %1451 = vmatpush2.msra.mxu0 0.0
    %1452 = vmatprep.subr.mxu0 0.0
    %1453 = vmatpush2.msra.mxu0 0.0
    %1454 = vmatprep.subr.mxu0 0.0
    %1455 = vmatpush2.msra.mxu0 0.0
    %1456 = vmatprep.subr.mxu0 0.0
    %1457 = vmatpush2.msra.mxu0 0.0
    %1458 = vmatprep.subr.mxu0 0.0
    %1459 = vmatpush2.msra.mxu0 0.0
    %1460 = vmatprep.subr.mxu0 0.0
    %1461 = vmatpush2.msra.mxu0 0.0
    %1462 = vmatprep.subr.mxu0 0.0
    %1463 = vmatpush2.msra.mxu0 0.0
    %1464 = vmatprep.subr.mxu0 0.0
    %1465 = vmatpush2.msra.mxu0 0.0
    %1466 = vmatprep.subr.mxu0 0.0
    %1467 = vmatpush2.msra.mxu0 0.0
    %1468 = vmatprep.mubr.f32.mxu0 0.0
    %1469 = vmatmul.mubr.f32.gmra.mxu0 %v1402
    %v1470 = vpop.f32.mrf.mxu0
    %v1471 = vadd.f32 0.0, %v1470
    %v1472 = vpop.f32.mrf.mxu0
    %1473 = vdwg.mxu0
    %1474 = vrot.lane.b32.xlu0 %v293, 104
    %v1475 = vpop.permute.xlu0 %1474
    %1476 = vrot.lane.b32.xlu0 %v379, 104
    %v1477 = vpop.permute.xlu0 %1476
    %v1478 = vsel %vm473, %v1475, 0
    %v1480 = vsel %vm473, %v1477, 0
    %1482 = vmatprep.subr.mxu0 0.0
    %1483 = vmatpush1.xpose.msra.mxu0 0.0
    %1484 = vmatprep.subr.mxu0 0.0
    %1485 = vmatpush1.xpose.msra.mxu0 0.0
    %1486 = vmatprep.subr.mxu0 0.0
    %1487 = vmatpush1.xpose.msra.mxu0 0.0
    %1488 = vmatprep.subr.mxu0 0.0
    %1489 = vmatpush1.xpose.msra.mxu0 0.0
    %1490 = vmatprep.subr.mxu0 0.0
    %1491 = vmatpush1.xpose.msra.mxu0 0.0
    %1492 = vmatprep.subr.mxu0 0.0
    %1493 = vmatpush1.xpose.msra.mxu0 0.0
    %1494 = vmatprep.subr.mxu0 0.0
    %1495 = vmatpush1.xpose.msra.mxu0 0.0
    %1496 = vmatprep.subr.mxu0 0.0
    %1497 = vmatpush1.xpose.msra.mxu0 0.0
    %1498 = vmatprep.subr.mxu0 0.0
    %1499 = vmatpush1.xpose.msra.mxu0 0.0
    %1500 = vmatprep.subr.mxu0 0.0
    %1501 = vmatpush1.xpose.msra.mxu0 0.0
    %1502 = vmatprep.subr.mxu0 0.0
    %1503 = vmatpush1.xpose.msra.mxu0 0.0
    %1504 = vmatprep.subr.mxu0 0.0
    %1505 = vmatpush1.xpose.msra.mxu0 0.0
    %1506 = vmatprep.subr.mxu0 0.0
    %1507 = vmatpush1.xpose.msra.mxu0 0.0
    %1508 = vmatprep.subr.mxu0 0.0
    %1509 = vmatpush1.xpose.msra.mxu0 0.0
    %1510 = vmatprep.subr.mxu0 0.0
    %1511 = vmatpush1.xpose.msra.mxu0 0.0
    %1512 = vmatprep.subr.mxu0 0.0
    %1513 = vmatpush1.xpose.msra.mxu0 %v1480
    %1514 = vmatprep.subr.mxu0 0.0
    %1515 = vmatpush2.xpose.msra.mxu0 0.0
    %1516 = vmatprep.subr.mxu0 0.0
    %1517 = vmatpush2.xpose.msra.mxu0 0.0
    %1518 = vmatprep.subr.mxu0 0.0
    %1519 = vmatpush2.xpose.msra.mxu0 0.0
    %1520 = vmatprep.subr.mxu0 0.0
    %1521 = vmatpush2.xpose.msra.mxu0 0.0
    %1522 = vmatprep.subr.mxu0 0.0
    %1523 = vmatpush2.xpose.msra.mxu0 0.0
    %1524 = vmatprep.subr.mxu0 0.0
    %1525 = vmatpush2.xpose.msra.mxu0 0.0
    %1526 = vmatprep.subr.mxu0 0.0
    %1527 = vmatpush2.xpose.msra.mxu0 0.0
    %1528 = vmatprep.subr.mxu0 0.0
    %1529 = vmatpush2.xpose.msra.mxu0 0.0
    %1530 = vmatprep.subr.mxu0 0.0
    %1531 = vmatpush2.xpose.msra.mxu0 0.0
    %1532 = vmatprep.subr.mxu0 0.0
    %1533 = vmatpush2.xpose.msra.mxu0 0.0
    %1534 = vmatprep.subr.mxu0 0.0
    %1535 = vmatpush2.xpose.msra.mxu0 0.0
    %1536 = vmatprep.subr.mxu0 0.0
    %1537 = vmatpush2.xpose.msra.mxu0 0.0
    %1538 = vmatprep.subr.mxu0 0.0
    %1539 = vmatpush2.xpose.msra.mxu0 0.0
    %1540 = vmatprep.subr.mxu0 0.0
    %1541 = vmatpush2.xpose.msra.mxu0 0.0
    %1542 = vmatprep.subr.mxu0 0.0
    %1543 = vmatpush2.xpose.msra.mxu0 0.0
    %1544 = vmatprep.subr.mxu0 0.0
    %1545 = vmatpush2.xpose.msra.mxu0 0.0
    %1546 = vmatprep.mubr.f32.mxu0 0.0
    %1547 = vmatmul.mubr.f32.gmra.mxu0 %v1478
    %v1548 = vpop.f32.mrf.mxu0
    %v1549 = vadd.f32 0.0, %v1548
    %v1550 = vpop.f32.mrf.mxu0
    %1551 = vdwg.mxu0
    %1552 = vrot.lane.b32.xlu0 %v298, 104
    %v1553 = vpop.permute.xlu0 %1552
    %1554 = vrot.lane.b32.xlu0 %v384, 104
    %v1555 = vpop.permute.xlu0 %1554
    %v1556 = vsel %vm473, %v1553, 0
    %v1558 = vsel %vm473, %v1555, 0
    %1560 = vmatprep.subr.mxu0 0.0
    %1561 = vmatpush1.xpose.msra.mxu0 0.0
    %1562 = vmatprep.subr.mxu0 0.0
    %1563 = vmatpush1.xpose.msra.mxu0 0.0
    %1564 = vmatprep.subr.mxu0 0.0
    %1565 = vmatpush1.xpose.msra.mxu0 0.0
    %1566 = vmatprep.subr.mxu0 0.0
    %1567 = vmatpush1.xpose.msra.mxu0 0.0
    %1568 = vmatprep.subr.mxu0 0.0
    %1569 = vmatpush1.xpose.msra.mxu0 0.0
    %1570 = vmatprep.subr.mxu0 0.0
    %1571 = vmatpush1.xpose.msra.mxu0 0.0
    %1572 = vmatprep.subr.mxu0 0.0
    %1573 = vmatpush1.xpose.msra.mxu0 0.0
    %1574 = vmatprep.subr.mxu0 0.0
    %1575 = vmatpush1.xpose.msra.mxu0 0.0
    %1576 = vmatprep.subr.mxu0 0.0
    %1577 = vmatpush1.xpose.msra.mxu0 0.0
    %1578 = vmatprep.subr.mxu0 0.0
    %1579 = vmatpush1.xpose.msra.mxu0 0.0
    %1580 = vmatprep.subr.mxu0 0.0
    %1581 = vmatpush1.xpose.msra.mxu0 0.0
    %1582 = vmatprep.subr.mxu0 0.0
    %1583 = vmatpush1.xpose.msra.mxu0 0.0
    %1584 = vmatprep.subr.mxu0 0.0
    %1585 = vmatpush1.xpose.msra.mxu0 0.0
    %1586 = vmatprep.subr.mxu0 0.0
    %1587 = vmatpush1.xpose.msra.mxu0 0.0
    %1588 = vmatprep.subr.mxu0 0.0
    %1589 = vmatpush1.xpose.msra.mxu0 0.0
    %1590 = vmatprep.subr.mxu0 0.0
    %1591 = vmatpush1.xpose.msra.mxu0 %v1558
    %1592 = vmatprep.subr.mxu0 0.0
    %1593 = vmatpush2.xpose.msra.mxu0 0.0
    %1594 = vmatprep.subr.mxu0 0.0
    %1595 = vmatpush2.xpose.msra.mxu0 0.0
    %1596 = vmatprep.subr.mxu0 0.0
    %1597 = vmatpush2.xpose.msra.mxu0 0.0
    %1598 = vmatprep.subr.mxu0 0.0
    %1599 = vmatpush2.xpose.msra.mxu0 0.0
    %1600 = vmatprep.subr.mxu0 0.0
    %1601 = vmatpush2.xpose.msra.mxu0 0.0
    %1602 = vmatprep.subr.mxu0 0.0
    %1603 = vmatpush2.xpose.msra.mxu0 0.0
    %1604 = vmatprep.subr.mxu0 0.0
    %1605 = vmatpush2.xpose.msra.mxu0 0.0
    %1606 = vmatprep.subr.mxu0 0.0
    %1607 = vmatpush2.xpose.msra.mxu0 0.0
    %1608 = vmatprep.subr.mxu0 0.0
    %1609 = vmatpush2.xpose.msra.mxu0 0.0
    %1610 = vmatprep.subr.mxu0 0.0
    %1611 = vmatpush2.xpose.msra.mxu0 0.0
    %1612 = vmatprep.subr.mxu0 0.0
    %1613 = vmatpush2.xpose.msra.mxu0 0.0
    %1614 = vmatprep.subr.mxu0 0.0
    %1615 = vmatpush2.xpose.msra.mxu0 0.0
    %1616 = vmatprep.subr.mxu0 0.0
    %1617 = vmatpush2.xpose.msra.mxu0 0.0
    %1618 = vmatprep.subr.mxu0 0.0
    %1619 = vmatpush2.xpose.msra.mxu0 0.0
    %1620 = vmatprep.subr.mxu0 0.0
    %1621 = vmatpush2.xpose.msra.mxu0 0.0
    %1622 = vmatprep.subr.mxu0 0.0
    %1623 = vmatpush2.xpose.msra.mxu0 0.0
    %1624 = vmatprep.mubr.f32.mxu0 0.0
    %1625 = vmatmul.mubr.f32.gmra.mxu0 %v1556
    %v1626 = vpop.f32.mrf.mxu0
    %v1627 = vadd.f32 0.0, %v1626
    %v1628 = vpop.f32.mrf.mxu0
    %1629 = vdwg.mxu0
    %v1630 = vsel %vm636, %v1549, -1e+09
    %v1631 = vsel %vm637, %v1627, -1e+09
    %v1632 = vsel %vm473, %v1630, -inf
    %1633 = vmax.xlane.f32.xlu0 %v1632
    %v1634 = vpop.xlane.xlu0 %1633
    %v1635 = vsel %vm473, %v1631, -inf
    %1636 = vmax.xlane.f32.xlu0 %v1635
    %v1637 = vpop.xlane.xlu0 %1636
    %v1638 = vsub.f32 %v1630, %v1634
    %v1639 = vsub.f32 %v1631, %v1637
    %v1640 = vmul.f32 %v1638, 1.442695
    %v1641 = vpow.pop %v1640
    %v1642 = vmul.f32 %v1639, 1.442695
    %v1643 = vpow.pop %v1642
    %v1644 = vsel %vm473, %v1641, 0.0
    %1645 = vadd.xlane.f32.xlu0 %v1644
    %v1646 = vpop.xlane.xlu0 %1645
    %v1647 = vsel %vm473, %v1643, 0.0
    %1648 = vadd.xlane.f32.xlu0 %v1647
    %v1649 = vpop.xlane.xlu0 %1648
    %v1650 = vrcp.pop %v1646
    %v1651 = vrcp.pop %v1649
    %v1652 = vmul.f32 %v1641, %v1650
    %v1653 = vmul.f32 %v1643, %v1651
    %1654 = vrot.lane.b32.xlu0 %v465, 104
    %v1655 = vpop.permute.xlu0 %1654
    %v1658 = vsel %vm473, %v1652, 0
    %1660 = vmatprep.subr.mxu0 0.0
    %1661 = vmatpush1.msra.mxu0 0.0
    %1662 = vmatprep.subr.mxu0 0.0
    %1663 = vmatpush1.msra.mxu0 0.0
    %1664 = vmatprep.subr.mxu0 0.0
    %1665 = vmatpush1.msra.mxu0 0.0
    %1666 = vmatprep.subr.mxu0 0.0
    %1667 = vmatpush1.msra.mxu0 0.0
    %1668 = vmatprep.subr.mxu0 0.0
    %1669 = vmatpush1.msra.mxu0 0.0
    %1670 = vmatprep.subr.mxu0 0.0
    %1671 = vmatpush1.msra.mxu0 0.0
    %1672 = vmatprep.subr.mxu0 0.0
    %1673 = vmatpush1.msra.mxu0 0.0
    %1674 = vmatprep.subr.mxu0 0.0
    %1675 = vmatpush1.msra.mxu0 0.0
    %1676 = vmatprep.subr.mxu0 0.0
    %1677 = vmatpush1.msra.mxu0 0.0
    %1678 = vmatprep.subr.mxu0 0.0
    %1679 = vmatpush1.msra.mxu0 0.0
    %1680 = vmatprep.subr.mxu0 0.0
    %1681 = vmatpush1.msra.mxu0 0.0
    %1682 = vmatprep.subr.mxu0 0.0
    %1683 = vmatpush1.msra.mxu0 0.0
    %1684 = vmatprep.subr.mxu0 0.0
    %1685 = vmatpush1.msra.mxu0 0.0
    %1686 = vmatprep.subr.mxu0 0.0
    %1687 = vmatpush1.msra.mxu0 0.0
    %1688 = vmatprep.subr.mxu0 0.0
    %1689 = vmatpush1.msra.mxu0 0.0
    %1690 = vmatprep.subr.mxu0 0.0
    %1691 = vmatpush1.msra.mxu0 %v1655
    %1692 = vmatprep.subr.mxu0 0.0
    %1693 = vmatpush2.msra.mxu0 0.0
    %1694 = vmatprep.subr.mxu0 0.0
    %1695 = vmatpush2.msra.mxu0 0.0
    %1696 = vmatprep.subr.mxu0 0.0
    %1697 = vmatpush2.msra.mxu0 0.0
    %1698 = vmatprep.subr.mxu0 0.0
    %1699 = vmatpush2.msra.mxu0 0.0
    %1700 = vmatprep.subr.mxu0 0.0
    %1701 = vmatpush2.msra.mxu0 0.0
    %1702 = vmatprep.subr.mxu0 0.0
    %1703 = vmatpush2.msra.mxu0 0.0
    %1704 = vmatprep.subr.mxu0 0.0
    %1705 = vmatpush2.msra.mxu0 0.0
    %1706 = vmatprep.subr.mxu0 0.0
    %1707 = vmatpush2.msra.mxu0 0.0
    %1708 = vmatprep.subr.mxu0 0.0
    %1709 = vmatpush2.msra.mxu0 0.0
    %1710 = vmatprep.subr.mxu0 0.0
    %1711 = vmatpush2.msra.mxu0 0.0
    %1712 = vmatprep.subr.mxu0 0.0
    %1713 = vmatpush2.msra.mxu0 0.0
    %1714 = vmatprep.subr.mxu0 0.0
    %1715 = vmatpush2.msra.mxu0 0.0
    %1716 = vmatprep.subr.mxu0 0.0
    %1717 = vmatpush2.msra.mxu0 0.0
    %1718 = vmatprep.subr.mxu0 0.0
    %1719 = vmatpush2.msra.mxu0 0.0
    %1720 = vmatprep.subr.mxu0 0.0
    %1721 = vmatpush2.msra.mxu0 0.0
    %1722 = vmatprep.subr.mxu0 0.0
    %1723 = vmatpush2.msra.mxu0 0.0
    %1724 = vmatprep.mubr.f32.mxu0 0.0
    %1725 = vmatmul.mubr.f32.gmra.mxu0 %v1658
    %v1726 = vpop.f32.mrf.mxu0
    %v1727 = vadd.f32 0.0, %v1726
    %v1728 = vpop.f32.mrf.mxu0
    %1729 = vdwg.mxu0
    %1730 = vrot.lane.b32.xlu0 %v470, 104
    %v1731 = vpop.permute.xlu0 %1730
    %v1734 = vsel %vm473, %v1653, 0
    %1736 = vmatprep.subr.mxu0 0.0
    %1737 = vmatpush1.msra.mxu0 0.0
    %1738 = vmatprep.subr.mxu0 0.0
    %1739 = vmatpush1.msra.mxu0 0.0
    %1740 = vmatprep.subr.mxu0 0.0
    %1741 = vmatpush1.msra.mxu0 0.0
    %1742 = vmatprep.subr.mxu0 0.0
    %1743 = vmatpush1.msra.mxu0 0.0
    %1744 = vmatprep.subr.mxu0 0.0
    %1745 = vmatpush1.msra.mxu0 0.0
    %1746 = vmatprep.subr.mxu0 0.0
    %1747 = vmatpush1.msra.mxu0 0.0
    %1748 = vmatprep.subr.mxu0 0.0
    %1749 = vmatpush1.msra.mxu0 0.0
    %1750 = vmatprep.subr.mxu0 0.0
    %1751 = vmatpush1.msra.mxu0 0.0
    %1752 = vmatprep.subr.mxu0 0.0
    %1753 = vmatpush1.msra.mxu0 0.0
    %1754 = vmatprep.subr.mxu0 0.0
    %1755 = vmatpush1.msra.mxu0 0.0
    %1756 = vmatprep.subr.mxu0 0.0
    %1757 = vmatpush1.msra.mxu0 0.0
    %1758 = vmatprep.subr.mxu0 0.0
    %1759 = vmatpush1.msra.mxu0 0.0
    %1760 = vmatprep.subr.mxu0 0.0
    %1761 = vmatpush1.msra.mxu0 0.0
    %1762 = vmatprep.subr.mxu0 0.0
    %1763 = vmatpush1.msra.mxu0 0.0
    %1764 = vmatprep.subr.mxu0 0.0
    %1765 = vmatpush1.msra.mxu0 0.0
    %1766 = vmatprep.subr.mxu0 0.0
    %1767 = vmatpush1.msra.mxu0 %v1731
    %1768 = vmatprep.subr.mxu0 0.0
    %1769 = vmatpush2.msra.mxu0 0.0
    %1770 = vmatprep.subr.mxu0 0.0
    %1771 = vmatpush2.msra.mxu0 0.0
    %1772 = vmatprep.subr.mxu0 0.0
    %1773 = vmatpush2.msra.mxu0 0.0
    %1774 = vmatprep.subr.mxu0 0.0
    %1775 = vmatpush2.msra.mxu0 0.0
    %1776 = vmatprep.subr.mxu0 0.0
    %1777 = vmatpush2.msra.mxu0 0.0
    %1778 = vmatprep.subr.mxu0 0.0
    %1779 = vmatpush2.msra.mxu0 0.0
    %1780 = vmatprep.subr.mxu0 0.0
    %1781 = vmatpush2.msra.mxu0 0.0
    %1782 = vmatprep.subr.mxu0 0.0
    %1783 = vmatpush2.msra.mxu0 0.0
    %1784 = vmatprep.subr.mxu0 0.0
    %1785 = vmatpush2.msra.mxu0 0.0
    %1786 = vmatprep.subr.mxu0 0.0
    %1787 = vmatpush2.msra.mxu0 0.0
    %1788 = vmatprep.subr.mxu0 0.0
    %1789 = vmatpush2.msra.mxu0 0.0
    %1790 = vmatprep.subr.mxu0 0.0
    %1791 = vmatpush2.msra.mxu0 0.0
    %1792 = vmatprep.subr.mxu0 0.0
    %1793 = vmatpush2.msra.mxu0 0.0
    %1794 = vmatprep.subr.mxu0 0.0
    %1795 = vmatpush2.msra.mxu0 0.0
    %1796 = vmatprep.subr.mxu0 0.0
    %1797 = vmatpush2.msra.mxu0 0.0
    %1798 = vmatprep.subr.mxu0 0.0
    %1799 = vmatpush2.msra.mxu0 0.0
    %1800 = vmatprep.mubr.f32.mxu0 0.0
    %1801 = vmatmul.mubr.f32.gmra.mxu0 %v1734
    %v1802 = vpop.f32.mrf.mxu0
    %v1803 = vadd.f32 0.0, %v1802
    %v1804 = vpop.f32.mrf.mxu0
    %1805 = vdwg.mxu0
    %1808 = vrot.lane.b32.xlu0 %v1062, 8
    %v1809 = vpop.permute.xlu0 %1808
    %1810 = vrot.lane.b32.xlu0 %v1139, 8
    %v1811 = vpop.permute.xlu0 %1810
    %1816 = vrot.lane.b32.xlu0 %v1395, 16
    %v1817 = vpop.permute.xlu0 %1816
    %1818 = vrot.lane.b32.xlu0 %v1471, 16
    %v1819 = vpop.permute.xlu0 %1818
    %1824 = vrot.lane.b32.xlu0 %v1727, 24
    %v1825 = vpop.permute.xlu0 %1824
    %1826 = vrot.lane.b32.xlu0 %v1803, 24
    %v1827 = vpop.permute.xlu0 %1826
    %v1830 = vsel %vm473, %v732, %v1809
    %v1831 = vsel %vm473, %v805, %v1811
    %vm1832 = vcmask 130048
    %v1833 = vsel %vm1832, %v1830, %v1817
    %v1834 = vsel %vm1832, %v1831, %v1819
    %vm1835 = vcmask 195584
    %v1836 = vsel %vm1835, %v1833, %v1825
    %v1837 = vsel %vm1835, %v1834, %v1827
    %v1838 = vld [vmem:[%s21] sm:$0xff]
    %v1839 = vld [vmem:[%s21 + $0x8] sm:$0xff]
    %v1840 = vld [vmem:[%s21 + $0x10] sm:$0xff]
    %v1841 = vld [vmem:[%s21 + $0x18] sm:$0xff]
    %v1842 = vld [vmem:[%s23] sm:$0x1]
    %v1844 = vlaneseq
    %v1845 = vshrl.u32 %v1844, 7
    %v1846 = vsub.s32 0, %v1845
    %v1847 = vrot.slane %v1842, %v1846
    %v1850 = vsel %vm159, %v1836, 0
    %v1853 = vsel %vm159, %v1837, 0
    %1855 = vmatprep.subr.mxu0 0.0
    %1856 = vmatpush1.msra.mxu0 0.0
    %1857 = vmatprep.subr.mxu0 0.0
    %1858 = vmatpush1.msra.mxu0 0.0
    %1859 = vmatprep.subr.mxu0 0.0
    %1860 = vmatpush1.msra.mxu0 0.0
    %1861 = vmatprep.subr.mxu0 0.0
    %1862 = vmatpush1.msra.mxu0 0.0
    %1863 = vmatprep.subr.mxu0 0.0
    %1864 = vmatpush1.msra.mxu0 0.0
    %1865 = vmatprep.subr.mxu0 0.0
    %1866 = vmatpush1.msra.mxu0 0.0
    %1867 = vmatprep.subr.mxu0 0.0
    %1868 = vmatpush1.msra.mxu0 0.0
    %1869 = vmatprep.subr.mxu0 0.0
    %1870 = vmatpush1.msra.mxu0 0.0
    %1871 = vmatprep.subr.mxu0 0.0
    %1872 = vmatpush1.msra.mxu0 0.0
    %1873 = vmatprep.subr.mxu0 0.0
    %1874 = vmatpush1.msra.mxu0 0.0
    %1875 = vmatprep.subr.mxu0 0.0
    %1876 = vmatpush1.msra.mxu0 0.0
    %1877 = vmatprep.subr.mxu0 0.0
    %1878 = vmatpush1.msra.mxu0 0.0
    %1879 = vmatprep.subr.mxu0 0.0
    %1880 = vmatpush1.msra.mxu0 %v1841
    %1881 = vmatprep.subr.mxu0 0.0
    %1882 = vmatpush1.msra.mxu0 %v1840
    %1883 = vmatprep.subr.mxu0 0.0
    %1884 = vmatpush1.msra.mxu0 %v1839
    %1885 = vmatprep.subr.mxu0 0.0
    %1886 = vmatpush1.msra.mxu0 %v1838
    %1887 = vmatprep.subr.mxu0 0.0
    %1888 = vmatpush2.msra.mxu0 0.0
    %1889 = vmatprep.subr.mxu0 0.0
    %1890 = vmatpush2.msra.mxu0 0.0
    %1891 = vmatprep.subr.mxu0 0.0
    %1892 = vmatpush2.msra.mxu0 0.0
    %1893 = vmatprep.subr.mxu0 0.0
    %1894 = vmatpush2.msra.mxu0 0.0
    %1895 = vmatprep.subr.mxu0 0.0
    %1896 = vmatpush2.msra.mxu0 0.0
    %1897 = vmatprep.subr.mxu0 0.0
    %1898 = vmatpush2.msra.mxu0 0.0
    %1899 = vmatprep.subr.mxu0 0.0
    %1900 = vmatpush2.msra.mxu0 0.0
    %1901 = vmatprep.subr.mxu0 0.0
    %1902 = vmatpush2.msra.mxu0 0.0
    %1903 = vmatprep.subr.mxu0 0.0
    %1904 = vmatpush2.msra.mxu0 0.0
    %1905 = vmatprep.subr.mxu0 0.0
    %1906 = vmatpush2.msra.mxu0 0.0
    %1907 = vmatprep.subr.mxu0 0.0
    %1908 = vmatpush2.msra.mxu0 0.0
    %1909 = vmatprep.subr.mxu0 0.0
    %1910 = vmatpush2.msra.mxu0 0.0
    %1911 = vmatprep.subr.mxu0 0.0
    %1912 = vmatpush2.msra.mxu0 0.0
    %1913 = vmatprep.subr.mxu0 0.0
    %1914 = vmatpush2.msra.mxu0 0.0
    %1915 = vmatprep.subr.mxu0 0.0
    %1916 = vmatpush2.msra.mxu0 0.0
    %1917 = vmatprep.subr.mxu0 0.0
    %1918 = vmatpush2.msra.mxu0 0.0
    %1919 = vmatprep.mubr.f32.mxu0 0.0
    %1920 = vmatmul.mubr.f32.gmra.mxu0 %v1850
    %v1921 = vpop.f32.mrf.mxu0
    %v1922 = vadd.f32 %v1847, %v1921
    %v1923 = vpop.f32.mrf.mxu0
    %1924 = vmatprep.mubr.f32.mxu0 0.0
    %1925 = vmatmul.mubr.f32.gmra.mxu0 %v1853
    %v1926 = vpop.f32.mrf.mxu0
    %v1927 = vadd.f32 %v1847, %v1926
    %v1928 = vpop.f32.mrf.mxu0
    %1929 = vdwg.mxu0
    %v1930 = vadd.f32 %v207, %v1922
    %v1931 = vadd.f32 %v208, %v1927
    %v1932 = vld [vmem:[%s25] sm:$0x1]
    %v1933 = vld [vmem:[%s27] sm:$0x1]
    %v1934 = vsel %vm159, %v1930, 0.0
    %1935 = vadd.xlane.f32.xlu0 %v1934
    %v1936 = vpop.xlane.xlu0 %1935
    %v1937 = vsel %vm159, %v1931, 0.0
    %1938 = vadd.xlane.f32.xlu0 %v1937
    %v1939 = vpop.xlane.xlu0 %1938
    %v1940 = vmul.f32 %v1936, %v166
    %v1941 = vmul.f32 %v1939, %v166
    %v1942 = vmul.f32 %v1930, %v1930
    %v1943 = vmul.f32 %v1931, %v1931
    %v1944 = vsel %vm159, %v1942, 0.0
    %1945 = vadd.xlane.f32.xlu0 %v1944
    %v1946 = vpop.xlane.xlu0 %1945
    %v1947 = vsel %vm159, %v1943, 0.0
    %1948 = vadd.xlane.f32.xlu0 %v1947
    %v1949 = vpop.xlane.xlu0 %1948
    %v1950 = vmul.f32 %v1946, %v166
    %v1951 = vmul.f32 %v1949, %v166
    %v1952 = vmul.f32 %v1940, %v1940
    %v1953 = vmul.f32 %v1941, %v1941
    %v1954 = vsub.f32 %v1950, %v1952
    %v1955 = vsub.f32 %v1951, %v1953
    %v1956 = vmax.f32 %v1954, 0.0
    %v1957 = vmax.f32 %v1955, 0.0
    %v1958 = vsub.f32 %v1930, %v1940
    %v1959 = vsub.f32 %v1931, %v1941
    %v1960 = vadd.f32 %v1956, 1e-12
    %v1961 = vadd.f32 %v1957, 1e-12
    %v1962 = vrsqrt.pop %v1960
    %v1963 = vrsqrt.pop %v1961
    %v1964 = vmul.f32 %v1958, %v1962
    %v1965 = vmul.f32 %v1959, %v1963
    %v1967 = vlaneseq
    %v1968 = vshrl.u32 %v1967, 7
    %v1969 = vsub.s32 0, %v1968
    %v1970 = vrot.slane %v1932, %v1969
    %v1972 = vmul.f32 %v1964, %v1970
    %v1973 = vmul.f32 %v1965, %v1970
    %v1975 = vlaneseq
    %v1976 = vshrl.u32 %v1975, 7
    %v1977 = vsub.s32 0, %v1976
    %v1978 = vrot.slane %v1933, %v1977
    %v1980 = vadd.f32 %v1972, %v1978
    %v1981 = vadd.f32 %v1973, %v1978
    %v1982 = vld [vmem:[%s29] sm:$0xff]
    %v1983 = vld [vmem:[%s29 + $0x8] sm:$0xff]
    %v1984 = vld [vmem:[%s29 + $0x10] sm:$0xff]
    %v1985 = vld [vmem:[%s29 + $0x18] sm:$0xff]
    %v1986 = vld [vmem:[%s31] sm:$0x1]
    %v1988 = vlaneseq
    %v1989 = vshrl.u32 %v1988, 7
    %v1990 = vsub.s32 0, %v1989
    %v1991 = vrot.slane %v1986, %v1990
    %v1994 = vsel %vm159, %v1980, 0
    %v1997 = vsel %vm159, %v1981, 0
    %1999 = vmatprep.subr.mxu0 0.0
    %2000 = vmatpush1.msra.mxu0 0.0
    %2001 = vmatprep.subr.mxu0 0.0
    %2002 = vmatpush1.msra.mxu0 0.0
    %2003 = vmatprep.subr.mxu0 0.0
    %2004 = vmatpush1.msra.mxu0 0.0
    %2005 = vmatprep.subr.mxu0 0.0
    %2006 = vmatpush1.msra.mxu0 0.0
    %2007 = vmatprep.subr.mxu0 0.0
    %2008 = vmatpush1.msra.mxu0 0.0
    %2009 = vmatprep.subr.mxu0 0.0
    %2010 = vmatpush1.msra.mxu0 0.0
    %2011 = vmatprep.subr.mxu0 0.0
    %2012 = vmatpush1.msra.mxu0 0.0
    %2013 = vmatprep.subr.mxu0 0.0
    %2014 = vmatpush1.msra.mxu0 0.0
    %2015 = vmatprep.subr.mxu0 0.0
    %2016 = vmatpush1.msra.mxu0 0.0
    %2017 = vmatprep.subr.mxu0 0.0
    %2018 = vmatpush1.msra.mxu0 0.0
    %2019 = vmatprep.subr.mxu0 0.0
    %2020 = vmatpush1.msra.mxu0 0.0
    %2021 = vmatprep.subr.mxu0 0.0
    %2022 = vmatpush1.msra.mxu0 0.0
    %2023 = vmatprep.subr.mxu0 0.0
    %2024 = vmatpush1.msra.mxu0 %v1985
    %2025 = vmatprep.subr.mxu0 0.0
    %2026 = vmatpush1.msra.mxu0 %v1984
    %2027 = vmatprep.subr.mxu0 0.0
    %2028 = vmatpush1.msra.mxu0 %v1983
    %2029 = vmatprep.subr.mxu0 0.0
    %2030 = vmatpush1.msra.mxu0 %v1982
    %2031 = vmatprep.subr.mxu0 0.0
    %2032 = vmatpush2.msra.mxu0 0.0
    %2033 = vmatprep.subr.mxu0 0.0
    %2034 = vmatpush2.msra.mxu0 0.0
    %2035 = vmatprep.subr.mxu0 0.0
    %2036 = vmatpush2.msra.mxu0 0.0
    %2037 = vmatprep.subr.mxu0 0.0
    %2038 = vmatpush2.msra.mxu0 0.0
    %2039 = vmatprep.subr.mxu0 0.0
    %2040 = vmatpush2.msra.mxu0 0.0
    %2041 = vmatprep.subr.mxu0 0.0
    %2042 = vmatpush2.msra.mxu0 0.0
    %2043 = vmatprep.subr.mxu0 0.0
    %2044 = vmatpush2.msra.mxu0 0.0
    %2045 = vmatprep.subr.mxu0 0.0
    %2046 = vmatpush2.msra.mxu0 0.0
    %2047 = vmatprep.subr.mxu0 0.0
    %2048 = vmatpush2.msra.mxu0 0.0
    %2049 = vmatprep.subr.mxu0 0.0
    %2050 = vmatpush2.msra.mxu0 0.0
    %2051 = vmatprep.subr.mxu0 0.0
    %2052 = vmatpush2.msra.mxu0 0.0
    %2053 = vmatprep.subr.mxu0 0.0
    %2054 = vmatpush2.msra.mxu0 0.0
    %2055 = vmatprep.subr.mxu0 0.0
    %2056 = vmatpush2.msra.mxu0 0.0
    %2057 = vmatprep.subr.mxu0 0.0
    %2058 = vmatpush2.msra.mxu0 0.0
    %2059 = vmatprep.subr.mxu0 0.0
    %2060 = vmatpush2.msra.mxu0 0.0
    %2061 = vmatprep.subr.mxu0 0.0
    %2062 = vmatpush2.msra.mxu0 0.0
    %2063 = vmatprep.mubr.f32.mxu0 0.0
    %2064 = vmatmul.mubr.f32.gmra.mxu0 %v1994
    %v2065 = vpop.f32.mrf.mxu0
    %v2066 = vadd.f32 %v1991, %v2065
    %v2067 = vpop.f32.mrf.mxu0
    %2068 = vmatprep.mubr.f32.mxu0 0.0
    %2069 = vmatmul.mubr.f32.gmra.mxu0 %v1997
    %v2070 = vpop.f32.mrf.mxu0
    %v2071 = vadd.f32 %v1991, %v2070
    %v2072 = vpop.f32.mrf.mxu0
    %2073 = vdwg.mxu0
    %v2074 = vmul.f32 %v2066, %v2066
    %v2075 = vmul.f32 %v2071, %v2071
    %v2076 = vmul.f32 %v2066, %v2074
    %v2077 = vmul.f32 %v2071, %v2075
    %v2078 = vmul.f32 %v2076, 0.044715
    %v2079 = vmul.f32 %v2077, 0.044715
    %v2080 = vadd.f32 %v2066, %v2078
    %v2081 = vadd.f32 %v2071, %v2079
    %v2082 = vmul.f32 %v2080, 0.7978846
    %v2083 = vmul.f32 %v2081, 0.7978846
    %v2084 = vtanh.pop %v2082
    %v2085 = vtanh.pop %v2083
    %v2086 = vadd.f32 %v2084, 1.0
    %v2087 = vadd.f32 %v2085, 1.0
    %v2088 = vmul.f32 %v2086, 0.5
    %v2089 = vmul.f32 %v2087, 0.5
    %v2090 = vmul.f32 %v2066, %v2088
    %v2091 = vmul.f32 %v2071, %v2089
    %v2092 = vld [vmem:[%s33] sm:$0xff]
    %v2093 = vld [vmem:[%s33 + $0x8] sm:$0xff]
    %v2094 = vld [vmem:[%s33 + $0x10] sm:$0xff]
    %v2095 = vld [vmem:[%s33 + $0x18] sm:$0xff]
    %v2096 = vld [vmem:[%s33 + $0x20] sm:$0xff]
    %v2097 = vld [vmem:[%s33 + $0x28] sm:$0xff]
    %v2098 = vld [vmem:[%s33 + $0x30] sm:$0xff]
    %v2099 = vld [vmem:[%s33 + $0x38] sm:$0xff]
    %v2100 = vld [vmem:[%s35] sm:$0x1]
    %v2102 = vlaneseq
    %v2103 = vshrl.u32 %v2102, 7
    %v2104 = vsub.s32 0, %v2103
    %v2105 = vrot.slane %v2100, %v2104
    %vm2107 = vcmask 523264
    %v2109 = vsel %vm2107, %v2090, 0
    %v2112 = vsel %vm2107, %v2091, 0
    %2114 = vmatprep.subr.mxu0 0.0
    %2115 = vmatpush1.msra.mxu0 0.0
    %2116 = vmatprep.subr.mxu0 0.0
    %2117 = vmatpush1.msra.mxu0 0.0
    %2118 = vmatprep.subr.mxu0 0.0
    %2119 = vmatpush1.msra.mxu0 0.0
    %2120 = vmatprep.subr.mxu0 0.0
    %2121 = vmatpush1.msra.mxu0 0.0
    %2122 = vmatprep.subr.mxu0 0.0
    %2123 = vmatpush1.msra.mxu0 0.0
    %2124 = vmatprep.subr.mxu0 0.0
    %2125 = vmatpush1.msra.mxu0 0.0
    %2126 = vmatprep.subr.mxu0 0.0
    %2127 = vmatpush1.msra.mxu0 0.0
    %2128 = vmatprep.subr.mxu0 0.0
    %2129 = vmatpush1.msra.mxu0 0.0
    %2130 = vmatprep.subr.mxu0 0.0
    %2131 = vmatpush1.msra.mxu0 %v2099
    %2132 = vmatprep.subr.mxu0 0.0
    %2133 = vmatpush1.msra.mxu0 %v2098
    %2134 = vmatprep.subr.mxu0 0.0
    %2135 = vmatpush1.msra.mxu0 %v2097
    %2136 = vmatprep.subr.mxu0 0.0
    %2137 = vmatpush1.msra.mxu0 %v2096
    %2138 = vmatprep.subr.mxu0 0.0
    %2139 = vmatpush1.msra.mxu0 %v2095
    %2140 = vmatprep.subr.mxu0 0.0
    %2141 = vmatpush1.msra.mxu0 %v2094
    %2142 = vmatprep.subr.mxu0 0.0
    %2143 = vmatpush1.msra.mxu0 %v2093
    %2144 = vmatprep.subr.mxu0 0.0
    %2145 = vmatpush1.msra.mxu0 %v2092
    %2146 = vmatprep.subr.mxu0 0.0
    %2147 = vmatpush2.msra.mxu0 0.0
    %2148 = vmatprep.subr.mxu0 0.0
    %2149 = vmatpush2.msra.mxu0 0.0
    %2150 = vmatprep.subr.mxu0 0.0
    %2151 = vmatpush2.msra.mxu0 0.0
    %2152 = vmatprep.subr.mxu0 0.0
    %2153 = vmatpush2.msra.mxu0 0.0
    %2154 = vmatprep.subr.mxu0 0.0
    %2155 = vmatpush2.msra.mxu0 0.0
    %2156 = vmatprep.subr.mxu0 0.0
    %2157 = vmatpush2.msra.mxu0 0.0
    %2158 = vmatprep.subr.mxu0 0.0
    %2159 = vmatpush2.msra.mxu0 0.0
    %2160 = vmatprep.subr.mxu0 0.0
    %2161 = vmatpush2.msra.mxu0 0.0
    %2162 = vmatprep.subr.mxu0 0.0
    %2163 = vmatpush2.msra.mxu0 0.0
    %2164 = vmatprep.subr.mxu0 0.0
    %2165 = vmatpush2.msra.mxu0 0.0
    %2166 = vmatprep.subr.mxu0 0.0
    %2167 = vmatpush2.msra.mxu0 0.0
    %2168 = vmatprep.subr.mxu0 0.0
    %2169 = vmatpush2.msra.mxu0 0.0
    %2170 = vmatprep.subr.mxu0 0.0
    %2171 = vmatpush2.msra.mxu0 0.0
    %2172 = vmatprep.subr.mxu0 0.0
    %2173 = vmatpush2.msra.mxu0 0.0
    %2174 = vmatprep.subr.mxu0 0.0
    %2175 = vmatpush2.msra.mxu0 0.0
    %2176 = vmatprep.subr.mxu0 0.0
    %2177 = vmatpush2.msra.mxu0 0.0
    %2178 = vmatprep.mubr.f32.mxu0 0.0
    %2179 = vmatmul.mubr.f32.gmra.mxu0 %v2109
    %v2180 = vpop.f32.mrf.mxu0
    %v2181 = vadd.f32 %v2105, %v2180
    %v2182 = vpop.f32.mrf.mxu0
    %2183 = vmatprep.mubr.f32.mxu0 0.0
    %2184 = vmatmul.mubr.f32.gmra.mxu0 %v2112
    %v2185 = vpop.f32.mrf.mxu0
    %v2186 = vadd.f32 %v2105, %v2185
    %v2187 = vpop.f32.mrf.mxu0
    %2188 = vdwg.mxu0
    %v2189 = vadd.f32 %v1980, %v2181
    %v2190 = vadd.f32 %v1981, %v2186
    %v2191 = vld [vmem:[%s37] sm:$0x1]
    %v2192 = vld [vmem:[%s39] sm:$0x1]
    %v2193 = vsel %vm159, %v2189, 0.0
    %2194 = vadd.xlane.f32.xlu0 %v2193
    %v2195 = vpop.xlane.xlu0 %2194
    %v2196 = vsel %vm159, %v2190, 0.0
    %2197 = vadd.xlane.f32.xlu0 %v2196
    %v2198 = vpop.xlane.xlu0 %2197
    %v2199 = vmul.f32 %v2195, %v166
    %v2200 = vmul.f32 %v2198, %v166
    %v2201 = vmul.f32 %v2189, %v2189
    %v2202 = vmul.f32 %v2190, %v2190
    %v2203 = vsel %vm159, %v2201, 0.0
    %2204 = vadd.xlane.f32.xlu0 %v2203
    %v2205 = vpop.xlane.xlu0 %2204
    %v2206 = vsel %vm159, %v2202, 0.0
    %2207 = vadd.xlane.f32.xlu0 %v2206
    %v2208 = vpop.xlane.xlu0 %2207
    %v2209 = vmul.f32 %v2205, %v166
    %v2210 = vmul.f32 %v2208, %v166
    %v2211 = vmul.f32 %v2199, %v2199
    %v2212 = vmul.f32 %v2200, %v2200
    %v2213 = vsub.f32 %v2209, %v2211
    %v2214 = vsub.f32 %v2210, %v2212
    %v2215 = vmax.f32 %v2213, 0.0
    %v2216 = vmax.f32 %v2214, 0.0
    %v2217 = vsub.f32 %v2189, %v2199
    %v2218 = vsub.f32 %v2190, %v2200
    %v2219 = vadd.f32 %v2215, 1e-12
    %v2220 = vadd.f32 %v2216, 1e-12
    %v2221 = vrsqrt.pop %v2219
    %v2222 = vrsqrt.pop %v2220
    %v2223 = vmul.f32 %v2217, %v2221
    %v2224 = vmul.f32 %v2218, %v2222
    %v2226 = vlaneseq
    %v2227 = vshrl.u32 %v2226, 7
    %v2228 = vsub.s32 0, %v2227
    %v2229 = vrot.slane %v2191, %v2228
    %v2231 = vmul.f32 %v2223, %v2229
    %v2232 = vmul.f32 %v2224, %v2229
    %v2234 = vlaneseq
    %v2235 = vshrl.u32 %v2234, 7
    %v2236 = vsub.s32 0, %v2235
    %v2237 = vrot.slane %v2192, %v2236
    %v2239 = vadd.f32 %v2231, %v2237
    %v2240 = vadd.f32 %v2232, %v2237
    %v2241 = vld [vmem:[%s41] sm:$0xff]
    %v2242 = vld [vmem:[%s41 + $0x8] sm:$0xff]
    %v2243 = vld [vmem:[%s41 + $0x10] sm:$0xff]
    %v2244 = vld [vmem:[%s41 + $0x18] sm:$0xff]
    %v2245 = vld [vmem:[%s43] sm:$0x1]
    %v2247 = vlaneseq
    %v2248 = vshrl.u32 %v2247, 7
    %v2249 = vsub.s32 0, %v2248
    %v2250 = vrot.slane %v2245, %v2249
    %v2253 = vsel %vm159, %v2239, 0
    %v2256 = vsel %vm159, %v2240, 0
    %2258 = vmatprep.subr.mxu0 0.0
    %2259 = vmatpush1.msra.mxu0 0.0
    %2260 = vmatprep.subr.mxu0 0.0
    %2261 = vmatpush1.msra.mxu0 0.0
    %2262 = vmatprep.subr.mxu0 0.0
    %2263 = vmatpush1.msra.mxu0 0.0
    %2264 = vmatprep.subr.mxu0 0.0
    %2265 = vmatpush1.msra.mxu0 0.0
    %2266 = vmatprep.subr.mxu0 0.0
    %2267 = vmatpush1.msra.mxu0 0.0
    %2268 = vmatprep.subr.mxu0 0.0
    %2269 = vmatpush1.msra.mxu0 0.0
    %2270 = vmatprep.subr.mxu0 0.0
    %2271 = vmatpush1.msra.mxu0 0.0
    %2272 = vmatprep.subr.mxu0 0.0
    %2273 = vmatpush1.msra.mxu0 0.0
    %2274 = vmatprep.subr.mxu0 0.0
    %2275 = vmatpush1.msra.mxu0 0.0
    %2276 = vmatprep.subr.mxu0 0.0
    %2277 = vmatpush1.msra.mxu0 0.0
    %2278 = vmatprep.subr.mxu0 0.0
    %2279 = vmatpush1.msra.mxu0 0.0
    %2280 = vmatprep.subr.mxu0 0.0
    %2281 = vmatpush1.msra.mxu0 0.0
    %2282 = vmatprep.subr.mxu0 0.0
    %2283 = vmatpush1.msra.mxu0 %v2244
    %2284 = vmatprep.subr.mxu0 0.0
    %2285 = vmatpush1.msra.mxu0 %v2243
    %2286 = vmatprep.subr.mxu0 0.0
    %2287 = vmatpush1.msra.mxu0 %v2242
    %2288 = vmatprep.subr.mxu0 0.0
    %2289 = vmatpush1.msra.mxu0 %v2241
    %2290 = vmatprep.subr.mxu0 0.0
    %2291 = vmatpush2.msra.mxu0 0.0
    %2292 = vmatprep.subr.mxu0 0.0
    %2293 = vmatpush2.msra.mxu0 0.0
    %2294 = vmatprep.subr.mxu0 0.0
    %2295 = vmatpush2.msra.mxu0 0.0
    %2296 = vmatprep.subr.mxu0 0.0
    %2297 = vmatpush2.msra.mxu0 0.0
    %2298 = vmatprep.subr.mxu0 0.0
    %2299 = vmatpush2.msra.mxu0 0.0
    %2300 = vmatprep.subr.mxu0 0.0
    %2301 = vmatpush2.msra.mxu0 0.0
    %2302 = vmatprep.subr.mxu0 0.0
    %2303 = vmatpush2.msra.mxu0 0.0
    %2304 = vmatprep.subr.mxu0 0.0
    %2305 = vmatpush2.msra.mxu0 0.0
    %2306 = vmatprep.subr.mxu0 0.0
    %2307 = vmatpush2.msra.mxu0 0.0
    %2308 = vmatprep.subr.mxu0 0.0
    %2309 = vmatpush2.msra.mxu0 0.0
    %2310 = vmatprep.subr.mxu0 0.0
    %2311 = vmatpush2.msra.mxu0 0.0
    %2312 = vmatprep.subr.mxu0 0.0
    %2313 = vmatpush2.msra.mxu0 0.0
    %2314 = vmatprep.subr.mxu0 0.0
    %2315 = vmatpush2.msra.mxu0 0.0
    %2316 = vmatprep.subr.mxu0 0.0
    %2317 = vmatpush2.msra.mxu0 0.0
    %2318 = vmatprep.subr.mxu0 0.0
    %2319 = vmatpush2.msra.mxu0 0.0
    %2320 = vmatprep.subr.mxu0 0.0
    %2321 = vmatpush2.msra.mxu0 0.0
    %2322 = vmatprep.mubr.f32.mxu0 0.0
    %2323 = vmatmul.mubr.f32.gmra.mxu0 %v2253
    %v2324 = vpop.f32.mrf.mxu0
    %v2325 = vadd.f32 %v2250, %v2324
    %v2326 = vpop.f32.mrf.mxu0
    %2327 = vmatprep.mubr.f32.mxu0 0.0
    %2328 = vmatmul.mubr.f32.gmra.mxu0 %v2256
    %v2329 = vpop.f32.mrf.mxu0
    %v2330 = vadd.f32 %v2250, %v2329
    %v2331 = vpop.f32.mrf.mxu0
    %2332 = vdwg.mxu0
    %v2333 = vld [vmem:[%s45] sm:$0xff]
    %v2334 = vld [vmem:[%s45 + $0x8] sm:$0xff]
    %v2335 = vld [vmem:[%s45 + $0x10] sm:$0xff]
    %v2336 = vld [vmem:[%s45 + $0x18] sm:$0xff]
    %v2337 = vld [vmem:[%s47] sm:$0x1]
    %v2339 = vlaneseq
    %v2340 = vshrl.u32 %v2339, 7
    %v2341 = vsub.s32 0, %v2340
    %v2342 = vrot.slane %v2337, %v2341
    %2344 = vmatprep.subr.mxu0 0.0
    %2345 = vmatpush1.msra.mxu0 0.0
    %2346 = vmatprep.subr.mxu0 0.0
    %2347 = vmatpush1.msra.mxu0 0.0
    %2348 = vmatprep.subr.mxu0 0.0
    %2349 = vmatpush1.msra.mxu0 0.0
    %2350 = vmatprep.subr.mxu0 0.0
    %2351 = vmatpush1.msra.mxu0 0.0
    %2352 = vmatprep.subr.mxu0 0.0
    %2353 = vmatpush1.msra.mxu0 0.0
    %2354 = vmatprep.subr.mxu0 0.0
    %2355 = vmatpush1.msra.mxu0 0.0
    %2356 = vmatprep.subr.mxu0 0.0
    %2357 = vmatpush1.msra.mxu0 0.0
    %2358 = vmatprep.subr.mxu0 0.0
    %2359 = vmatpush1.msra.mxu0 0.0
    %2360 = vmatprep.subr.mxu0 0.0
    %2361 = vmatpush1.msra.mxu0 0.0
    %2362 = vmatprep.subr.mxu0 0.0
    %2363 = vmatpush1.msra.mxu0 0.0
    %2364 = vmatprep.subr.mxu0 0.0
    %2365 = vmatpush1.msra.mxu0 0.0
    %2366 = vmatprep.subr.mxu0 0.0
    %2367 = vmatpush1.msra.mxu0 0.0
    %2368 = vmatprep.subr.mxu0 0.0
    %2369 = vmatpush1.msra.mxu0 %v2336
    %2370 = vmatprep.subr.mxu0 0.0
    %2371 = vmatpush1.msra.mxu0 %v2335
    %2372 = vmatprep.subr.mxu0 0.0
    %2373 = vmatpush1.msra.mxu0 %v2334
    %2374 = vmatprep.subr.mxu0 0.0
    %2375 = vmatpush1.msra.mxu0 %v2333
    %2376 = vmatprep.subr.mxu0 0.0
    %2377 = vmatpush2.msra.mxu0 0.0
    %2378 = vmatprep.subr.mxu0 0.0
    %2379 = vmatpush2.msra.mxu0 0.0
    %2380 = vmatprep.subr.mxu0 0.0
    %2381 = vmatpush2.msra.mxu0 0.0
    %2382 = vmatprep.subr.mxu0 0.0
    %2383 = vmatpush2.msra.mxu0 0.0
    %2384 = vmatprep.subr.mxu0 0.0
    %2385 = vmatpush2.msra.mxu0 0.0
    %2386 = vmatprep.subr.mxu0 0.0
    %2387 = vmatpush2.msra.mxu0 0.0
    %2388 = vmatprep.subr.mxu0 0.0
    %2389 = vmatpush2.msra.mxu0 0.0
    %2390 = vmatprep.subr.mxu0 0.0
    %2391 = vmatpush2.msra.mxu0 0.0
    %2392 = vmatprep.subr.mxu0 0.0
    %2393 = vmatpush2.msra.mxu0 0.0
    %2394 = vmatprep.subr.mxu0 0.0
    %2395 = vmatpush2.msra.mxu0 0.0
    %2396 = vmatprep.subr.mxu0 0.0
    %2397 = vmatpush2.msra.mxu0 0.0
    %2398 = vmatprep.subr.mxu0 0.0
    %2399 = vmatpush2.msra.mxu0 0.0
    %2400 = vmatprep.subr.mxu0 0.0
    %2401 = vmatpush2.msra.mxu0 0.0
    %2402 = vmatprep.subr.mxu0 0.0
    %2403 = vmatpush2.msra.mxu0 0.0
    %2404 = vmatprep.subr.mxu0 0.0
    %2405 = vmatpush2.msra.mxu0 0.0
    %2406 = vmatprep.subr.mxu0 0.0
    %2407 = vmatpush2.msra.mxu0 0.0
    %2408 = vmatprep.mubr.f32.mxu0 0.0
    %2409 = vmatmul.mubr.f32.gmra.mxu0 %v2253
    %v2410 = vpop.f32.mrf.mxu0
    %v2411 = vadd.f32 %v2342, %v2410
    %v2412 = vpop.f32.mrf.mxu0
    %2413 = vmatprep.mubr.f32.mxu0 0.0
    %2414 = vmatmul.mubr.f32.gmra.mxu0 %v2256
    %v2415 = vpop.f32.mrf.mxu0
    %v2416 = vadd.f32 %v2342, %v2415
    %v2417 = vpop.f32.mrf.mxu0
    %2418 = vdwg.mxu0
    %v2419 = vld [vmem:[%s49] sm:$0xff]
    %v2420 = vld [vmem:[%s49 + $0x8] sm:$0xff]
    %v2421 = vld [vmem:[%s49 + $0x10] sm:$0xff]
    %v2422 = vld [vmem:[%s49 + $0x18] sm:$0xff]
    %v2423 = vld [vmem:[%s51] sm:$0x1]
    %v2425 = vlaneseq
    %v2426 = vshrl.u32 %v2425, 7
    %v2427 = vsub.s32 0, %v2426
    %v2428 = vrot.slane %v2423, %v2427
    %2430 = vmatprep.subr.mxu0 0.0
    %2431 = vmatpush1.msra.mxu0 0.0
    %2432 = vmatprep.subr.mxu0 0.0
    %2433 = vmatpush1.msra.mxu0 0.0
    %2434 = vmatprep.subr.mxu0 0.0
    %2435 = vmatpush1.msra.mxu0 0.0
    %2436 = vmatprep.subr.mxu0 0.0
    %2437 = vmatpush1.msra.mxu0 0.0
    %2438 = vmatprep.subr.mxu0 0.0
    %2439 = vmatpush1.msra.mxu0 0.0
    %2440 = vmatprep.subr.mxu0 0.0
    %2441 = vmatpush1.msra.mxu0 0.0
    %2442 = vmatprep.subr.mxu0 0.0
    %2443 = vmatpush1.msra.mxu0 0.0
    %2444 = vmatprep.subr.mxu0 0.0
    %2445 = vmatpush1.msra.mxu0 0.0
    %2446 = vmatprep.subr.mxu0 0.0
    %2447 = vmatpush1.msra.mxu0 0.0
    %2448 = vmatprep.subr.mxu0 0.0
    %2449 = vmatpush1.msra.mxu0 0.0
    %2450 = vmatprep.subr.mxu0 0.0
    %2451 = vmatpush1.msra.mxu0 0.0
    %2452 = vmatprep.subr.mxu0 0.0
    %2453 = vmatpush1.msra.mxu0 0.0
    %2454 = vmatprep.subr.mxu0 0.0
    %2455 = vmatpush1.msra.mxu0 %v2422
    %2456 = vmatprep.subr.mxu0 0.0
    %2457 = vmatpush1.msra.mxu0 %v2421
    %2458 = vmatprep.subr.mxu0 0.0
    %2459 = vmatpush1.msra.mxu0 %v2420
    %2460 = vmatprep.subr.mxu0 0.0
    %2461 = vmatpush1.msra.mxu0 %v2419
    %2462 = vmatprep.subr.mxu0 0.0
    %2463 = vmatpush2.msra.mxu0 0.0
    %2464 = vmatprep.subr.mxu0 0.0
    %2465 = vmatpush2.msra.mxu0 0.0
    %2466 = vmatprep.subr.mxu0 0.0
    %2467 = vmatpush2.msra.mxu0 0.0
    %2468 = vmatprep.subr.mxu0 0.0
    %2469 = vmatpush2.msra.mxu0 0.0
    %2470 = vmatprep.subr.mxu0 0.0
    %2471 = vmatpush2.msra.mxu0 0.0
    %2472 = vmatprep.subr.mxu0 0.0
    %2473 = vmatpush2.msra.mxu0 0.0
    %2474 = vmatprep.subr.mxu0 0.0
    %2475 = vmatpush2.msra.mxu0 0.0
    %2476 = vmatprep.subr.mxu0 0.0
    %2477 = vmatpush2.msra.mxu0 0.0
    %2478 = vmatprep.subr.mxu0 0.0
    %2479 = vmatpush2.msra.mxu0 0.0
    %2480 = vmatprep.subr.mxu0 0.0
    %2481 = vmatpush2.msra.mxu0 0.0
    %2482 = vmatprep.subr.mxu0 0.0
    %2483 = vmatpush2.msra.mxu0 0.0
    %2484 = vmatprep.subr.mxu0 0.0
    %2485 = vmatpush2.msra.mxu0 0.0
    %2486 = vmatprep.subr.mxu0 0.0
    %2487 = vmatpush2.msra.mxu0 0.0
    %2488 = vmatprep.subr.mxu0 0.0
    %2489 = vmatpush2.msra.mxu0 0.0
    %2490 = vmatprep.subr.mxu0 0.0
    %2491 = vmatpush2.msra.mxu0 0.0
    %2492 = vmatprep.subr.mxu0 0.0
    %2493 = vmatpush2.msra.mxu0 0.0
    %2494 = vmatprep.mubr.f32.mxu0 0.0
    %2495 = vmatmul.mubr.f32.gmra.mxu0 %v2253
    %v2496 = vpop.f32.mrf.mxu0
    %v2497 = vadd.f32 %v2428, %v2496
    %v2498 = vpop.f32.mrf.mxu0
    %2499 = vmatprep.mubr.f32.mxu0 0.0
    %2500 = vmatmul.mubr.f32.gmra.mxu0 %v2256
    %v2501 = vpop.f32.mrf.mxu0
    %v2502 = vadd.f32 %v2428, %v2501
    %v2503 = vpop.f32.mrf.mxu0
    %2504 = vdwg.mxu0
    %v2506 = vsel %vm473, %v2325, 0
    %v2509 = vsel %vm473, %v2411, 0
    %2511 = vmatprep.subr.mxu0 0.0
    %2512 = vmatpush1.xpose.msra.mxu0 0.0
    %2513 = vmatprep.subr.mxu0 0.0
    %2514 = vmatpush1.xpose.msra.mxu0 0.0
    %2515 = vmatprep.subr.mxu0 0.0
    %2516 = vmatpush1.xpose.msra.mxu0 0.0
    %2517 = vmatprep.subr.mxu0 0.0
    %2518 = vmatpush1.xpose.msra.mxu0 0.0
    %2519 = vmatprep.subr.mxu0 0.0
    %2520 = vmatpush1.xpose.msra.mxu0 0.0
    %2521 = vmatprep.subr.mxu0 0.0
    %2522 = vmatpush1.xpose.msra.mxu0 0.0
    %2523 = vmatprep.subr.mxu0 0.0
    %2524 = vmatpush1.xpose.msra.mxu0 0.0
    %2525 = vmatprep.subr.mxu0 0.0
    %2526 = vmatpush1.xpose.msra.mxu0 0.0
    %2527 = vmatprep.subr.mxu0 0.0
    %2528 = vmatpush1.xpose.msra.mxu0 0.0
    %2529 = vmatprep.subr.mxu0 0.0
    %2530 = vmatpush1.xpose.msra.mxu0 0.0
    %2531 = vmatprep.subr.mxu0 0.0
    %2532 = vmatpush1.xpose.msra.mxu0 0.0
    %2533 = vmatprep.subr.mxu0 0.0
    %2534 = vmatpush1.xpose.msra.mxu0 0.0
    %2535 = vmatprep.subr.mxu0 0.0
    %2536 = vmatpush1.xpose.msra.mxu0 0.0
    %2537 = vmatprep.subr.mxu0 0.0
    %2538 = vmatpush1.xpose.msra.mxu0 0.0
    %2539 = vmatprep.subr.mxu0 0.0
    %2540 = vmatpush1.xpose.msra.mxu0 0.0
    %2541 = vmatprep.subr.mxu0 0.0
    %2542 = vmatpush1.xpose.msra.mxu0 %v2509
    %2543 = vmatprep.subr.mxu0 0.0
    %2544 = vmatpush2.xpose.msra.mxu0 0.0
    %2545 = vmatprep.subr.mxu0 0.0
    %2546 = vmatpush2.xpose.msra.mxu0 0.0
    %2547 = vmatprep.subr.mxu0 0.0
    %2548 = vmatpush2.xpose.msra.mxu0 0.0
    %2549 = vmatprep.subr.mxu0 0.0
    %2550 = vmatpush2.xpose.msra.mxu0 0.0
    %2551 = vmatprep.subr.mxu0 0.0
    %2552 = vmatpush2.xpose.msra.mxu0 0.0
    %2553 = vmatprep.subr.mxu0 0.0
    %2554 = vmatpush2.xpose.msra.mxu0 0.0
    %2555 = vmatprep.subr.mxu0 0.0
    %2556 = vmatpush2.xpose.msra.mxu0 0.0
    %2557 = vmatprep.subr.mxu0 0.0
    %2558 = vmatpush2.xpose.msra.mxu0 0.0
    %2559 = vmatprep.subr.mxu0 0.0
    %2560 = vmatpush2.xpose.msra.mxu0 0.0
    %2561 = vmatprep.subr.mxu0 0.0
    %2562 = vmatpush2.xpose.msra.mxu0 0.0
    %2563 = vmatprep.subr.mxu0 0.0
    %2564 = vmatpush2.xpose.msra.mxu0 0.0
    %2565 = vmatprep.subr.mxu0 0.0
    %2566 = vmatpush2.xpose.msra.mxu0 0.0
    %2567 = vmatprep.subr.mxu0 0.0
    %2568 = vmatpush2.xpose.msra.mxu0 0.0
    %2569 = vmatprep.subr.mxu0 0.0
    %2570 = vmatpush2.xpose.msra.mxu0 0.0
    %2571 = vmatprep.subr.mxu0 0.0
    %2572 = vmatpush2.xpose.msra.mxu0 0.0
    %2573 = vmatprep.subr.mxu0 0.0
    %2574 = vmatpush2.xpose.msra.mxu0 0.0
    %2575 = vmatprep.mubr.f32.mxu0 0.0
    %2576 = vmatmul.mubr.f32.gmra.mxu0 %v2506
    %v2577 = vpop.f32.mrf.mxu0
    %v2578 = vadd.f32 0.0, %v2577
    %v2579 = vpop.f32.mrf.mxu0
    %2580 = vdwg.mxu0
    %v2582 = vsel %vm473, %v2330, 0
    %v2585 = vsel %vm473, %v2416, 0
    %2587 = vmatprep.subr.mxu0 0.0
    %2588 = vmatpush1.xpose.msra.mxu0 0.0
    %2589 = vmatprep.subr.mxu0 0.0
    %2590 = vmatpush1.xpose.msra.mxu0 0.0
    %2591 = vmatprep.subr.mxu0 0.0
    %2592 = vmatpush1.xpose.msra.mxu0 0.0
    %2593 = vmatprep.subr.mxu0 0.0
    %2594 = vmatpush1.xpose.msra.mxu0 0.0
    %2595 = vmatprep.subr.mxu0 0.0
    %2596 = vmatpush1.xpose.msra.mxu0 0.0
    %2597 = vmatprep.subr.mxu0 0.0
    %2598 = vmatpush1.xpose.msra.mxu0 0.0
    %2599 = vmatprep.subr.mxu0 0.0
    %2600 = vmatpush1.xpose.msra.mxu0 0.0
    %2601 = vmatprep.subr.mxu0 0.0
    %2602 = vmatpush1.xpose.msra.mxu0 0.0
    %2603 = vmatprep.subr.mxu0 0.0
    %2604 = vmatpush1.xpose.msra.mxu0 0.0
    %2605 = vmatprep.subr.mxu0 0.0
    %2606 = vmatpush1.xpose.msra.mxu0 0.0
    %2607 = vmatprep.subr.mxu0 0.0
    %2608 = vmatpush1.xpose.msra.mxu0 0.0
    %2609 = vmatprep.subr.mxu0 0.0
    %2610 = vmatpush1.xpose.msra.mxu0 0.0
    %2611 = vmatprep.subr.mxu0 0.0
    %2612 = vmatpush1.xpose.msra.mxu0 0.0
    %2613 = vmatprep.subr.mxu0 0.0
    %2614 = vmatpush1.xpose.msra.mxu0 0.0
    %2615 = vmatprep.subr.mxu0 0.0
    %2616 = vmatpush1.xpose.msra.mxu0 0.0
    %2617 = vmatprep.subr.mxu0 0.0
    %2618 = vmatpush1.xpose.msra.mxu0 %v2585
    %2619 = vmatprep.subr.mxu0 0.0
    %2620 = vmatpush2.xpose.msra.mxu0 0.0
    %2621 = vmatprep.subr.mxu0 0.0
    %2622 = vmatpush2.xpose.msra.mxu0 0.0
    %2623 = vmatprep.subr.mxu0 0.0
    %2624 = vmatpush2.xpose.msra.mxu0 0.0
    %2625 = vmatprep.subr.mxu0 0.0
    %2626 = vmatpush2.xpose.msra.mxu0 0.0
    %2627 = vmatprep.subr.mxu0 0.0
    %2628 = vmatpush2.xpose.msra.mxu0 0.0
    %2629 = vmatprep.subr.mxu0 0.0
    %2630 = vmatpush2.xpose.msra.mxu0 0.0
    %2631 = vmatprep.subr.mxu0 0.0
    %2632 = vmatpush2.xpose.msra.mxu0 0.0
    %2633 = vmatprep.subr.mxu0 0.0
    %2634 = vmatpush2.xpose.msra.mxu0 0.0
    %2635 = vmatprep.subr.mxu0 0.0
    %2636 = vmatpush2.xpose.msra.mxu0 0.0
    %2637 = vmatprep.subr.mxu0 0.0
    %2638 = vmatpush2.xpose.msra.mxu0 0.0
    %2639 = vmatprep.subr.mxu0 0.0
    %2640 = vmatpush2.xpose.msra.mxu0 0.0
    %2641 = vmatprep.subr.mxu0 0.0
    %2642 = vmatpush2.xpose.msra.mxu0 0.0
    %2643 = vmatprep.subr.mxu0 0.0
    %2644 = vmatpush2.xpose.msra.mxu0 0.0
    %2645 = vmatprep.subr.mxu0 0.0
    %2646 = vmatpush2.xpose.msra.mxu0 0.0
    %2647 = vmatprep.subr.mxu0 0.0
    %2648 = vmatpush2.xpose.msra.mxu0 0.0
    %2649 = vmatprep.subr.mxu0 0.0
    %2650 = vmatpush2.xpose.msra.mxu0 0.0
    %2651 = vmatprep.mubr.f32.mxu0 0.0
    %2652 = vmatmul.mubr.f32.gmra.mxu0 %v2582
    %v2653 = vpop.f32.mrf.mxu0
    %v2654 = vadd.f32 0.0, %v2653
    %v2655 = vpop.f32.mrf.mxu0
    %2656 = vdwg.mxu0
    %v2657 = vsel %vm636, %v2578, -1e+09
    %v2658 = vsel %vm637, %v2654, -1e+09
    %v2659 = vsel %vm473, %v2657, -inf
    %2660 = vmax.xlane.f32.xlu0 %v2659
    %v2661 = vpop.xlane.xlu0 %2660
    %v2662 = vsel %vm473, %v2658, -inf
    %2663 = vmax.xlane.f32.xlu0 %v2662
    %v2664 = vpop.xlane.xlu0 %2663
    %v2665 = vsub.f32 %v2657, %v2661
    %v2666 = vsub.f32 %v2658, %v2664
    %v2667 = vmul.f32 %v2665, 1.442695
    %v2668 = vpow.pop %v2667
    %v2669 = vmul.f32 %v2666, 1.442695
    %v2670 = vpow.pop %v2669
    %v2671 = vsel %vm473, %v2668, 0.0
    %2672 = vadd.xlane.f32.xlu0 %v2671
    %v2673 = vpop.xlane.xlu0 %2672
    %v2674 = vsel %vm473, %v2670, 0.0
    %2675 = vadd.xlane.f32.xlu0 %v2674
    %v2676 = vpop.xlane.xlu0 %2675
    %v2677 = vrcp.pop %v2673
    %v2678 = vrcp.pop %v2676
    %v2679 = vmul.f32 %v2668, %v2677
    %v2680 = vmul.f32 %v2670, %v2678
    %v2682 = vsel %vm473, %v2679, 0
    %2684 = vmatprep.subr.mxu0 0.0
    %2685 = vmatpush1.msra.mxu0 0.0
    %2686 = vmatprep.subr.mxu0 0.0
    %2687 = vmatpush1.msra.mxu0 0.0
    %2688 = vmatprep.subr.mxu0 0.0
    %2689 = vmatpush1.msra.mxu0 0.0
    %2690 = vmatprep.subr.mxu0 0.0
    %2691 = vmatpush1.msra.mxu0 0.0
    %2692 = vmatprep.subr.mxu0 0.0
    %2693 = vmatpush1.msra.mxu0 0.0
    %2694 = vmatprep.subr.mxu0 0.0
    %2695 = vmatpush1.msra.mxu0 0.0
    %2696 = vmatprep.subr.mxu0 0.0
    %2697 = vmatpush1.msra.mxu0 0.0
    %2698 = vmatprep.subr.mxu0 0.0
    %2699 = vmatpush1.msra.mxu0 0.0
    %2700 = vmatprep.subr.mxu0 0.0
    %2701 = vmatpush1.msra.mxu0 0.0
    %2702 = vmatprep.subr.mxu0 0.0
    %2703 = vmatpush1.msra.mxu0 0.0
    %2704 = vmatprep.subr.mxu0 0.0
    %2705 = vmatpush1.msra.mxu0 0.0
    %2706 = vmatprep.subr.mxu0 0.0
    %2707 = vmatpush1.msra.mxu0 0.0
    %2708 = vmatprep.subr.mxu0 0.0
    %2709 = vmatpush1.msra.mxu0 0.0
    %2710 = vmatprep.subr.mxu0 0.0
    %2711 = vmatpush1.msra.mxu0 0.0
    %2712 = vmatprep.subr.mxu0 0.0
    %2713 = vmatpush1.msra.mxu0 0.0
    %2714 = vmatprep.subr.mxu0 0.0
    %2715 = vmatpush1.msra.mxu0 %v2497
    %2716 = vmatprep.subr.mxu0 0.0
    %2717 = vmatpush2.msra.mxu0 0.0
    %2718 = vmatprep.subr.mxu0 0.0
    %2719 = vmatpush2.msra.mxu0 0.0
    %2720 = vmatprep.subr.mxu0 0.0
    %2721 = vmatpush2.msra.mxu0 0.0
    %2722 = vmatprep.subr.mxu0 0.0
    %2723 = vmatpush2.msra.mxu0 0.0
    %2724 = vmatprep.subr.mxu0 0.0
    %2725 = vmatpush2.msra.mxu0 0.0
    %2726 = vmatprep.subr.mxu0 0.0
    %2727 = vmatpush2.msra.mxu0 0.0
    %2728 = vmatprep.subr.mxu0 0.0
    %2729 = vmatpush2.msra.mxu0 0.0
    %2730 = vmatprep.subr.mxu0 0.0
    %2731 = vmatpush2.msra.mxu0 0.0
    %2732 = vmatprep.subr.mxu0 0.0
    %2733 = vmatpush2.msra.mxu0 0.0
    %2734 = vmatprep.subr.mxu0 0.0
    %2735 = vmatpush2.msra.mxu0 0.0
    %2736 = vmatprep.subr.mxu0 0.0
    %2737 = vmatpush2.msra.mxu0 0.0
    %2738 = vmatprep.subr.mxu0 0.0
    %2739 = vmatpush2.msra.mxu0 0.0
    %2740 = vmatprep.subr.mxu0 0.0
    %2741 = vmatpush2.msra.mxu0 0.0
    %2742 = vmatprep.subr.mxu0 0.0
    %2743 = vmatpush2.msra.mxu0 0.0
    %2744 = vmatprep.subr.mxu0 0.0
    %2745 = vmatpush2.msra.mxu0 0.0
    %2746 = vmatprep.subr.mxu0 0.0
    %2747 = vmatpush2.msra.mxu0 0.0
    %2748 = vmatprep.mubr.f32.mxu0 0.0
    %2749 = vmatmul.mubr.f32.gmra.mxu0 %v2682
    %v2750 = vpop.f32.mrf.mxu0
    %v2751 = vadd.f32 0.0, %v2750
    %v2752 = vpop.f32.mrf.mxu0
    %2753 = vdwg.mxu0
    %v2755 = vsel %vm473, %v2680, 0
    %2757 = vmatprep.subr.mxu0 0.0
    %2758 = vmatpush1.msra.mxu0 0.0
    %2759 = vmatprep.subr.mxu0 0.0
    %2760 = vmatpush1.msra.mxu0 0.0
    %2761 = vmatprep.subr.mxu0 0.0
    %2762 = vmatpush1.msra.mxu0 0.0
    %2763 = vmatprep.subr.mxu0 0.0
    %2764 = vmatpush1.msra.mxu0 0.0
    %2765 = vmatprep.subr.mxu0 0.0
    %2766 = vmatpush1.msra.mxu0 0.0
    %2767 = vmatprep.subr.mxu0 0.0
    %2768 = vmatpush1.msra.mxu0 0.0
    %2769 = vmatprep.subr.mxu0 0.0
    %2770 = vmatpush1.msra.mxu0 0.0
    %2771 = vmatprep.subr.mxu0 0.0
    %2772 = vmatpush1.msra.mxu0 0.0
    %2773 = vmatprep.subr.mxu0 0.0
    %2774 = vmatpush1.msra.mxu0 0.0
    %2775 = vmatprep.subr.mxu0 0.0
    %2776 = vmatpush1.msra.mxu0 0.0
    %2777 = vmatprep.subr.mxu0 0.0
    %2778 = vmatpush1.msra.mxu0 0.0
    %2779 = vmatprep.subr.mxu0 0.0
    %2780 = vmatpush1.msra.mxu0 0.0
    %2781 = vmatprep.subr.mxu0 0.0
    %2782 = vmatpush1.msra.mxu0 0.0
    %2783 = vmatprep.subr.mxu0 0.0
    %2784 = vmatpush1.msra.mxu0 0.0
    %2785 = vmatprep.subr.mxu0 0.0
    %2786 = vmatpush1.msra.mxu0 0.0
    %2787 = vmatprep.subr.mxu0 0.0
    %2788 = vmatpush1.msra.mxu0 %v2502
    %2789 = vmatprep.subr.mxu0 0.0
    %2790 = vmatpush2.msra.mxu0 0.0
    %2791 = vmatprep.subr.mxu0 0.0
    %2792 = vmatpush2.msra.mxu0 0.0
    %2793 = vmatprep.subr.mxu0 0.0
    %2794 = vmatpush2.msra.mxu0 0.0
    %2795 = vmatprep.subr.mxu0 0.0
    %2796 = vmatpush2.msra.mxu0 0.0
    %2797 = vmatprep.subr.mxu0 0.0
    %2798 = vmatpush2.msra.mxu0 0.0
    %2799 = vmatprep.subr.mxu0 0.0
    %2800 = vmatpush2.msra.mxu0 0.0
    %2801 = vmatprep.subr.mxu0 0.0
    %2802 = vmatpush2.msra.mxu0 0.0
    %2803 = vmatprep.subr.mxu0 0.0
    %2804 = vmatpush2.msra.mxu0 0.0
    %2805 = vmatprep.subr.mxu0 0.0
    %2806 = vmatpush2.msra.mxu0 0.0
    %2807 = vmatprep.subr.mxu0 0.0
    %2808 = vmatpush2.msra.mxu0 0.0
    %2809 = vmatprep.subr.mxu0 0.0
    %2810 = vmatpush2.msra.mxu0 0.0
    %2811 = vmatprep.subr.mxu0 0.0
    %2812 = vmatpush2.msra.mxu0 0.0
    %2813 = vmatprep.subr.mxu0 0.0
    %2814 = vmatpush2.msra.mxu0 0.0
    %2815 = vmatprep.subr.mxu0 0.0
    %2816 = vmatpush2.msra.mxu0 0.0
    %2817 = vmatprep.subr.mxu0 0.0
    %2818 = vmatpush2.msra.mxu0 0.0
    %2819 = vmatprep.subr.mxu0 0.0
    %2820 = vmatpush2.msra.mxu0 0.0
    %2821 = vmatprep.mubr.f32.mxu0 0.0
    %2822 = vmatmul.mubr.f32.gmra.mxu0 %v2755
    %v2823 = vpop.f32.mrf.mxu0
    %v2824 = vadd.f32 0.0, %v2823
    %v2825 = vpop.f32.mrf.mxu0
    %2826 = vdwg.mxu0
    %2827 = vrot.lane.b32.xlu0 %v2325, 120
    %v2828 = vpop.permute.xlu0 %2827
    %2829 = vrot.lane.b32.xlu0 %v2411, 120
    %v2830 = vpop.permute.xlu0 %2829
    %v2831 = vsel %vm473, %v2828, 0
    %v2833 = vsel %vm473, %v2830, 0
    %2835 = vmatprep.subr.mxu0 0.0
    %2836 = vmatpush1.xpose.msra.mxu0 0.0
    %2837 = vmatprep.subr.mxu0 0.0
    %2838 = vmatpush1.xpose.msra.mxu0 0.0
    %2839 = vmatprep.subr.mxu0 0.0
    %2840 = vmatpush1.xpose.msra.mxu0 0.0
    %2841 = vmatprep.subr.mxu0 0.0
    %2842 = vmatpush1.xpose.msra.mxu0 0.0
    %2843 = vmatprep.subr.mxu0 0.0
    %2844 = vmatpush1.xpose.msra.mxu0 0.0
    %2845 = vmatprep.subr.mxu0 0.0
    %2846 = vmatpush1.xpose.msra.mxu0 0.0
    %2847 = vmatprep.subr.mxu0 0.0
    %2848 = vmatpush1.xpose.msra.mxu0 0.0
    %2849 = vmatprep.subr.mxu0 0.0
    %2850 = vmatpush1.xpose.msra.mxu0 0.0
    %2851 = vmatprep.subr.mxu0 0.0
    %2852 = vmatpush1.xpose.msra.mxu0 0.0
    %2853 = vmatprep.subr.mxu0 0.0
    %2854 = vmatpush1.xpose.msra.mxu0 0.0
    %2855 = vmatprep.subr.mxu0 0.0
    %2856 = vmatpush1.xpose.msra.mxu0 0.0
    %2857 = vmatprep.subr.mxu0 0.0
    %2858 = vmatpush1.xpose.msra.mxu0 0.0
    %2859 = vmatprep.subr.mxu0 0.0
    %2860 = vmatpush1.xpose.msra.mxu0 0.0
    %2861 = vmatprep.subr.mxu0 0.0
    %2862 = vmatpush1.xpose.msra.mxu0 0.0
    %2863 = vmatprep.subr.mxu0 0.0
    %2864 = vmatpush1.xpose.msra.mxu0 0.0
    %2865 = vmatprep.subr.mxu0 0.0
    %2866 = vmatpush1.xpose.msra.mxu0 %v2833
    %2867 = vmatprep.subr.mxu0 0.0
    %2868 = vmatpush2.xpose.msra.mxu0 0.0
    %2869 = vmatprep.subr.mxu0 0.0
    %2870 = vmatpush2.xpose.msra.mxu0 0.0
    %2871 = vmatprep.subr.mxu0 0.0
    %2872 = vmatpush2.xpose.msra.mxu0 0.0
    %2873 = vmatprep.subr.mxu0 0.0
    %2874 = vmatpush2.xpose.msra.mxu0 0.0
    %2875 = vmatprep.subr.mxu0 0.0
    %2876 = vmatpush2.xpose.msra.mxu0 0.0
    %2877 = vmatprep.subr.mxu0 0.0
    %2878 = vmatpush2.xpose.msra.mxu0 0.0
    %2879 = vmatprep.subr.mxu0 0.0
    %2880 = vmatpush2.xpose.msra.mxu0 0.0
    %2881 = vmatprep.subr.mxu0 0.0
    %2882 = vmatpush2.xpose.msra.mxu0 0.0
    %2883 = vmatprep.subr.mxu0 0.0
    %2884 = vmatpush2.xpose.msra.mxu0 0.0
    %2885 = vmatprep.subr.mxu0 0.0
    %2886 = vmatpush2.xpose.msra.mxu0 0.0
    %2887 = vmatprep.subr.mxu0 0.0
    %2888 = vmatpush2.xpose.msra.mxu0 0.0
    %2889 = vmatprep.subr.mxu0 0.0
    %2890 = vmatpush2.xpose.msra.mxu0 0.0
    %2891 = vmatprep.subr.mxu0 0.0
    %2892 = vmatpush2.xpose.msra.mxu0 0.0
    %2893 = vmatprep.subr.mxu0 0.0
    %2894 = vmatpush2.xpose.msra.mxu0 0.0
    %2895 = vmatprep.subr.mxu0 0.0
    %2896 = vmatpush2.xpose.msra.mxu0 0.0
    %2897 = vmatprep.subr.mxu0 0.0
    %2898 = vmatpush2.xpose.msra.mxu0 0.0
    %2899 = vmatprep.mubr.f32.mxu0 0.0
    %2900 = vmatmul.mubr.f32.gmra.mxu0 %v2831
    %v2901 = vpop.f32.mrf.mxu0
    %v2902 = vadd.f32 0.0, %v2901
    %v2903 = vpop.f32.mrf.mxu0
    %2904 = vdwg.mxu0
    %2905 = vrot.lane.b32.xlu0 %v2330, 120
    %v2906 = vpop.permute.xlu0 %2905
    %2907 = vrot.lane.b32.xlu0 %v2416, 120
    %v2908 = vpop.permute.xlu0 %2907
    %v2909 = vsel %vm473, %v2906, 0
    %v2911 = vsel %vm473, %v2908, 0
    %2913 = vmatprep.subr.mxu0 0.0
    %2914 = vmatpush1.xpose.msra.mxu0 0.0
    %2915 = vmatprep.subr.mxu0 0.0
    %2916 = vmatpush1.xpose.msra.mxu0 0.0
    %2917 = vmatprep.subr.mxu0 0.0
    %2918 = vmatpush1.xpose.msra.mxu0 0.0
    %2919 = vmatprep.subr.mxu0 0.0
    %2920 = vmatpush1.xpose.msra.mxu0 0.0
    %2921 = vmatprep.subr.mxu0 0.0
    %2922 = vmatpush1.xpose.msra.mxu0 0.0
    %2923 = vmatprep.subr.mxu0 0.0
    %2924 = vmatpush1.xpose.msra.mxu0 0.0
    %2925 = vmatprep.subr.mxu0 0.0
    %2926 = vmatpush1.xpose.msra.mxu0 0.0
    %2927 = vmatprep.subr.mxu0 0.0
    %2928 = vmatpush1.xpose.msra.mxu0 0.0
    %2929 = vmatprep.subr.mxu0 0.0
    %2930 = vmatpush1.xpose.msra.mxu0 0.0
    %2931 = vmatprep.subr.mxu0 0.0
    %2932 = vmatpush1.xpose.msra.mxu0 0.0
    %2933 = vmatprep.subr.mxu0 0.0
    %2934 = vmatpush1.xpose.msra.mxu0 0.0
    %2935 = vmatprep.subr.mxu0 0.0
    %2936 = vmatpush1.xpose.msra.mxu0 0.0
    %2937 = vmatprep.subr.mxu0 0.0
    %2938 = vmatpush1.xpose.msra.mxu0 0.0
    %2939 = vmatprep.subr.mxu0 0.0
    %2940 = vmatpush1.xpose.msra.mxu0 0.0
    %2941 = vmatprep.subr.mxu0 0.0
    %2942 = vmatpush1.xpose.msra.mxu0 0.0
    %2943 = vmatprep.subr.mxu0 0.0
    %2944 = vmatpush1.xpose.msra.mxu0 %v2911
    %2945 = vmatprep.subr.mxu0 0.0
    %2946 = vmatpush2.xpose.msra.mxu0 0.0
    %2947 = vmatprep.subr.mxu0 0.0
    %2948 = vmatpush2.xpose.msra.mxu0 0.0
    %2949 = vmatprep.subr.mxu0 0.0
    %2950 = vmatpush2.xpose.msra.mxu0 0.0
    %2951 = vmatprep.subr.mxu0 0.0
    %2952 = vmatpush2.xpose.msra.mxu0 0.0
    %2953 = vmatprep.subr.mxu0 0.0
    %2954 = vmatpush2.xpose.msra.mxu0 0.0
    %2955 = vmatprep.subr.mxu0 0.0
    %2956 = vmatpush2.xpose.msra.mxu0 0.0
    %2957 = vmatprep.subr.mxu0 0.0
    %2958 = vmatpush2.xpose.msra.mxu0 0.0
    %2959 = vmatprep.subr.mxu0 0.0
    %2960 = vmatpush2.xpose.msra.mxu0 0.0
    %2961 = vmatprep.subr.mxu0 0.0
    %2962 = vmatpush2.xpose.msra.mxu0 0.0
    %2963 = vmatprep.subr.mxu0 0.0
    %2964 = vmatpush2.xpose.msra.mxu0 0.0
    %2965 = vmatprep.subr.mxu0 0.0
    %2966 = vmatpush2.xpose.msra.mxu0 0.0
    %2967 = vmatprep.subr.mxu0 0.0
    %2968 = vmatpush2.xpose.msra.mxu0 0.0
    %2969 = vmatprep.subr.mxu0 0.0
    %2970 = vmatpush2.xpose.msra.mxu0 0.0
    %2971 = vmatprep.subr.mxu0 0.0
    %2972 = vmatpush2.xpose.msra.mxu0 0.0
    %2973 = vmatprep.subr.mxu0 0.0
    %2974 = vmatpush2.xpose.msra.mxu0 0.0
    %2975 = vmatprep.subr.mxu0 0.0
    %2976 = vmatpush2.xpose.msra.mxu0 0.0
    %2977 = vmatprep.mubr.f32.mxu0 0.0
    %2978 = vmatmul.mubr.f32.gmra.mxu0 %v2909
    %v2979 = vpop.f32.mrf.mxu0
    %v2980 = vadd.f32 0.0, %v2979
    %v2981 = vpop.f32.mrf.mxu0
    %2982 = vdwg.mxu0
    %v2983 = vsel %vm636, %v2902, -1e+09
    %v2984 = vsel %vm637, %v2980, -1e+09
    %v2985 = vsel %vm473, %v2983, -inf
    %2986 = vmax.xlane.f32.xlu0 %v2985
    %v2987 = vpop.xlane.xlu0 %2986
    %v2988 = vsel %vm473, %v2984, -inf
    %2989 = vmax.xlane.f32.xlu0 %v2988
    %v2990 = vpop.xlane.xlu0 %2989
    %v2991 = vsub.f32 %v2983, %v2987
    %v2992 = vsub.f32 %v2984, %v2990
    %v2993 = vmul.f32 %v2991, 1.442695
    %v2994 = vpow.pop %v2993
    %v2995 = vmul.f32 %v2992, 1.442695
    %v2996 = vpow.pop %v2995
    %v2997 = vsel %vm473, %v2994, 0.0
    %2998 = vadd.xlane.f32.xlu0 %v2997
    %v2999 = vpop.xlane.xlu0 %2998
    %v3000 = vsel %vm473, %v2996, 0.0
    %3001 = vadd.xlane.f32.xlu0 %v3000
    %v3002 = vpop.xlane.xlu0 %3001
    %v3003 = vrcp.pop %v2999
    %v3004 = vrcp.pop %v3002
    %v3005 = vmul.f32 %v2994, %v3003
    %v3006 = vmul.f32 %v2996, %v3004
    %3008 = vrot.lane.b32.xlu0 %v2497, 120
    %v3009 = vpop.permute.xlu0 %3008
    %v3012 = vsel %vm473, %v3005, 0
    %3014 = vmatprep.subr.mxu0 0.0
    %3015 = vmatpush1.msra.mxu0 0.0
    %3016 = vmatprep.subr.mxu0 0.0
    %3017 = vmatpush1.msra.mxu0 0.0
    %3018 = vmatprep.subr.mxu0 0.0
    %3019 = vmatpush1.msra.mxu0 0.0
    %3020 = vmatprep.subr.mxu0 0.0
    %3021 = vmatpush1.msra.mxu0 0.0
    %3022 = vmatprep.subr.mxu0 0.0
    %3023 = vmatpush1.msra.mxu0 0.0
    %3024 = vmatprep.subr.mxu0 0.0
    %3025 = vmatpush1.msra.mxu0 0.0
    %3026 = vmatprep.subr.mxu0 0.0
    %3027 = vmatpush1.msra.mxu0 0.0
    %3028 = vmatprep.subr.mxu0 0.0
    %3029 = vmatpush1.msra.mxu0 0.0
    %3030 = vmatprep.subr.mxu0 0.0
    %3031 = vmatpush1.msra.mxu0 0.0
    %3032 = vmatprep.subr.mxu0 0.0
    %3033 = vmatpush1.msra.mxu0 0.0
    %3034 = vmatprep.subr.mxu0 0.0
    %3035 = vmatpush1.msra.mxu0 0.0
    %3036 = vmatprep.subr.mxu0 0.0
    %3037 = vmatpush1.msra.mxu0 0.0
    %3038 = vmatprep.subr.mxu0 0.0
    %3039 = vmatpush1.msra.mxu0 0.0
    %3040 = vmatprep.subr.mxu0 0.0
    %3041 = vmatpush1.msra.mxu0 0.0
    %3042 = vmatprep.subr.mxu0 0.0
    %3043 = vmatpush1.msra.mxu0 0.0
    %3044 = vmatprep.subr.mxu0 0.0
    %3045 = vmatpush1.msra.mxu0 %v3009
    %3046 = vmatprep.subr.mxu0 0.0
    %3047 = vmatpush2.msra.mxu0 0.0
    %3048 = vmatprep.subr.mxu0 0.0
    %3049 = vmatpush2.msra.mxu0 0.0
    %3050 = vmatprep.subr.mxu0 0.0
    %3051 = vmatpush2.msra.mxu0 0.0
    %3052 = vmatprep.subr.mxu0 0.0
    %3053 = vmatpush2.msra.mxu0 0.0
    %3054 = vmatprep.subr.mxu0 0.0
    %3055 = vmatpush2.msra.mxu0 0.0
    %3056 = vmatprep.subr.mxu0 0.0
    %3057 = vmatpush2.msra.mxu0 0.0
    %3058 = vmatprep.subr.mxu0 0.0
    %3059 = vmatpush2.msra.mxu0 0.0
    %3060 = vmatprep.subr.mxu0 0.0
    %3061 = vmatpush2.msra.mxu0 0.0
    %3062 = vmatprep.subr.mxu0 0.0
    %3063 = vmatpush2.msra.mxu0 0.0
    %3064 = vmatprep.subr.mxu0 0.0
    %3065 = vmatpush2.msra.mxu0 0.0
    %3066 = vmatprep.subr.mxu0 0.0
    %3067 = vmatpush2.msra.mxu0 0.0
    %3068 = vmatprep.subr.mxu0 0.0
    %3069 = vmatpush2.msra.mxu0 0.0
    %3070 = vmatprep.subr.mxu0 0.0
    %3071 = vmatpush2.msra.mxu0 0.0
    %3072 = vmatprep.subr.mxu0 0.0
    %3073 = vmatpush2.msra.mxu0 0.0
    %3074 = vmatprep.subr.mxu0 0.0
    %3075 = vmatpush2.msra.mxu0 0.0
    %3076 = vmatprep.subr.mxu0 0.0
    %3077 = vmatpush2.msra.mxu0 0.0
    %3078 = vmatprep.mubr.f32.mxu0 0.0
    %3079 = vmatmul.mubr.f32.gmra.mxu0 %v3012
    %v3080 = vpop.f32.mrf.mxu0
    %v3081 = vadd.f32 0.0, %v3080
    %v3082 = vpop.f32.mrf.mxu0
    %3083 = vdwg.mxu0
    %3085 = vrot.lane.b32.xlu0 %v2502, 120
    %v3086 = vpop.permute.xlu0 %3085
    %v3089 = vsel %vm473, %v3006, 0
    %3091 = vmatprep.subr.mxu0 0.0
    %3092 = vmatpush1.msra.mxu0 0.0
    %3093 = vmatprep.subr.mxu0 0.0
    %3094 = vmatpush1.msra.mxu0 0.0
    %3095 = vmatprep.subr.mxu0 0.0
    %3096 = vmatpush1.msra.mxu0 0.0
    %3097 = vmatprep.subr.mxu0 0.0
    %3098 = vmatpush1.msra.mxu0 0.0
    %3099 = vmatprep.subr.mxu0 0.0
    %3100 = vmatpush1.msra.mxu0 0.0
    %3101 = vmatprep.subr.mxu0 0.0
    %3102 = vmatpush1.msra.mxu0 0.0
    %3103 = vmatprep.subr.mxu0 0.0
    %3104 = vmatpush1.msra.mxu0 0.0
    %3105 = vmatprep.subr.mxu0 0.0
    %3106 = vmatpush1.msra.mxu0 0.0
    %3107 = vmatprep.subr.mxu0 0.0
    %3108 = vmatpush1.msra.mxu0 0.0
    %3109 = vmatprep.subr.mxu0 0.0
    %3110 = vmatpush1.msra.mxu0 0.0
    %3111 = vmatprep.subr.mxu0 0.0
    %3112 = vmatpush1.msra.mxu0 0.0
    %3113 = vmatprep.subr.mxu0 0.0
    %3114 = vmatpush1.msra.mxu0 0.0
    %3115 = vmatprep.subr.mxu0 0.0
    %3116 = vmatpush1.msra.mxu0 0.0
    %3117 = vmatprep.subr.mxu0 0.0
    %3118 = vmatpush1.msra.mxu0 0.0
    %3119 = vmatprep.subr.mxu0 0.0
    %3120 = vmatpush1.msra.mxu0 0.0
    %3121 = vmatprep.subr.mxu0 0.0
    %3122 = vmatpush1.msra.mxu0 %v3086
    %3123 = vmatprep.subr.mxu0 0.0
    %3124 = vmatpush2.msra.mxu0 0.0
    %3125 = vmatprep.subr.mxu0 0.0
    %3126 = vmatpush2.msra.mxu0 0.0
    %3127 = vmatprep.subr.mxu0 0.0
    %3128 = vmatpush2.msra.mxu0 0.0
    %3129 = vmatprep.subr.mxu0 0.0
    %3130 = vmatpush2.msra.mxu0 0.0
    %3131 = vmatprep.subr.mxu0 0.0
    %3132 = vmatpush2.msra.mxu0 0.0
    %3133 = vmatprep.subr.mxu0 0.0
    %3134 = vmatpush2.msra.mxu0 0.0
    %3135 = vmatprep.subr.mxu0 0.0
    %3136 = vmatpush2.msra.mxu0 0.0
    %3137 = vmatprep.subr.mxu0 0.0
    %3138 = vmatpush2.msra.mxu0 0.0
    %3139 = vmatprep.subr.mxu0 0.0
    %3140 = vmatpush2.msra.mxu0 0.0
    %3141 = vmatprep.subr.mxu0 0.0
    %3142 = vmatpush2.msra.mxu0 0.0
    %3143 = vmatprep.subr.mxu0 0.0
    %3144 = vmatpush2.msra.mxu0 0.0
    %3145 = vmatprep.subr.mxu0 0.0
    %3146 = vmatpush2.msra.mxu0 0.0
    %3147 = vmatprep.subr.mxu0 0.0
    %3148 = vmatpush2.msra.mxu0 0.0
    %3149 = vmatprep.subr.mxu0 0.0
    %3150 = vmatpush2.msra.mxu0 0.0
    %3151 = vmatprep.subr.mxu0 0.0
    %3152 = vmatpush2.msra.mxu0 0.0
    %3153 = vmatprep.subr.mxu0 0.0
    %3154 = vmatpush2.msra.mxu0 0.0
    %3155 = vmatprep.mubr.f32.mxu0 0.0
    %3156 = vmatmul.mubr.f32.gmra.mxu0 %v3089
    %v3157 = vpop.f32.mrf.mxu0
    %v3158 = vadd.f32 0.0, %v3157
    %v3159 = vpop.f32.mrf.mxu0
    %3160 = vdwg.mxu0
    %3161 = vrot.lane.b32.xlu0 %v2325, 112
    %v3162 = vpop.permute.xlu0 %3161
    %3163 = vrot.lane.b32.xlu0 %v2411, 112
    %v3164 = vpop.permute.xlu0 %3163
    %v3165 = vsel %vm473, %v3162, 0
    %v3167 = vsel %vm473, %v3164, 0
    %3169 = vmatprep.subr.mxu0 0.0
    %3170 = vmatpush1.xpose.msra.mxu0 0.0
    %3171 = vmatprep.subr.mxu0 0.0
    %3172 = vmatpush1.xpose.msra.mxu0 0.0
    %3173 = vmatprep.subr.mxu0 0.0
    %3174 = vmatpush1.xpose.msra.mxu0 0.0
    %3175 = vmatprep.subr.mxu0 0.0
    %3176 = vmatpush1.xpose.msra.mxu0 0.0
    %3177 = vmatprep.subr.mxu0 0.0
    %3178 = vmatpush1.xpose.msra.mxu0 0.0
    %3179 = vmatprep.subr.mxu0 0.0
    %3180 = vmatpush1.xpose.msra.mxu0 0.0
    %3181 = vmatprep.subr.mxu0 0.0
    %3182 = vmatpush1.xpose.msra.mxu0 0.0
    %3183 = vmatprep.subr.mxu0 0.0
    %3184 = vmatpush1.xpose.msra.mxu0 0.0
    %3185 = vmatprep.subr.mxu0 0.0
    %3186 = vmatpush1.xpose.msra.mxu0 0.0
    %3187 = vmatprep.subr.mxu0 0.0
    %3188 = vmatpush1.xpose.msra.mxu0 0.0
    %3189 = vmatprep.subr.mxu0 0.0
    %3190 = vmatpush1.xpose.msra.mxu0 0.0
    %3191 = vmatprep.subr.mxu0 0.0
    %3192 = vmatpush1.xpose.msra.mxu0 0.0
    %3193 = vmatprep.subr.mxu0 0.0
    %3194 = vmatpush1.xpose.msra.mxu0 0.0
    %3195 = vmatprep.subr.mxu0 0.0
    %3196 = vmatpush1.xpose.msra.mxu0 0.0
    %3197 = vmatprep.subr.mxu0 0.0
    %3198 = vmatpush1.xpose.msra.mxu0 0.0
    %3199 = vmatprep.subr.mxu0 0.0
    %3200 = vmatpush1.xpose.msra.mxu0 %v3167
    %3201 = vmatprep.subr.mxu0 0.0
    %3202 = vmatpush2.xpose.msra.mxu0 0.0
    %3203 = vmatprep.subr.mxu0 0.0
    %3204 = vmatpush2.xpose.msra.mxu0 0.0
    %3205 = vmatprep.subr.mxu0 0.0
    %3206 = vmatpush2.xpose.msra.mxu0 0.0
    %3207 = vmatprep.subr.mxu0 0.0
    %3208 = vmatpush2.xpose.msra.mxu0 0.0
    %3209 = vmatprep.subr.mxu0 0.0
    %3210 = vmatpush2.xpose.msra.mxu0 0.0
    %3211 = vmatprep.subr.mxu0 0.0
    %3212 = vmatpush2.xpose.msra.mxu0 0.0
    %3213 = vmatprep.subr.mxu0 0.0
    %3214 = vmatpush2.xpose.msra.mxu0 0.0
    %3215 = vmatprep.subr.mxu0 0.0
    %3216 = vmatpush2.xpose.msra.mxu0 0.0
    %3217 = vmatprep.subr.mxu0 0.0
    %3218 = vmatpush2.xpose.msra.mxu0 0.0
    %3219 = vmatprep.subr.mxu0 0.0
    %3220 = vmatpush2.xpose.msra.mxu0 0.0
    %3221 = vmatprep.subr.mxu0 0.0
    %3222 = vmatpush2.xpose.msra.mxu0 0.0
    %3223 = vmatprep.subr.mxu0 0.0
    %3224 = vmatpush2.xpose.msra.mxu0 0.0
    %3225 = vmatprep.subr.mxu0 0.0
    %3226 = vmatpush2.xpose.msra.mxu0 0.0
    %3227 = vmatprep.subr.mxu0 0.0
    %3228 = vmatpush2.xpose.msra.mxu0 0.0
    %3229 = vmatprep.subr.mxu0 0.0
    %3230 = vmatpush2.xpose.msra.mxu0 0.0
    %3231 = vmatprep.subr.mxu0 0.0
    %3232 = vmatpush2.xpose.msra.mxu0 0.0
    %3233 = vmatprep.mubr.f32.mxu0 0.0
    %3234 = vmatmul.mubr.f32.gmra.mxu0 %v3165
    %v3235 = vpop.f32.mrf.mxu0
    %v3236 = vadd.f32 0.0, %v3235
    %v3237 = vpop.f32.mrf.mxu0
    %3238 = vdwg.mxu0
    %3239 = vrot.lane.b32.xlu0 %v2330, 112
    %v3240 = vpop.permute.xlu0 %3239
    %3241 = vrot.lane.b32.xlu0 %v2416, 112
    %v3242 = vpop.permute.xlu0 %3241
    %v3243 = vsel %vm473, %v3240, 0
    %v3245 = vsel %vm473, %v3242, 0
    %3247 = vmatprep.subr.mxu0 0.0
    %3248 = vmatpush1.xpose.msra.mxu0 0.0
    %3249 = vmatprep.subr.mxu0 0.0
    %3250 = vmatpush1.xpose.msra.mxu0 0.0
    %3251 = vmatprep.subr.mxu0 0.0
    %3252 = vmatpush1.xpose.msra.mxu0 0.0
    %3253 = vmatprep.subr.mxu0 0.0
    %3254 = vmatpush1.xpose.msra.mxu0 0.0
    %3255 = vmatprep.subr.mxu0 0.0
    %3256 = vmatpush1.xpose.msra.mxu0 0.0
    %3257 = vmatprep.subr.mxu0 0.0
    %3258 = vmatpush1.xpose.msra.mxu0 0.0
    %3259 = vmatprep.subr.mxu0 0.0
    %3260 = vmatpush1.xpose.msra.mxu0 0.0
    %3261 = vmatprep.subr.mxu0 0.0
    %3262 = vmatpush1.xpose.msra.mxu0 0.0
    %3263 = vmatprep.subr.mxu0 0.0
    %3264 = vmatpush1.xpose.msra.mxu0 0.0
    %3265 = vmatprep.subr.mxu0 0.0
    %3266 = vmatpush1.xpose.msra.mxu0 0.0
    %3267 = vmatprep.subr.mxu0 0.0
    %3268 = vmatpush1.xpose.msra.mxu0 0.0
    %3269 = vmatprep.subr.mxu0 0.0
    %3270 = vmatpush1.xpose.msra.mxu0 0.0
    %3271 = vmatprep.subr.mxu0 0.0
    %3272 = vmatpush1.xpose.msra.mxu0 0.0
    %3273 = vmatprep.subr.mxu0 0.0
    %3274 = vmatpush1.xpose.msra.mxu0 0.0
    %3275 = vmatprep.subr.mxu0 0.0
    %3276 = vmatpush1.xpose.msra.mxu0 0.0
    %3277 = vmatprep.subr.mxu0 0.0
    %3278 = vmatpush1.xpose.msra.mxu0 %v3245
    %3279 = vmatprep.subr.mxu0 0.0
    %3280 = vmatpush2.xpose.msra.mxu0 0.0
    %3281 = vmatprep.subr.mxu0 0.0
    %3282 = vmatpush2.xpose.msra.mxu0 0.0
    %3283 = vmatprep.subr.mxu0 0.0
    %3284 = vmatpush2.xpose.msra.mxu0 0.0
    %3285 = vmatprep.subr.mxu0 0.0
    %3286 = vmatpush2.xpose.msra.mxu0 0.0
    %3287 = vmatprep.subr.mxu0 0.0
    %3288 = vmatpush2.xpose.msra.mxu0 0.0
    %3289 = vmatprep.subr.mxu0 0.0
    %3290 = vmatpush2.xpose.msra.mxu0 0.0
    %3291 = vmatprep.subr.mxu0 0.0
    %3292 = vmatpush2.xpose.msra.mxu0 0.0
    %3293 = vmatprep.subr.mxu0 0.0
    %3294 = vmatpush2.xpose.msra.mxu0 0.0
    %3295 = vmatprep.subr.mxu0 0.0
    %3296 = vmatpush2.xpose.msra.mxu0 0.0
    %3297 = vmatprep.subr.mxu0 0.0
    %3298 = vmatpush2.xpose.msra.mxu0 0.0
    %3299 = vmatprep.subr.mxu0 0.0
    %3300 = vmatpush2.xpose.msra.mxu0 0.0
    %3301 = vmatprep.subr.mxu0 0.0
    %3302 = vmatpush2.xpose.msra.mxu0 0.0
    %3303 = vmatprep.subr.mxu0 0.0
    %3304 = vmatpush2.xpose.msra.mxu0 0.0
    %3305 = vmatprep.subr.mxu0 0.0
    %3306 = vmatpush2.xpose.msra.mxu0 0.0
    %3307 = vmatprep.subr.mxu0 0.0
    %3308 = vmatpush2.xpose.msra.mxu0 0.0
    %3309 = vmatprep.subr.mxu0 0.0
    %3310 = vmatpush2.xpose.msra.mxu0 0.0
    %3311 = vmatprep.mubr.f32.mxu0 0.0
    %3312 = vmatmul.mubr.f32.gmra.mxu0 %v3243
    %v3313 = vpop.f32.mrf.mxu0
    %v3314 = vadd.f32 0.0, %v3313
    %v3315 = vpop.f32.mrf.mxu0
    %3316 = vdwg.mxu0
    %v3317 = vsel %vm636, %v3236, -1e+09
    %v3318 = vsel %vm637, %v3314, -1e+09
    %v3319 = vsel %vm473, %v3317, -inf
    %3320 = vmax.xlane.f32.xlu0 %v3319
    %v3321 = vpop.xlane.xlu0 %3320
    %v3322 = vsel %vm473, %v3318, -inf
    %3323 = vmax.xlane.f32.xlu0 %v3322
    %v3324 = vpop.xlane.xlu0 %3323
    %v3325 = vsub.f32 %v3317, %v3321
    %v3326 = vsub.f32 %v3318, %v3324
    %v3327 = vmul.f32 %v3325, 1.442695
    %v3328 = vpow.pop %v3327
    %v3329 = vmul.f32 %v3326, 1.442695
    %v3330 = vpow.pop %v3329
    %v3331 = vsel %vm473, %v3328, 0.0
    %3332 = vadd.xlane.f32.xlu0 %v3331
    %v3333 = vpop.xlane.xlu0 %3332
    %v3334 = vsel %vm473, %v3330, 0.0
    %3335 = vadd.xlane.f32.xlu0 %v3334
    %v3336 = vpop.xlane.xlu0 %3335
    %v3337 = vrcp.pop %v3333
    %v3338 = vrcp.pop %v3336
    %v3339 = vmul.f32 %v3328, %v3337
    %v3340 = vmul.f32 %v3330, %v3338
    %3341 = vrot.lane.b32.xlu0 %v2497, 112
    %v3342 = vpop.permute.xlu0 %3341
    %v3345 = vsel %vm473, %v3339, 0
    %3347 = vmatprep.subr.mxu0 0.0
    %3348 = vmatpush1.msra.mxu0 0.0
    %3349 = vmatprep.subr.mxu0 0.0
    %3350 = vmatpush1.msra.mxu0 0.0
    %3351 = vmatprep.subr.mxu0 0.0
    %3352 = vmatpush1.msra.mxu0 0.0
    %3353 = vmatprep.subr.mxu0 0.0
    %3354 = vmatpush1.msra.mxu0 0.0
    %3355 = vmatprep.subr.mxu0 0.0
    %3356 = vmatpush1.msra.mxu0 0.0
    %3357 = vmatprep.subr.mxu0 0.0
    %3358 = vmatpush1.msra.mxu0 0.0
    %3359 = vmatprep.subr.mxu0 0.0
    %3360 = vmatpush1.msra.mxu0 0.0
    %3361 = vmatprep.subr.mxu0 0.0
    %3362 = vmatpush1.msra.mxu0 0.0
    %3363 = vmatprep.subr.mxu0 0.0
    %3364 = vmatpush1.msra.mxu0 0.0
    %3365 = vmatprep.subr.mxu0 0.0
    %3366 = vmatpush1.msra.mxu0 0.0
    %3367 = vmatprep.subr.mxu0 0.0
    %3368 = vmatpush1.msra.mxu0 0.0
    %3369 = vmatprep.subr.mxu0 0.0
    %3370 = vmatpush1.msra.mxu0 0.0
    %3371 = vmatprep.subr.mxu0 0.0
    %3372 = vmatpush1.msra.mxu0 0.0
    %3373 = vmatprep.subr.mxu0 0.0
    %3374 = vmatpush1.msra.mxu0 0.0
    %3375 = vmatprep.subr.mxu0 0.0
    %3376 = vmatpush1.msra.mxu0 0.0
    %3377 = vmatprep.subr.mxu0 0.0
    %3378 = vmatpush1.msra.mxu0 %v3342
    %3379 = vmatprep.subr.mxu0 0.0
    %3380 = vmatpush2.msra.mxu0 0.0
    %3381 = vmatprep.subr.mxu0 0.0
    %3382 = vmatpush2.msra.mxu0 0.0
    %3383 = vmatprep.subr.mxu0 0.0
    %3384 = vmatpush2.msra.mxu0 0.0
    %3385 = vmatprep.subr.mxu0 0.0
    %3386 = vmatpush2.msra.mxu0 0.0
    %3387 = vmatprep.subr.mxu0 0.0
    %3388 = vmatpush2.msra.mxu0 0.0
    %3389 = vmatprep.subr.mxu0 0.0
    %3390 = vmatpush2.msra.mxu0 0.0
    %3391 = vmatprep.subr.mxu0 0.0
    %3392 = vmatpush2.msra.mxu0 0.0
    %3393 = vmatprep.subr.mxu0 0.0
    %3394 = vmatpush2.msra.mxu0 0.0
    %3395 = vmatprep.subr.mxu0 0.0
    %3396 = vmatpush2.msra.mxu0 0.0
    %3397 = vmatprep.subr.mxu0 0.0
    %3398 = vmatpush2.msra.mxu0 0.0
    %3399 = vmatprep.subr.mxu0 0.0
    %3400 = vmatpush2.msra.mxu0 0.0
    %3401 = vmatprep.subr.mxu0 0.0
    %3402 = vmatpush2.msra.mxu0 0.0
    %3403 = vmatprep.subr.mxu0 0.0
    %3404 = vmatpush2.msra.mxu0 0.0
    %3405 = vmatprep.subr.mxu0 0.0
    %3406 = vmatpush2.msra.mxu0 0.0
    %3407 = vmatprep.subr.mxu0 0.0
    %3408 = vmatpush2.msra.mxu0 0.0
    %3409 = vmatprep.subr.mxu0 0.0
    %3410 = vmatpush2.msra.mxu0 0.0
    %3411 = vmatprep.mubr.f32.mxu0 0.0
    %3412 = vmatmul.mubr.f32.gmra.mxu0 %v3345
    %v3413 = vpop.f32.mrf.mxu0
    %v3414 = vadd.f32 0.0, %v3413
    %v3415 = vpop.f32.mrf.mxu0
    %3416 = vdwg.mxu0
    %3417 = vrot.lane.b32.xlu0 %v2502, 112
    %v3418 = vpop.permute.xlu0 %3417
    %v3421 = vsel %vm473, %v3340, 0
    %3423 = vmatprep.subr.mxu0 0.0
    %3424 = vmatpush1.msra.mxu0 0.0
    %3425 = vmatprep.subr.mxu0 0.0
    %3426 = vmatpush1.msra.mxu0 0.0
    %3427 = vmatprep.subr.mxu0 0.0
    %3428 = vmatpush1.msra.mxu0 0.0
    %3429 = vmatprep.subr.mxu0 0.0
    %3430 = vmatpush1.msra.mxu0 0.0
    %3431 = vmatprep.subr.mxu0 0.0
    %3432 = vmatpush1.msra.mxu0 0.0
    %3433 = vmatprep.subr.mxu0 0.0
    %3434 = vmatpush1.msra.mxu0 0.0
    %3435 = vmatprep.subr.mxu0 0.0
    %3436 = vmatpush1.msra.mxu0 0.0
    %3437 = vmatprep.subr.mxu0 0.0
    %3438 = vmatpush1.msra.mxu0 0.0
    %3439 = vmatprep.subr.mxu0 0.0
    %3440 = vmatpush1.msra.mxu0 0.0
    %3441 = vmatprep.subr.mxu0 0.0
    %3442 = vmatpush1.msra.mxu0 0.0
    %3443 = vmatprep.subr.mxu0 0.0
    %3444 = vmatpush1.msra.mxu0 0.0
    %3445 = vmatprep.subr.mxu0 0.0
    %3446 = vmatpush1.msra.mxu0 0.0
    %3447 = vmatprep.subr.mxu0 0.0
    %3448 = vmatpush1.msra.mxu0 0.0
    %3449 = vmatprep.subr.mxu0 0.0
    %3450 = vmatpush1.msra.mxu0 0.0
    %3451 = vmatprep.subr.mxu0 0.0
    %3452 = vmatpush1.msra.mxu0 0.0
    %3453 = vmatprep.subr.mxu0 0.0
    %3454 = vmatpush1.msra.mxu0 %v3418
    %3455 = vmatprep.subr.mxu0 0.0
    %3456 = vmatpush2.msra.mxu0 0.0
    %3457 = vmatprep.subr.mxu0 0.0
    %3458 = vmatpush2.msra.mxu0 0.0
    %3459 = vmatprep.subr.mxu0 0.0
    %3460 = vmatpush2.msra.mxu0 0.0
    %3461 = vmatprep.subr.mxu0 0.0
    %3462 = vmatpush2.msra.mxu0 0.0
    %3463 = vmatprep.subr.mxu0 0.0
    %3464 = vmatpush2.msra.mxu0 0.0
    %3465 = vmatprep.subr.mxu0 0.0
    %3466 = vmatpush2.msra.mxu0 0.0
    %3467 = vmatprep.subr.mxu0 0.0
    %3468 = vmatpush2.msra.mxu0 0.0
    %3469 = vmatprep.subr.mxu0 0.0
    %3470 = vmatpush2.msra.mxu0 0.0
    %3471 = vmatprep.subr.mxu0 0.0
    %3472 = vmatpush2.msra.mxu0 0.0
    %3473 = vmatprep.subr.mxu0 0.0
    %3474 = vmatpush2.msra.mxu0 0.0
    %3475 = vmatprep.subr.mxu0 0.0
    %3476 = vmatpush2.msra.mxu0 0.0
    %3477 = vmatprep.subr.mxu0 0.0
    %3478 = vmatpush2.msra.mxu0 0.0
    %3479 = vmatprep.subr.mxu0 0.0
    %3480 = vmatpush2.msra.mxu0 0.0
    %3481 = vmatprep.subr.mxu0 0.0
    %3482 = vmatpush2.msra.mxu0 0.0
    %3483 = vmatprep.subr.mxu0 0.0
    %3484 = vmatpush2.msra.mxu0 0.0
    %3485 = vmatprep.subr.mxu0 0.0
    %3486 = vmatpush2.msra.mxu0 0.0
    %3487 = vmatprep.mubr.f32.mxu0 0.0
    %3488 = vmatmul.mubr.f32.gmra.mxu0 %v3421
    %v3489 = vpop.f32.mrf.mxu0
    %v3490 = vadd.f32 0.0, %v3489
    %v3491 = vpop.f32.mrf.mxu0
    %3492 = vdwg.mxu0
    %3493 = vrot.lane.b32.xlu0 %v2325, 104
    %v3494 = vpop.permute.xlu0 %3493
    %3495 = vrot.lane.b32.xlu0 %v2411, 104
    %v3496 = vpop.permute.xlu0 %3495
    %v3497 = vsel %vm473, %v3494, 0
    %v3499 = vsel %vm473, %v3496, 0
    %3501 = vmatprep.subr.mxu0 0.0
    %3502 = vmatpush1.xpose.msra.mxu0 0.0
    %3503 = vmatprep.subr.mxu0 0.0
    %3504 = vmatpush1.xpose.msra.mxu0 0.0
    %3505 = vmatprep.subr.mxu0 0.0
    %3506 = vmatpush1.xpose.msra.mxu0 0.0
    %3507 = vmatprep.subr.mxu0 0.0
    %3508 = vmatpush1.xpose.msra.mxu0 0.0
    %3509 = vmatprep.subr.mxu0 0.0
    %3510 = vmatpush1.xpose.msra.mxu0 0.0
    %3511 = vmatprep.subr.mxu0 0.0
    %3512 = vmatpush1.xpose.msra.mxu0 0.0
    %3513 = vmatprep.subr.mxu0 0.0
    %3514 = vmatpush1.xpose.msra.mxu0 0.0
    %3515 = vmatprep.subr.mxu0 0.0
    %3516 = vmatpush1.xpose.msra.mxu0 0.0
    %3517 = vmatprep.subr.mxu0 0.0
    %3518 = vmatpush1.xpose.msra.mxu0 0.0
    %3519 = vmatprep.subr.mxu0 0.0
    %3520 = vmatpush1.xpose.msra.mxu0 0.0
    %3521 = vmatprep.subr.mxu0 0.0
    %3522 = vmatpush1.xpose.msra.mxu0 0.0
    %3523 = vmatprep.subr.mxu0 0.0
    %3524 = vmatpush1.xpose.msra.mxu0 0.0
    %3525 = vmatprep.subr.mxu0 0.0
    %3526 = vmatpush1.xpose.msra.mxu0 0.0
    %3527 = vmatprep.subr.mxu0 0.0
    %3528 = vmatpush1.xpose.msra.mxu0 0.0
    %3529 = vmatprep.subr.mxu0 0.0
    %3530 = vmatpush1.xpose.msra.mxu0 0.0
    %3531 = vmatprep.subr.mxu0 0.0
    %3532 = vmatpush1.xpose.msra.mxu0 %v3499
    %3533 = vmatprep.subr.mxu0 0.0
    %3534 = vmatpush2.xpose.msra.mxu0 0.0
    %3535 = vmatprep.subr.mxu0 0.0
    %3536 = vmatpush2.xpose.msra.mxu0 0.0
    %3537 = vmatprep.subr.mxu0 0.0
    %3538 = vmatpush2.xpose.msra.mxu0 0.0
    %3539 = vmatprep.subr.mxu0 0.0
    %3540 = vmatpush2.xpose.msra.mxu0 0.0
    %3541 = vmatprep.subr.mxu0 0.0
    %3542 = vmatpush2.xpose.msra.mxu0 0.0
    %3543 = vmatprep.subr.mxu0 0.0
    %3544 = vmatpush2.xpose.msra.mxu0 0.0
    %3545 = vmatprep.subr.mxu0 0.0
    %3546 = vmatpush2.xpose.msra.mxu0 0.0
    %3547 = vmatprep.subr.mxu0 0.0
    %3548 = vmatpush2.xpose.msra.mxu0 0.0
    %3549 = vmatprep.subr.mxu0 0.0
    %3550 = vmatpush2.xpose.msra.mxu0 0.0
    %3551 = vmatprep.subr.mxu0 0.0
    %3552 = vmatpush2.xpose.msra.mxu0 0.0
    %3553 = vmatprep.subr.mxu0 0.0
    %3554 = vmatpush2.xpose.msra.mxu0 0.0
    %3555 = vmatprep.subr.mxu0 0.0
    %3556 = vmatpush2.xpose.msra.mxu0 0.0
    %3557 = vmatprep.subr.mxu0 0.0
    %3558 = vmatpush2.xpose.msra.mxu0 0.0
    %3559 = vmatprep.subr.mxu0 0.0
    %3560 = vmatpush2.xpose.msra.mxu0 0.0
    %3561 = vmatprep.subr.mxu0 0.0
    %3562 = vmatpush2.xpose.msra.mxu0 0.0
    %3563 = vmatprep.subr.mxu0 0.0
    %3564 = vmatpush2.xpose.msra.mxu0 0.0
    %3565 = vmatprep.mubr.f32.mxu0 0.0
    %3566 = vmatmul.mubr.f32.gmra.mxu0 %v3497
    %v3567 = vpop.f32.mrf.mxu0
    %v3568 = vadd.f32 0.0, %v3567
    %v3569 = vpop.f32.mrf.mxu0
    %3570 = vdwg.mxu0
    %3571 = vrot.lane.b32.xlu0 %v2330, 104
    %v3572 = vpop.permute.xlu0 %3571
    %3573 = vrot.lane.b32.xlu0 %v2416, 104
    %v3574 = vpop.permute.xlu0 %3573
    %v3575 = vsel %vm473, %v3572, 0
    %v3577 = vsel %vm473, %v3574, 0
    %3579 = vmatprep.subr.mxu0 0.0
    %3580 = vmatpush1.xpose.msra.mxu0 0.0
    %3581 = vmatprep.subr.mxu0 0.0
    %3582 = vmatpush1.xpose.msra.mxu0 0.0
    %3583 = vmatprep.subr.mxu0 0.0
    %3584 = vmatpush1.xpose.msra.mxu0 0.0
    %3585 = vmatprep.subr.mxu0 0.0
    %3586 = vmatpush1.xpose.msra.mxu0 0.0
    %3587 = vmatprep.subr.mxu0 0.0
    %3588 = vmatpush1.xpose.msra.mxu0 0.0
    %3589 = vmatprep.subr.mxu0 0.0
    %3590 = vmatpush1.xpose.msra.mxu0 0.0
    %3591 = vmatprep.subr.mxu0 0.0
    %3592 = vmatpush1.xpose.msra.mxu0 0.0
    %3593 = vmatprep.subr.mxu0 0.0
    %3594 = vmatpush1.xpose.msra.mxu0 0.0
    %3595 = vmatprep.subr.mxu0 0.0
    %3596 = vmatpush1.xpose.msra.mxu0 0.0
    %3597 = vmatprep.subr.mxu0 0.0
    %3598 = vmatpush1.xpose.msra.mxu0 0.0
    %3599 = vmatprep.subr.mxu0 0.0
    %3600 = vmatpush1.xpose.msra.mxu0 0.0
    %3601 = vmatprep.subr.mxu0 0.0
    %3602 = vmatpush1.xpose.msra.mxu0 0.0
    %3603 = vmatprep.subr.mxu0 0.0
    %3604 = vmatpush1.xpose.msra.mxu0 0.0
    %3605 = vmatprep.subr.mxu0 0.0
    %3606 = vmatpush1.xpose.msra.mxu0 0.0
    %3607 = vmatprep.subr.mxu0 0.0
    %3608 = vmatpush1.xpose.msra.mxu0 0.0
    %3609 = vmatprep.subr.mxu0 0.0
    %3610 = vmatpush1.xpose.msra.mxu0 %v3577
    %3611 = vmatprep.subr.mxu0 0.0
    %3612 = vmatpush2.xpose.msra.mxu0 0.0
    %3613 = vmatprep.subr.mxu0 0.0
    %3614 = vmatpush2.xpose.msra.mxu0 0.0
    %3615 = vmatprep.subr.mxu0 0.0
    %3616 = vmatpush2.xpose.msra.mxu0 0.0
    %3617 = vmatprep.subr.mxu0 0.0
    %3618 = vmatpush2.xpose.msra.mxu0 0.0
    %3619 = vmatprep.subr.mxu0 0.0
    %3620 = vmatpush2.xpose.msra.mxu0 0.0
    %3621 = vmatprep.subr.mxu0 0.0
    %3622 = vmatpush2.xpose.msra.mxu0 0.0
    %3623 = vmatprep.subr.mxu0 0.0
    %3624 = vmatpush2.xpose.msra.mxu0 0.0
    %3625 = vmatprep.subr.mxu0 0.0
    %3626 = vmatpush2.xpose.msra.mxu0 0.0
    %3627 = vmatprep.subr.mxu0 0.0
    %3628 = vmatpush2.xpose.msra.mxu0 0.0
    %3629 = vmatprep.subr.mxu0 0.0
    %3630 = vmatpush2.xpose.msra.mxu0 0.0
    %3631 = vmatprep.subr.mxu0 0.0
    %3632 = vmatpush2.xpose.msra.mxu0 0.0
    %3633 = vmatprep.subr.mxu0 0.0
    %3634 = vmatpush2.xpose.msra.mxu0 0.0
    %3635 = vmatprep.subr.mxu0 0.0
    %3636 = vmatpush2.xpose.msra.mxu0 0.0
    %3637 = vmatprep.subr.mxu0 0.0
    %3638 = vmatpush2.xpose.msra.mxu0 0.0
    %3639 = vmatprep.subr.mxu0 0.0
    %3640 = vmatpush2.xpose.msra.mxu0 0.0
    %3641 = vmatprep.subr.mxu0 0.0
    %3642 = vmatpush2.xpose.msra.mxu0 0.0
    %3643 = vmatprep.mubr.f32.mxu0 0.0
    %3644 = vmatmul.mubr.f32.gmra.mxu0 %v3575
    %v3645 = vpop.f32.mrf.mxu0
    %v3646 = vadd.f32 0.0, %v3645
    %v3647 = vpop.f32.mrf.mxu0
    %3648 = vdwg.mxu0
    %v3649 = vsel %vm636, %v3568, -1e+09
    %v3650 = vsel %vm637, %v3646, -1e+09
    %v3651 = vsel %vm473, %v3649, -inf
    %3652 = vmax.xlane.f32.xlu0 %v3651
    %v3653 = vpop.xlane.xlu0 %3652
    %v3654 = vsel %vm473, %v3650, -inf
    %3655 = vmax.xlane.f32.xlu0 %v3654
    %v3656 = vpop.xlane.xlu0 %3655
    %v3657 = vsub.f32 %v3649, %v3653
    %v3658 = vsub.f32 %v3650, %v3656
    %v3659 = vmul.f32 %v3657, 1.442695
    %v3660 = vpow.pop %v3659
    %v3661 = vmul.f32 %v3658, 1.442695
    %v3662 = vpow.pop %v3661
    %v3663 = vsel %vm473, %v3660, 0.0
    %3664 = vadd.xlane.f32.xlu0 %v3663
    %v3665 = vpop.xlane.xlu0 %3664
    %v3666 = vsel %vm473, %v3662, 0.0
    %3667 = vadd.xlane.f32.xlu0 %v3666
    %v3668 = vpop.xlane.xlu0 %3667
    %v3669 = vrcp.pop %v3665
    %v3670 = vrcp.pop %v3668
    %v3671 = vmul.f32 %v3660, %v3669
    %v3672 = vmul.f32 %v3662, %v3670
    %3673 = vrot.lane.b32.xlu0 %v2497, 104
    %v3674 = vpop.permute.xlu0 %3673
    %v3677 = vsel %vm473, %v3671, 0
    %3679 = vmatprep.subr.mxu0 0.0
    %3680 = vmatpush1.msra.mxu0 0.0
    %3681 = vmatprep.subr.mxu0 0.0
    %3682 = vmatpush1.msra.mxu0 0.0
    %3683 = vmatprep.subr.mxu0 0.0
    %3684 = vmatpush1.msra.mxu0 0.0
    %3685 = vmatprep.subr.mxu0 0.0
    %3686 = vmatpush1.msra.mxu0 0.0
    %3687 = vmatprep.subr.mxu0 0.0
    %3688 = vmatpush1.msra.mxu0 0.0
    %3689 = vmatprep.subr.mxu0 0.0
    %3690 = vmatpush1.msra.mxu0 0.0
    %3691 = vmatprep.subr.mxu0 0.0
    %3692 = vmatpush1.msra.mxu0 0.0
    %3693 = vmatprep.subr.mxu0 0.0
    %3694 = vmatpush1.msra.mxu0 0.0
    %3695 = vmatprep.subr.mxu0 0.0
    %3696 = vmatpush1.msra.mxu0 0.0
    %3697 = vmatprep.subr.mxu0 0.0
    %3698 = vmatpush1.msra.mxu0 0.0
    %3699 = vmatprep.subr.mxu0 0.0
    %3700 = vmatpush1.msra.mxu0 0.0
    %3701 = vmatprep.subr.mxu0 0.0
    %3702 = vmatpush1.msra.mxu0 0.0
    %3703 = vmatprep.subr.mxu0 0.0
    %3704 = vmatpush1.msra.mxu0 0.0
    %3705 = vmatprep.subr.mxu0 0.0
    %3706 = vmatpush1.msra.mxu0 0.0
    %3707 = vmatprep.subr.mxu0 0.0
    %3708 = vmatpush1.msra.mxu0 0.0
    %3709 = vmatprep.subr.mxu0 0.0
    %3710 = vmatpush1.msra.mxu0 %v3674
    %3711 = vmatprep.subr.mxu0 0.0
    %3712 = vmatpush2.msra.mxu0 0.0
    %3713 = vmatprep.subr.mxu0 0.0
    %3714 = vmatpush2.msra.mxu0 0.0
    %3715 = vmatprep.subr.mxu0 0.0
    %3716 = vmatpush2.msra.mxu0 0.0
    %3717 = vmatprep.subr.mxu0 0.0
    %3718 = vmatpush2.msra.mxu0 0.0
    %3719 = vmatprep.subr.mxu0 0.0
    %3720 = vmatpush2.msra.mxu0 0.0
    %3721 = vmatprep.subr.mxu0 0.0
    %3722 = vmatpush2.msra.mxu0 0.0
    %3723 = vmatprep.subr.mxu0 0.0
    %3724 = vmatpush2.msra.mxu0 0.0
    %3725 = vmatprep.subr.mxu0 0.0
    %3726 = vmatpush2.msra.mxu0 0.0
    %3727 = vmatprep.subr.mxu0 0.0
    %3728 = vmatpush2.msra.mxu0 0.0
    %3729 = vmatprep.subr.mxu0 0.0
    %3730 = vmatpush2.msra.mxu0 0.0
    %3731 = vmatprep.subr.mxu0 0.0
    %3732 = vmatpush2.msra.mxu0 0.0
    %3733 = vmatprep.subr.mxu0 0.0
    %3734 = vmatpush2.msra.mxu0 0.0
    %3735 = vmatprep.subr.mxu0 0.0
    %3736 = vmatpush2.msra.mxu0 0.0
    %3737 = vmatprep.subr.mxu0 0.0
    %3738 = vmatpush2.msra.mxu0 0.0
    %3739 = vmatprep.subr.mxu0 0.0
    %3740 = vmatpush2.msra.mxu0 0.0
    %3741 = vmatprep.subr.mxu0 0.0
    %3742 = vmatpush2.msra.mxu0 0.0
    %3743 = vmatprep.mubr.f32.mxu0 0.0
    %3744 = vmatmul.mubr.f32.gmra.mxu0 %v3677
    %v3745 = vpop.f32.mrf.mxu0
    %v3746 = vadd.f32 0.0, %v3745
    %v3747 = vpop.f32.mrf.mxu0
    %3748 = vdwg.mxu0
    %3749 = vrot.lane.b32.xlu0 %v2502, 104
    %v3750 = vpop.permute.xlu0 %3749
    %v3753 = vsel %vm473, %v3672, 0
    %3755 = vmatprep.subr.mxu0 0.0
    %3756 = vmatpush1.msra.mxu0 0.0
    %3757 = vmatprep.subr.mxu0 0.0
    %3758 = vmatpush1.msra.mxu0 0.0
    %3759 = vmatprep.subr.mxu0 0.0
    %3760 = vmatpush1.msra.mxu0 0.0
    %3761 = vmatprep.subr.mxu0 0.0
    %3762 = vmatpush1.msra.mxu0 0.0
    %3763 = vmatprep.subr.mxu0 0.0
    %3764 = vmatpush1.msra.mxu0 0.0
    %3765 = vmatprep.subr.mxu0 0.0
    %3766 = vmatpush1.msra.mxu0 0.0
    %3767 = vmatprep.subr.mxu0 0.0
    %3768 = vmatpush1.msra.mxu0 0.0
    %3769 = vmatprep.subr.mxu0 0.0
    %3770 = vmatpush1.msra.mxu0 0.0
    %3771 = vmatprep.subr.mxu0 0.0
    %3772 = vmatpush1.msra.mxu0 0.0
    %3773 = vmatprep.subr.mxu0 0.0
    %3774 = vmatpush1.msra.mxu0 0.0
    %3775 = vmatprep.subr.mxu0 0.0
    %3776 = vmatpush1.msra.mxu0 0.0
    %3777 = vmatprep.subr.mxu0 0.0
    %3778 = vmatpush1.msra.mxu0 0.0
    %3779 = vmatprep.subr.mxu0 0.0
    %3780 = vmatpush1.msra.mxu0 0.0
    %3781 = vmatprep.subr.mxu0 0.0
    %3782 = vmatpush1.msra.mxu0 0.0
    %3783 = vmatprep.subr.mxu0 0.0
    %3784 = vmatpush1.msra.mxu0 0.0
    %3785 = vmatprep.subr.mxu0 0.0
    %3786 = vmatpush1.msra.mxu0 %v3750
    %3787 = vmatprep.subr.mxu0 0.0
    %3788 = vmatpush2.msra.mxu0 0.0
    %3789 = vmatprep.subr.mxu0 0.0
    %3790 = vmatpush2.msra.mxu0 0.0
    %3791 = vmatprep.subr.mxu0 0.0
    %3792 = vmatpush2.msra.mxu0 0.0
    %3793 = vmatprep.subr.mxu0 0.0
    %3794 = vmatpush2.msra.mxu0 0.0
    %3795 = vmatprep.subr.mxu0 0.0
    %3796 = vmatpush2.msra.mxu0 0.0
    %3797 = vmatprep.subr.mxu0 0.0
    %3798 = vmatpush2.msra.mxu0 0.0
    %3799 = vmatprep.subr.mxu0 0.0
    %3800 = vmatpush2.msra.mxu0 0.0
    %3801 = vmatprep.subr.mxu0 0.0
    %3802 = vmatpush2.msra.mxu0 0.0
    %3803 = vmatprep.subr.mxu0 0.0
    %3804 = vmatpush2.msra.mxu0 0.0
    %3805 = vmatprep.subr.mxu0 0.0
    %3806 = vmatpush2.msra.mxu0 0.0
    %3807 = vmatprep.subr.mxu0 0.0
    %3808 = vmatpush2.msra.mxu0 0.0
    %3809 = vmatprep.subr.mxu0 0.0
    %3810 = vmatpush2.msra.mxu0 0.0
    %3811 = vmatprep.subr.mxu0 0.0
    %3812 = vmatpush2.msra.mxu0 0.0
    %3813 = vmatprep.subr.mxu0 0.0
    %3814 = vmatpush2.msra.mxu0 0.0
    %3815 = vmatprep.subr.mxu0 0.0
    %3816 = vmatpush2.msra.mxu0 0.0
    %3817 = vmatprep.subr.mxu0 0.0
    %3818 = vmatpush2.msra.mxu0 0.0
    %3819 = vmatprep.mubr.f32.mxu0 0.0
    %3820 = vmatmul.mubr.f32.gmra.mxu0 %v3753
    %v3821 = vpop.f32.mrf.mxu0
    %v3822 = vadd.f32 0.0, %v3821
    %v3823 = vpop.f32.mrf.mxu0
    %3824 = vdwg.mxu0
    %3827 = vrot.lane.b32.xlu0 %v3081, 8
    %v3828 = vpop.permute.xlu0 %3827
    %3829 = vrot.lane.b32.xlu0 %v3158, 8
    %v3830 = vpop.permute.xlu0 %3829
    %3835 = vrot.lane.b32.xlu0 %v3414, 16
    %v3836 = vpop.permute.xlu0 %3835
    %3837 = vrot.lane.b32.xlu0 %v3490, 16
    %v3838 = vpop.permute.xlu0 %3837
    %3843 = vrot.lane.b32.xlu0 %v3746, 24
    %v3844 = vpop.permute.xlu0 %3843
    %3845 = vrot.lane.b32.xlu0 %v3822, 24
    %v3846 = vpop.permute.xlu0 %3845
    %v3849 = vsel %vm473, %v2751, %v3828
    %v3850 = vsel %vm473, %v2824, %v3830
    %v3851 = vsel %vm1832, %v3849, %v3836
    %v3852 = vsel %vm1832, %v3850, %v3838
    %v3853 = vsel %vm1835, %v3851, %v3844
    %v3854 = vsel %vm1835, %v3852, %v3846
    %v3855 = vld [vmem:[%s53] sm:$0xff]
    %v3856 = vld [vmem:[%s53 + $0x8] sm:$0xff]
    %v3857 = vld [vmem:[%s53 + $0x10] sm:$0xff]
    %v3858 = vld [vmem:[%s53 + $0x18] sm:$0xff]
    %v3859 = vld [vmem:[%s55] sm:$0x1]
    %v3861 = vlaneseq
    %v3862 = vshrl.u32 %v3861, 7
    %v3863 = vsub.s32 0, %v3862
    %v3864 = vrot.slane %v3859, %v3863
    %v3867 = vsel %vm159, %v3853, 0
    %v3870 = vsel %vm159, %v3854, 0
    %3872 = vmatprep.subr.mxu0 0.0
    %3873 = vmatpush1.msra.mxu0 0.0
    %3874 = vmatprep.subr.mxu0 0.0
    %3875 = vmatpush1.msra.mxu0 0.0
    %3876 = vmatprep.subr.mxu0 0.0
    %3877 = vmatpush1.msra.mxu0 0.0
    %3878 = vmatprep.subr.mxu0 0.0
    %3879 = vmatpush1.msra.mxu0 0.0
    %3880 = vmatprep.subr.mxu0 0.0
    %3881 = vmatpush1.msra.mxu0 0.0
    %3882 = vmatprep.subr.mxu0 0.0
    %3883 = vmatpush1.msra.mxu0 0.0
    %3884 = vmatprep.subr.mxu0 0.0
    %3885 = vmatpush1.msra.mxu0 0.0
    %3886 = vmatprep.subr.mxu0 0.0
    %3887 = vmatpush1.msra.mxu0 0.0
    %3888 = vmatprep.subr.mxu0 0.0
    %3889 = vmatpush1.msra.mxu0 0.0
    %3890 = vmatprep.subr.mxu0 0.0
    %3891 = vmatpush1.msra.mxu0 0.0
    %3892 = vmatprep.subr.mxu0 0.0
    %3893 = vmatpush1.msra.mxu0 0.0
    %3894 = vmatprep.subr.mxu0 0.0
    %3895 = vmatpush1.msra.mxu0 0.0
    %3896 = vmatprep.subr.mxu0 0.0
    %3897 = vmatpush1.msra.mxu0 %v3858
    %3898 = vmatprep.subr.mxu0 0.0
    %3899 = vmatpush1.msra.mxu0 %v3857
    %3900 = vmatprep.subr.mxu0 0.0
    %3901 = vmatpush1.msra.mxu0 %v3856
    %3902 = vmatprep.subr.mxu0 0.0
    %3903 = vmatpush1.msra.mxu0 %v3855
    %3904 = vmatprep.subr.mxu0 0.0
    %3905 = vmatpush2.msra.mxu0 0.0
    %3906 = vmatprep.subr.mxu0 0.0
    %3907 = vmatpush2.msra.mxu0 0.0
    %3908 = vmatprep.subr.mxu0 0.0
    %3909 = vmatpush2.msra.mxu0 0.0
    %3910 = vmatprep.subr.mxu0 0.0
    %3911 = vmatpush2.msra.mxu0 0.0
    %3912 = vmatprep.subr.mxu0 0.0
    %3913 = vmatpush2.msra.mxu0 0.0
    %3914 = vmatprep.subr.mxu0 0.0
    %3915 = vmatpush2.msra.mxu0 0.0
    %3916 = vmatprep.subr.mxu0 0.0
    %3917 = vmatpush2.msra.mxu0 0.0
    %3918 = vmatprep.subr.mxu0 0.0
    %3919 = vmatpush2.msra.mxu0 0.0
    %3920 = vmatprep.subr.mxu0 0.0
    %3921 = vmatpush2.msra.mxu0 0.0
    %3922 = vmatprep.subr.mxu0 0.0
    %3923 = vmatpush2.msra.mxu0 0.0
    %3924 = vmatprep.subr.mxu0 0.0
    %3925 = vmatpush2.msra.mxu0 0.0
    %3926 = vmatprep.subr.mxu0 0.0
    %3927 = vmatpush2.msra.mxu0 0.0
    %3928 = vmatprep.subr.mxu0 0.0
    %3929 = vmatpush2.msra.mxu0 0.0
    %3930 = vmatprep.subr.mxu0 0.0
    %3931 = vmatpush2.msra.mxu0 0.0
    %3932 = vmatprep.subr.mxu0 0.0
    %3933 = vmatpush2.msra.mxu0 0.0
    %3934 = vmatprep.subr.mxu0 0.0
    %3935 = vmatpush2.msra.mxu0 0.0
    %3936 = vmatprep.mubr.f32.mxu0 0.0
    %3937 = vmatmul.mubr.f32.gmra.mxu0 %v3867
    %v3938 = vpop.f32.mrf.mxu0
    %v3939 = vadd.f32 %v3864, %v3938
    %v3940 = vpop.f32.mrf.mxu0
    %3941 = vmatprep.mubr.f32.mxu0 0.0
    %3942 = vmatmul.mubr.f32.gmra.mxu0 %v3870
    %v3943 = vpop.f32.mrf.mxu0
    %v3944 = vadd.f32 %v3864, %v3943
    %v3945 = vpop.f32.mrf.mxu0
    %3946 = vdwg.mxu0
    %v3947 = vadd.f32 %v2239, %v3939
    %v3948 = vadd.f32 %v2240, %v3944
    %v3949 = vld [vmem:[%s57] sm:$0x1]
    %v3950 = vld [vmem:[%s59] sm:$0x1]
    %v3951 = vsel %vm159, %v3947, 0.0
    %3952 = vadd.xlane.f32.xlu0 %v3951
    %v3953 = vpop.xlane.xlu0 %3952
    %v3954 = vsel %vm159, %v3948, 0.0
    %3955 = vadd.xlane.f32.xlu0 %v3954
    %v3956 = vpop.xlane.xlu0 %3955
    %v3957 = vmul.f32 %v3953, %v166
    %v3958 = vmul.f32 %v3956, %v166
    %v3959 = vmul.f32 %v3947, %v3947
    %v3960 = vmul.f32 %v3948, %v3948
    %v3961 = vsel %vm159, %v3959, 0.0
    %3962 = vadd.xlane.f32.xlu0 %v3961
    %v3963 = vpop.xlane.xlu0 %3962
    %v3964 = vsel %vm159, %v3960, 0.0
    %3965 = vadd.xlane.f32.xlu0 %v3964
    %v3966 = vpop.xlane.xlu0 %3965
    %v3967 = vmul.f32 %v3963, %v166
    %v3968 = vmul.f32 %v3966, %v166
    %v3969 = vmul.f32 %v3957, %v3957
    %v3970 = vmul.f32 %v3958, %v3958
    %v3971 = vsub.f32 %v3967, %v3969
    %v3972 = vsub.f32 %v3968, %v3970
    %v3973 = vmax.f32 %v3971, 0.0
    %v3974 = vmax.f32 %v3972, 0.0
    %v3975 = vsub.f32 %v3947, %v3957
    %v3976 = vsub.f32 %v3948, %v3958
    %v3977 = vadd.f32 %v3973, 1e-12
    %v3978 = vadd.f32 %v3974, 1e-12
    %v3979 = vrsqrt.pop %v3977
    %v3980 = vrsqrt.pop %v3978
    %v3981 = vmul.f32 %v3975, %v3979
    %v3982 = vmul.f32 %v3976, %v3980
    %v3984 = vlaneseq
    %v3985 = vshrl.u32 %v3984, 7
    %v3986 = vsub.s32 0, %v3985
    %v3987 = vrot.slane %v3949, %v3986
    %v3989 = vmul.f32 %v3981, %v3987
    %v3990 = vmul.f32 %v3982, %v3987
    %v3992 = vlaneseq
    %v3993 = vshrl.u32 %v3992, 7
    %v3994 = vsub.s32 0, %v3993
    %v3995 = vrot.slane %v3950, %v3994
    %v3997 = vadd.f32 %v3989, %v3995
    %v3998 = vadd.f32 %v3990, %v3995
    %v3999 = vld [vmem:[%s61] sm:$0xff]
    %v4000 = vld [vmem:[%s61 + $0x8] sm:$0xff]
    %v4001 = vld [vmem:[%s61 + $0x10] sm:$0xff]
    %v4002 = vld [vmem:[%s61 + $0x18] sm:$0xff]
    %v4003 = vld [vmem:[%s63] sm:$0x1]
    %v4005 = vlaneseq
    %v4006 = vshrl.u32 %v4005, 7
    %v4007 = vsub.s32 0, %v4006
    %v4008 = vrot.slane %v4003, %v4007
    %v4011 = vsel %vm159, %v3997, 0
    %v4014 = vsel %vm159, %v3998, 0
    %4016 = vmatprep.subr.mxu0 0.0
    %4017 = vmatpush1.msra.mxu0 0.0
    %4018 = vmatprep.subr.mxu0 0.0
    %4019 = vmatpush1.msra.mxu0 0.0
    %4020 = vmatprep.subr.mxu0 0.0
    %4021 = vmatpush1.msra.mxu0 0.0
    %4022 = vmatprep.subr.mxu0 0.0
    %4023 = vmatpush1.msra.mxu0 0.0
    %4024 = vmatprep.subr.mxu0 0.0
    %4025 = vmatpush1.msra.mxu0 0.0
    %4026 = vmatprep.subr.mxu0 0.0
    %4027 = vmatpush1.msra.mxu0 0.0
    %4028 = vmatprep.subr.mxu0 0.0
    %4029 = vmatpush1.msra.mxu0 0.0
    %4030 = vmatprep.subr.mxu0 0.0
    %4031 = vmatpush1.msra.mxu0 0.0
    %4032 = vmatprep.subr.mxu0 0.0
    %4033 = vmatpush1.msra.mxu0 0.0
    %4034 = vmatprep.subr.mxu0 0.0
    %4035 = vmatpush1.msra.mxu0 0.0
    %4036 = vmatprep.subr.mxu0 0.0
    %4037 = vmatpush1.msra.mxu0 0.0
    %4038 = vmatprep.subr.mxu0 0.0
    %4039 = vmatpush1.msra.mxu0 0.0
    %4040 = vmatprep.subr.mxu0 0.0
    %4041 = vmatpush1.msra.mxu0 %v4002
    %4042 = vmatprep.subr.mxu0 0.0
    %4043 = vmatpush1.msra.mxu0 %v4001
    %4044 = vmatprep.subr.mxu0 0.0
    %4045 = vmatpush1.msra.mxu0 %v4000
    %4046 = vmatprep.subr.mxu0 0.0
    %4047 = vmatpush1.msra.mxu0 %v3999
    %4048 = vmatprep.subr.mxu0 0.0
    %4049 = vmatpush2.msra.mxu0 0.0
    %4050 = vmatprep.subr.mxu0 0.0
    %4051 = vmatpush2.msra.mxu0 0.0
    %4052 = vmatprep.subr.mxu0 0.0
    %4053 = vmatpush2.msra.mxu0 0.0
    %4054 = vmatprep.subr.mxu0 0.0
    %4055 = vmatpush2.msra.mxu0 0.0
    %4056 = vmatprep.subr.mxu0 0.0
    %4057 = vmatpush2.msra.mxu0 0.0
    %4058 = vmatprep.subr.mxu0 0.0
    %4059 = vmatpush2.msra.mxu0 0.0
    %4060 = vmatprep.subr.mxu0 0.0
    %4061 = vmatpush2.msra.mxu0 0.0
    %4062 = vmatprep.subr.mxu0 0.0
    %4063 = vmatpush2.msra.mxu0 0.0
    %4064 = vmatprep.subr.mxu0 0.0
    %4065 = vmatpush2.msra.mxu0 0.0
    %4066 = vmatprep.subr.mxu0 0.0
    %4067 = vmatpush2.msra.mxu0 0.0
    %4068 = vmatprep.subr.mxu0 0.0
    %4069 = vmatpush2.msra.mxu0 0.0
    %4070 = vmatprep.subr.mxu0 0.0
    %4071 = vmatpush2.msra.mxu0 0.0
    %4072 = vmatprep.subr.mxu0 0.0
    %4073 = vmatpush2.msra.mxu0 0.0
    %4074 = vmatprep.subr.mxu0 0.0
    %4075 = vmatpush2.msra.mxu0 0.0
    %4076 = vmatprep.subr.mxu0 0.0
    %4077 = vmatpush2.msra.mxu0 0.0
    %4078 = vmatprep.subr.mxu0 0.0
    %4079 = vmatpush2.msra.mxu0 0.0
    %4080 = vmatprep.mubr.f32.mxu0 0.0
    %4081 = vmatmul.mubr.f32.gmra.mxu0 %v4011
    %v4082 = vpop.f32.mrf.mxu0
    %v4083 = vadd.f32 %v4008, %v4082
    %v4084 = vpop.f32.mrf.mxu0
    %4085 = vmatprep.mubr.f32.mxu0 0.0
    %4086 = vmatmul.mubr.f32.gmra.mxu0 %v4014
    %v4087 = vpop.f32.mrf.mxu0
    %v4088 = vadd.f32 %v4008, %v4087
    %v4089 = vpop.f32.mrf.mxu0
    %4090 = vdwg.mxu0
    %v4091 = vmul.f32 %v4083, %v4083
    %v4092 = vmul.f32 %v4088, %v4088
    %v4093 = vmul.f32 %v4083, %v4091
    %v4094 = vmul.f32 %v4088, %v4092
    %v4095 = vmul.f32 %v4093, 0.044715
    %v4096 = vmul.f32 %v4094, 0.044715
    %v4097 = vadd.f32 %v4083, %v4095
    %v4098 = vadd.f32 %v4088, %v4096
    %v4099 = vmul.f32 %v4097, 0.7978846
    %v4100 = vmul.f32 %v4098, 0.7978846
    %v4101 = vtanh.pop %v4099
    %v4102 = vtanh.pop %v4100
    %v4103 = vadd.f32 %v4101, 1.0
    %v4104 = vadd.f32 %v4102, 1.0
    %v4105 = vmul.f32 %v4103, 0.5
    %v4106 = vmul.f32 %v4104, 0.5
    %v4107 = vmul.f32 %v4083, %v4105
    %v4108 = vmul.f32 %v4088, %v4106
    %v4109 = vld [vmem:[%s65] sm:$0xff]
    %v4110 = vld [vmem:[%s65 + $0x8] sm:$0xff]
    %v4111 = vld [vmem:[%s65 + $0x10] sm:$0xff]
    %v4112 = vld [vmem:[%s65 + $0x18] sm:$0xff]
    %v4113 = vld [vmem:[%s65 + $0x20] sm:$0xff]
    %v4114 = vld [vmem:[%s65 + $0x28] sm:$0xff]
    %v4115 = vld [vmem:[%s65 + $0x30] sm:$0xff]
    %v4116 = vld [vmem:[%s65 + $0x38] sm:$0xff]
    %v4117 = vld [vmem:[%s67] sm:$0x1]
    %v4119 = vlaneseq
    %v4120 = vshrl.u32 %v4119, 7
    %v4121 = vsub.s32 0, %v4120
    %v4122 = vrot.slane %v4117, %v4121
    %v4125 = vsel %vm2107, %v4107, 0
    %v4128 = vsel %vm2107, %v4108, 0
    %4130 = vmatprep.subr.mxu0 0.0
    %4131 = vmatpush1.msra.mxu0 0.0
    %4132 = vmatprep.subr.mxu0 0.0
    %4133 = vmatpush1.msra.mxu0 0.0
    %4134 = vmatprep.subr.mxu0 0.0
    %4135 = vmatpush1.msra.mxu0 0.0
    %4136 = vmatprep.subr.mxu0 0.0
    %4137 = vmatpush1.msra.mxu0 0.0
    %4138 = vmatprep.subr.mxu0 0.0
    %4139 = vmatpush1.msra.mxu0 0.0
    %4140 = vmatprep.subr.mxu0 0.0
    %4141 = vmatpush1.msra.mxu0 0.0
    %4142 = vmatprep.subr.mxu0 0.0
    %4143 = vmatpush1.msra.mxu0 0.0
    %4144 = vmatprep.subr.mxu0 0.0
    %4145 = vmatpush1.msra.mxu0 0.0
    %4146 = vmatprep.subr.mxu0 0.0
    %4147 = vmatpush1.msra.mxu0 %v4116
    %4148 = vmatprep.subr.mxu0 0.0
    %4149 = vmatpush1.msra.mxu0 %v4115
    %4150 = vmatprep.subr.mxu0 0.0
    %4151 = vmatpush1.msra.mxu0 %v4114
    %4152 = vmatprep.subr.mxu0 0.0
    %4153 = vmatpush1.msra.mxu0 %v4113
    %4154 = vmatprep.subr.mxu0 0.0
    %4155 = vmatpush1.msra.mxu0 %v4112
    %4156 = vmatprep.subr.mxu0 0.0
    %4157 = vmatpush1.msra.mxu0 %v4111
    %4158 = vmatprep.subr.mxu0 0.0
    %4159 = vmatpush1.msra.mxu0 %v4110
    %4160 = vmatprep.subr.mxu0 0.0
    %4161 = vmatpush1.msra.mxu0 %v4109
    %4162 = vmatprep.subr.mxu0 0.0
    %4163 = vmatpush2.msra.mxu0 0.0
    %4164 = vmatprep.subr.mxu0 0.0
    %4165 = vmatpush2.msra.mxu0 0.0
    %4166 = vmatprep.subr.mxu0 0.0
    %4167 = vmatpush2.msra.mxu0 0.0
    %4168 = vmatprep.subr.mxu0 0.0
    %4169 = vmatpush2.msra.mxu0 0.0
    %4170 = vmatprep.subr.mxu0 0.0
    %4171 = vmatpush2.msra.mxu0 0.0
    %4172 = vmatprep.subr.mxu0 0.0
    %4173 = vmatpush2.msra.mxu0 0.0
    %4174 = vmatprep.subr.mxu0 0.0
    %4175 = vmatpush2.msra.mxu0 0.0
    %4176 = vmatprep.subr.mxu0 0.0
    %4177 = vmatpush2.msra.mxu0 0.0
    %4178 = vmatprep.subr.mxu0 0.0
    %4179 = vmatpush2.msra.mxu0 0.0
    %4180 = vmatprep.subr.mxu0 0.0
    %4181 = vmatpush2.msra.mxu0 0.0
    %4182 = vmatprep.subr.mxu0 0.0
    %4183 = vmatpush2.msra.mxu0 0.0
    %4184 = vmatprep.subr.mxu0 0.0
    %4185 = vmatpush2.msra.mxu0 0.0
    %4186 = vmatprep.subr.mxu0 0.0
    %4187 = vmatpush2.msra.mxu0 0.0
    %4188 = vmatprep.subr.mxu0 0.0
    %4189 = vmatpush2.msra.mxu0 0.0
    %4190 = vmatprep.subr.mxu0 0.0
    %4191 = vmatpush2.msra.mxu0 0.0
    %4192 = vmatprep.subr.mxu0 0.0
    %4193 = vmatpush2.msra.mxu0 0.0
    %4194 = vmatprep.mubr.f32.mxu0 0.0
    %4195 = vmatmul.mubr.f32.gmra.mxu0 %v4125
    %v4196 = vpop.f32.mrf.mxu0
    %v4197 = vadd.f32 %v4122, %v4196
    %v4198 = vpop.f32.mrf.mxu0
    %4199 = vmatprep.mubr.f32.mxu0 0.0
    %4200 = vmatmul.mubr.f32.gmra.mxu0 %v4128
    %v4201 = vpop.f32.mrf.mxu0
    %v4202 = vadd.f32 %v4122, %v4201
    %v4203 = vpop.f32.mrf.mxu0
    %4204 = vdwg.mxu0
    %v4205 = vadd.f32 %v3997, %v4197
    %v4206 = vadd.f32 %v3998, %v4202
    %v4207 = vld [vmem:[%s69] sm:$0x1]
    %v4208 = vld [vmem:[%s71] sm:$0x1]
    %v4209 = vsel %vm159, %v4205, 0.0
    %4210 = vadd.xlane.f32.xlu0 %v4209
    %v4211 = vpop.xlane.xlu0 %4210
    %v4212 = vsel %vm159, %v4206, 0.0
    %4213 = vadd.xlane.f32.xlu0 %v4212
    %v4214 = vpop.xlane.xlu0 %4213
    %v4215 = vmul.f32 %v4211, %v166
    %v4216 = vmul.f32 %v4214, %v166
    %v4217 = vmul.f32 %v4205, %v4205
    %v4218 = vmul.f32 %v4206, %v4206
    %v4219 = vsel %vm159, %v4217, 0.0
    %4220 = vadd.xlane.f32.xlu0 %v4219
    %v4221 = vpop.xlane.xlu0 %4220
    %v4222 = vsel %vm159, %v4218, 0.0
    %4223 = vadd.xlane.f32.xlu0 %v4222
    %v4224 = vpop.xlane.xlu0 %4223
    %v4225 = vmul.f32 %v4221, %v166
    %v4226 = vmul.f32 %v4224, %v166
    %v4227 = vmul.f32 %v4215, %v4215
    %v4228 = vmul.f32 %v4216, %v4216
    %v4229 = vsub.f32 %v4225, %v4227
    %v4230 = vsub.f32 %v4226, %v4228
    %v4231 = vmax.f32 %v4229, 0.0
    %v4232 = vmax.f32 %v4230, 0.0
    %v4233 = vsub.f32 %v4205, %v4215
    %v4234 = vsub.f32 %v4206, %v4216
    %v4235 = vadd.f32 %v4231, 1e-12
    %v4236 = vadd.f32 %v4232, 1e-12
    %v4237 = vrsqrt.pop %v4235
    %v4238 = vrsqrt.pop %v4236
    %v4239 = vmul.f32 %v4233, %v4237
    %v4240 = vmul.f32 %v4234, %v4238
    %v4242 = vlaneseq
    %v4243 = vshrl.u32 %v4242, 7
    %v4244 = vsub.s32 0, %v4243
    %v4245 = vrot.slane %v4207, %v4244
    %v4247 = vmul.f32 %v4239, %v4245
    %v4248 = vmul.f32 %v4240, %v4245
    %v4250 = vlaneseq
    %v4251 = vshrl.u32 %v4250, 7
    %v4252 = vsub.s32 0, %v4251
    %v4253 = vrot.slane %v4208, %v4252
    %v4255 = vadd.f32 %v4247, %v4253
    %v4256 = vadd.f32 %v4248, %v4253
    %v4258 = vsel %vm473, %v153, 0
    %4260 = vmatprep.subr.mxu0 0.0
    %4261 = vmatpush1.msra.mxu0 0.0
    %4262 = vmatprep.subr.mxu0 0.0
    %4263 = vmatpush1.msra.mxu0 0.0
    %4264 = vmatprep.subr.mxu0 0.0
    %4265 = vmatpush1.msra.mxu0 0.0
    %4266 = vmatprep.subr.mxu0 0.0
    %4267 = vmatpush1.msra.mxu0 0.0
    %4268 = vmatprep.subr.mxu0 0.0
    %4269 = vmatpush1.msra.mxu0 0.0
    %4270 = vmatprep.subr.mxu0 0.0
    %4271 = vmatpush1.msra.mxu0 0.0
    %4272 = vmatprep.subr.mxu0 0.0
    %4273 = vmatpush1.msra.mxu0 0.0
    %4274 = vmatprep.subr.mxu0 0.0
    %4275 = vmatpush1.msra.mxu0 0.0
    %4276 = vmatprep.subr.mxu0 0.0
    %4277 = vmatpush1.msra.mxu0 0.0
    %4278 = vmatprep.subr.mxu0 0.0
    %4279 = vmatpush1.msra.mxu0 0.0
    %4280 = vmatprep.subr.mxu0 0.0
    %4281 = vmatpush1.msra.mxu0 0.0
    %4282 = vmatprep.subr.mxu0 0.0
    %4283 = vmatpush1.msra.mxu0 0.0
    %4284 = vmatprep.subr.mxu0 0.0
    %4285 = vmatpush1.msra.mxu0 0.0
    %4286 = vmatprep.subr.mxu0 0.0
    %4287 = vmatpush1.msra.mxu0 0.0
    %4288 = vmatprep.subr.mxu0 0.0
    %4289 = vmatpush1.msra.mxu0 0.0
    %4290 = vmatprep.subr.mxu0 0.0
    %4291 = vmatpush1.msra.mxu0 %v4255
    %4292 = vmatprep.subr.mxu0 0.0
    %4293 = vmatpush2.msra.mxu0 0.0
    %4294 = vmatprep.subr.mxu0 0.0
    %4295 = vmatpush2.msra.mxu0 0.0
    %4296 = vmatprep.subr.mxu0 0.0
    %4297 = vmatpush2.msra.mxu0 0.0
    %4298 = vmatprep.subr.mxu0 0.0
    %4299 = vmatpush2.msra.mxu0 0.0
    %4300 = vmatprep.subr.mxu0 0.0
    %4301 = vmatpush2.msra.mxu0 0.0
    %4302 = vmatprep.subr.mxu0 0.0
    %4303 = vmatpush2.msra.mxu0 0.0
    %4304 = vmatprep.subr.mxu0 0.0
    %4305 = vmatpush2.msra.mxu0 0.0
    %4306 = vmatprep.subr.mxu0 0.0
    %4307 = vmatpush2.msra.mxu0 0.0
    %4308 = vmatprep.subr.mxu0 0.0
    %4309 = vmatpush2.msra.mxu0 0.0
    %4310 = vmatprep.subr.mxu0 0.0
    %4311 = vmatpush2.msra.mxu0 0.0
    %4312 = vmatprep.subr.mxu0 0.0
    %4313 = vmatpush2.msra.mxu0 0.0
    %4314 = vmatprep.subr.mxu0 0.0
    %4315 = vmatpush2.msra.mxu0 0.0
    %4316 = vmatprep.subr.mxu0 0.0
    %4317 = vmatpush2.msra.mxu0 0.0
    %4318 = vmatprep.subr.mxu0 0.0
    %4319 = vmatpush2.msra.mxu0 0.0
    %4320 = vmatprep.subr.mxu0 0.0
    %4321 = vmatpush2.msra.mxu0 0.0
    %4322 = vmatprep.subr.mxu0 0.0
    %4323 = vmatpush2.msra.mxu0 0.0
    %4324 = vmatprep.mubr.f32.mxu0 0.0
    %4325 = vmatmul.mubr.f32.gmra.mxu0 %v4258
    %v4326 = vpop.f32.mrf.mxu0
    %v4327 = vadd.f32 0.0, %v4326
    %v4328 = vpop.f32.mrf.mxu0
    %4329 = vdwg.mxu0
    %v4331 = vsel %vm473, %v154, 0
    %4333 = vmatprep.subr.mxu0 0.0
    %4334 = vmatpush1.msra.mxu0 0.0
    %4335 = vmatprep.subr.mxu0 0.0
    %4336 = vmatpush1.msra.mxu0 0.0
    %4337 = vmatprep.subr.mxu0 0.0
    %4338 = vmatpush1.msra.mxu0 0.0
    %4339 = vmatprep.subr.mxu0 0.0
    %4340 = vmatpush1.msra.mxu0 0.0
    %4341 = vmatprep.subr.mxu0 0.0
    %4342 = vmatpush1.msra.mxu0 0.0
    %4343 = vmatprep.subr.mxu0 0.0
    %4344 = vmatpush1.msra.mxu0 0.0
    %4345 = vmatprep.subr.mxu0 0.0
    %4346 = vmatpush1.msra.mxu0 0.0
    %4347 = vmatprep.subr.mxu0 0.0
    %4348 = vmatpush1.msra.mxu0 0.0
    %4349 = vmatprep.subr.mxu0 0.0
    %4350 = vmatpush1.msra.mxu0 0.0
    %4351 = vmatprep.subr.mxu0 0.0
    %4352 = vmatpush1.msra.mxu0 0.0
    %4353 = vmatprep.subr.mxu0 0.0
    %4354 = vmatpush1.msra.mxu0 0.0
    %4355 = vmatprep.subr.mxu0 0.0
    %4356 = vmatpush1.msra.mxu0 0.0
    %4357 = vmatprep.subr.mxu0 0.0
    %4358 = vmatpush1.msra.mxu0 0.0
    %4359 = vmatprep.subr.mxu0 0.0
    %4360 = vmatpush1.msra.mxu0 0.0
    %4361 = vmatprep.subr.mxu0 0.0
    %4362 = vmatpush1.msra.mxu0 0.0
    %4363 = vmatprep.subr.mxu0 0.0
    %4364 = vmatpush1.msra.mxu0 %v4256
    %4365 = vmatprep.subr.mxu0 0.0
    %4366 = vmatpush2.msra.mxu0 0.0
    %4367 = vmatprep.subr.mxu0 0.0
    %4368 = vmatpush2.msra.mxu0 0.0
    %4369 = vmatprep.subr.mxu0 0.0
    %4370 = vmatpush2.msra.mxu0 0.0
    %4371 = vmatprep.subr.mxu0 0.0
    %4372 = vmatpush2.msra.mxu0 0.0
    %4373 = vmatprep.subr.mxu0 0.0
    %4374 = vmatpush2.msra.mxu0 0.0
    %4375 = vmatprep.subr.mxu0 0.0
    %4376 = vmatpush2.msra.mxu0 0.0
    %4377 = vmatprep.subr.mxu0 0.0
    %4378 = vmatpush2.msra.mxu0 0.0
    %4379 = vmatprep.subr.mxu0 0.0
    %4380 = vmatpush2.msra.mxu0 0.0
    %4381 = vmatprep.subr.mxu0 0.0
    %4382 = vmatpush2.msra.mxu0 0.0
    %4383 = vmatprep.subr.mxu0 0.0
    %4384 = vmatpush2.msra.mxu0 0.0
    %4385 = vmatprep.subr.mxu0 0.0
    %4386 = vmatpush2.msra.mxu0 0.0
    %4387 = vmatprep.subr.mxu0 0.0
    %4388 = vmatpush2.msra.mxu0 0.0
    %4389 = vmatprep.subr.mxu0 0.0
    %4390 = vmatpush2.msra.mxu0 0.0
    %4391 = vmatprep.subr.mxu0 0.0
    %4392 = vmatpush2.msra.mxu0 0.0
    %4393 = vmatprep.subr.mxu0 0.0
    %4394 = vmatpush2.msra.mxu0 0.0
    %4395 = vmatprep.subr.mxu0 0.0
    %4396 = vmatpush2.msra.mxu0 0.0
    %4397 = vmatprep.mubr.f32.mxu0 0.0
    %4398 = vmatmul.mubr.f32.gmra.mxu0 %v4331
    %v4399 = vpop.f32.mrf.mxu0
    %v4400 = vadd.f32 0.0, %v4399
    %v4401 = vpop.f32.mrf.mxu0
    %4402 = vdwg.mxu0
    %vm4403 = vcmask 57344
    %v4404 = vsel %vm4403, %v153, 0.0
    %4405 = vadd.xlane.f32.xlu0 %v4404
    %v4406 = vpop.xlane.xlu0 %4405
    %v4407 = vsel %vm4403, %v154, 0.0
    %4408 = vadd.xlane.f32.xlu0 %v4407
    %v4409 = vpop.xlane.xlu0 %4408
    %v4410 = vrcp.pop %v4406
    %v4411 = vrcp.pop %v4409
    %v4412 = vlaneseq
    %v4413 = vshrl.u32 %v4412, 7
    %v4414 = vsub.s32 0, %v4413
    %v4415 = vrot.slane %v4410, %v4414
    %v4416 = vlaneseq
    %v4417 = vshrl.u32 %v4416, 7
    %v4418 = vsub.s32 0, %v4417
    %v4419 = vrot.slane %v4411, %v4418
    %v4420 = vmul.f32 %v4327, %v4415
    %v4421 = vmul.f32 %v4400, %v4419
    %v4424 = vrot.slane %v4421, 7
    %vm4425 = vcmask 1041409
    %v4426 = vsel %vm4425, %v4424, %v4420
    %vm4428 = vcmask 254976
    %4429 = vst.msk [vmem:[#allocation2] sm:$0x3] %vm4428, %v4426
    // Predicated region
    $region146: #{vhhbert_forward.1} parent=1 // pred_check
      _
    $region147: #{vhhbert_forward.1} parent=1 // pred_check_branch
      %4431 = sbr.rel (0) target = $region149
    $region148: #{vhhbert_forward.1} parent=1 // pred_region
      %s4433 = ssub.s32 32, 32
      %4434 = vsyncadd [#allocation3], %s4433
      %s4436 = sshll.u32 [#allocation2], 4
      %s4437 = int_to_ptr.vmem [resolvable:$true] %s4436
      %4439 = dma.vmem_to_hbm [thread:$0]  %s4437, 32, %s73, [#allocation3]
    $region149: #{vhhbert_forward.1} parent=1 // pred_fallthru
      _
    // Predicated region
    $region150: #{vhhbert_forward.1} parent=1 // pred_check
      _
    $region151: #{vhhbert_forward.1} parent=1 // pred_check_branch
      %4441 = sbr.rel (0) target = $region153
    $region152: #{vhhbert_forward.1} parent=1 // pred_region
      %4442 = dma.done [#allocation3], 32
    $region153: #{vhhbert_forward.1} parent=1 // pred_fallthru
      _
    %4443 = vsyncpa [#allocation3], 1

</llo_original>
